<compile_context>
chip_gen: v5e
topology: v5e:2x2
jax: 0.10.0
libtpu: 0.0.40
codegen_flags: <defaults>
</compile_context>

<pallas_src>
import functools
import numpy as np
import jax
import jax.numpy as jnp
from jax import lax
from jax.experimental import pallas as pl
from jax.experimental.pallas import tpu as pltpu  # noqa: F401  (TPU backend)


# ----------------------------------------------------------------------------
# shared in-kernel helpers (pure jnp, traced inside the kernel)
# ----------------------------------------------------------------------------
def _lstm_cell(gates, c):
    """PyTorch LSTM cell given pre-activation gates [i|f|g|o] -> (h, c)."""
    H = c.shape[-1]
    i_g = jax.nn.sigmoid(gates[:, 0:H])
    f_g = jax.nn.sigmoid(gates[:, H:2 * H])
    g_g = jnp.tanh(gates[:, 2 * H:3 * H])
    o_g = jax.nn.sigmoid(gates[:, 3 * H:4 * H])
    c_new = f_g * c + i_g * g_g
    h_new = o_g * jnp.tanh(c_new)
    return h_new, c_new


def _batchnorm(x, g, b):
    # BatchNorm1d in training mode: batch statistics, biased variance, eps=1e-5
    mean = jnp.mean(x, axis=0, keepdims=True)
    var = jnp.mean((x - mean) ** 2, axis=0, keepdims=True)
    return (x - mean) * lax.rsqrt(var + 1e-5) * g + b


def _full_spec(a):
    """BlockSpec covering the whole array (grid=(1,))."""
    shape = a.shape
    nd = len(shape)
    return pl.BlockSpec(shape, lambda i, nd=nd: (0,) * nd)


# ----------------------------------------------------------------------------
# ONE fused kernel: encode + tree LSTM + head
# ----------------------------------------------------------------------------
def _fused_kernel(xc_ref, wih1_ref, whh1_ref, b1_ref,
                  wc_ref, bc_ref, g1_ref, be1_ref,
                  ops_ref, ei_ref,
                  samp_ref, wsamp_ref, bsamp_ref, mask_ref,
                  w2a_ref, w2b_ref, w2c_ref, w2d_ref, b2_ref,
                  whh2_ref, map_ref,
                  g2_ref, be2_ref, wh2_ref, bh2_ref,
                  g3_ref, be3_ref, wh3_ref, bh3_ref,
                  wo_ref, bo_ref,
                  o_ref):
    f32 = jnp.float32

    TN2, _ = xc_ref.shape                  # (Tc * 2M, Dc)
    H = whh1_ref.shape[0]
    Nn = map_ref.shape[1]                  # nodes per level
    L = map_ref.shape[0] + 1               # number of levels
    M = L * Nn                             # total nodes
    N2 = 2 * M                             # cond1 + cond2 stacked on batch
    Tc = TN2 // N2                         # conditions per node (time steps)
    B = o_ref.shape[0]                     # batch_size (valid level-0 nodes)

    # ---------------- condition LSTM (both condition sets batched) ----------
    # Hoisted input projection: one big matmul outside the recurrence.
    xg = (jnp.dot(xc_ref[...], wih1_ref[...], preferred_element_type=f32)
          + b1_ref[...])                                    # (Tc*N2, 4H)
    w_hh1 = whh1_ref[...]

    # t = 0: h0 = c0 = 0 -> recurrent matmul is exactly zero, skip it.
    h, c = _lstm_cell(xg[0:N2], jnp.zeros((N2, H), f32))
    for t in range(1, Tc):                                  # static unroll
        gates = (xg[t * N2:(t + 1) * N2]
                 + jnp.dot(h, w_hh1, preferred_element_type=f32))
        h, c = _lstm_cell(gates, c)

    # ---------------- condition MLP + average + BatchNorm1 ------------------
    lo = jnp.maximum(
        jnp.dot(h, wc_ref[...], preferred_element_type=f32) + bc_ref[...], 0.0)
    last = (lo[0:M] + lo[M:N2]) * 0.5
    last = _batchnorm(last, g1_ref[...], be1_ref[...])

    # ---------------- sample MLP (bf16 operands, f32 accumulate) + mask ------
    samp = jnp.maximum(
        jnp.dot(samp_ref[...], wsamp_ref[...], preferred_element_type=f32)
        + bsamp_ref[...], 0.0) * mask_ref[...]

    # ---------------- lstm2 input projection (dense 128-lane slab) ----------
    # concat([ops, ei, last, samp], -1) @ W_ih2 + b2 computed as a sum of
    # partial matmuls so the unaligned 84-lane concat is never materialised.
    xproj = (jnp.dot(ops_ref[...], w2a_ref[...], preferred_element_type=f32)
             + jnp.dot(ei_ref[...], w2b_ref[...], preferred_element_type=f32)
             + jnp.dot(last, w2c_ref[...], preferred_element_type=f32)
             + jnp.dot(samp, w2d_ref[...], preferred_element_type=f32)
             + b2_ref[...])                                  # (M, 4H)

    # ---------------- bottom-up tree LSTM (lstm2) ---------------------------
    w_hh2 = whh2_ref[...]
    # deepest level: h0 = c0 = 0 -> gates are just the input projection
    h2, c2 = _lstm_cell(xproj[(L - 1) * Nn:L * Nn], jnp.zeros((Nn, H), f32))

    # child gather as a one-hot selection matmul; mapping value 0 = zero pad,
    # value k selects node k-1.  col = j + 1, so no index remap is needed.
    col = lax.broadcasted_iota(jnp.int32, (Nn, Nn), 1) + 1   # (Nn, Nn)
    for idx in range(L - 2, -1, -1):                         # static unroll
        m = map_ref[idx]                                     # (Nn, 2) int32
        jl = m[:, 0:1]
        jr = m[:, 1:2]
        sel = (jl == col).astype(f32) + (jr == col).astype(f32)   # (Nn, Nn)
        h2 = 0.5 * jnp.dot(sel, h2, preferred_element_type=f32)
        c2 = 0.5 * jnp.dot(sel, c2, preferred_element_type=f32)
        gates = (xproj[idx * Nn:(idx + 1) * Nn]
                 + jnp.dot(h2, w_hh2, preferred_element_type=f32))
        h2, c2 = _lstm_cell(gates, c2)

    # ---------------- output head -------------------------------------------
    x = _batchnorm(h2[0:B], g2_ref[...], be2_ref[...])
    x = jnp.maximum(
        jnp.dot(x, wh2_ref[...], preferred_element_type=f32) + bh2_ref[...],
        0.0)
    x = _batchnorm(x, g3_ref[...], be3_ref[...])
    x = jnp.maximum(
        jnp.dot(x, wh3_ref[...], preferred_element_type=f32) + bh3_ref[...],
        0.0)
    o_ref[...] = jax.nn.sigmoid(
        jnp.dot(x, wo_ref[...], preferred_element_type=f32) + bo_ref[...])


# ----------------------------------------------------------------------------
# one-time parameter preparation (call OUTSIDE jit, once)
# ----------------------------------------------------------------------------
def prepare_params(p, d_ops, d_ei, d_hid):
    """Split w_ih2 by input segment and cast the sample-MLP weight to bf16."""
    q = dict(p)
    w = p["w_ih2"]
    o1 = d_ops
    o2 = o1 + d_ei
    o3 = o2 + d_hid
    q["w2a"] = w[0:o1]
    q["w2b"] = w[o1:o2]
    q["w2c"] = w[o2:o3]
    q["w2d"] = w[o3:]
    q["w_samp_bf16"] = p["w_samp"].astype(jnp.bfloat16)
    return q


# ----------------------------------------------------------------------------
# Full forward pass (Pallas path): ONE pallas_call
# ----------------------------------------------------------------------------
def representation_forward_pallas(p, operators, extra_infos, condition1s,
                                  condition2s, samples, condition_masks,
                                  mapping, batch_size):
    L, Nn, Tc, Dc = condition1s.shape
    M = L * Nn

    # Time-major stack of both condition sets (the only per-call XLA glue,
    # a single ~10 KiB transpose fusion; everything else is free reshapes).
    xc = jnp.concatenate([condition1s.reshape(M, Tc, Dc),
                          condition2s.reshape(M, Tc, Dc)], axis=0)
    xc = jnp.transpose(xc, (1, 0, 2)).reshape(Tc * 2 * M, Dc)

    ops2 = operators.reshape(M, -1)
    ei2 = extra_infos.reshape(M, -1)
    samp2 = samples.reshape(M, -1).astype(jnp.bfloat16)   # 0/1 -> lossless
    mask2 = condition_masks.reshape(M, 1)
    map3 = mapping.astype(jnp.int32)                      # (L-1, Nn, 2)

    args = (xc, p["w_ih1"], p["w_hh1"], p["b1"],
            p["w_cond"], p["b_cond"], p["bn1_g"], p["bn1_b"],
            ops2, ei2,
            samp2, p["w_samp_bf16"], p["b_samp"], mask2,
            p["w2a"], p["w2b"], p["w2c"], p["w2d"], p["b2"],
            p["w_hh2"], map3,
            p["bn2_g"], p["bn2_b"], p["w_h2"], p["b_h2"],
            p["bn3_g"], p["bn3_b"], p["w_h3"], p["b_h3"],
            p["w_out"], p["b_out"])

    return pl.pallas_call(
        _fused_kernel,
        grid=(1,),
        in_specs=[_full_spec(a) for a in args],
        out_specs=pl.BlockSpec((batch_size, 1), lambda i: (0, 0)),
        out_shape=jax.ShapeDtypeStruct((batch_size, 1), jnp.float32),
    )(*args)


# ----------------------------------------------------------------------------
# Pure-JAX reference (mirrors the PyTorch module op-for-op)
# ----------------------------------------------------------------------------
def _lstm_ref(x_ntd, h0, c0, w_ih, w_hh, b):
    def step(carry, x_t):
        h, c = carry
        H = h.shape[1]
        gates = x_t @ w_ih + h @ w_hh + b
        i_g = jax.nn.sigmoid(gates[:, :H])
        f_g = jax.nn.sigmoid(gates[:, H:2 * H])
        g_g = jnp.tanh(gates[:, 2 * H:3 * H])
        o_g = jax.nn.sigmoid(gates[:, 3 * H:])
        c = f_g * c + i_g * g_g
        h = o_g * jnp.tanh(c)
        return (h, c), None

    (h, c), _ = lax.scan(step, (h0, c0), jnp.transpose(x_ntd, (1, 0, 2)))
    return h, c


def _linear_ref(x, w, b, act="none"):
    y = x @ w + b
    if act == "relu":
        y = jnp.maximum(y, 0.0)
    elif act == "sigmoid":
        y = jax.nn.sigmoid(y)
    return y


def representation_forward_ref(p, operators, extra_infos, condition1s,
                               condition2s, samples, condition_masks,
                               mapping, batch_size):
    L, Nn, Tc, Dc = condition1s.shape
    H = p["w_hh1"].shape[0]

    z = jnp.zeros((L * Nn, H), jnp.float32)
    h1, _ = _lstm_ref(condition1s.reshape(L * Nn, Tc, Dc), z, z,
                      p["w_ih1"], p["w_hh1"], p["b1"])
    h2, _ = _lstm_ref(condition2s.reshape(L * Nn, Tc, Dc), z, z,
                      p["w_ih1"], p["w_hh1"], p["b1"])

    lo1 = _linear_ref(h1, p["w_cond"], p["b_cond"], "relu")
    lo2 = _linear_ref(h2, p["w_cond"], p["b_cond"], "relu")
    last = (lo1 + lo2) / 2.0
    last = _batchnorm(last, p["bn1_g"], p["bn1_b"]).reshape(L, Nn, -1)

    samp = _linear_ref(samples.reshape(L * Nn, -1), p["w_samp"], p["b_samp"],
                       "relu").reshape(L, Nn, -1)
    samp = samp * condition_masks

    out = jnp.concatenate([operators, extra_infos, last, samp], axis=2)

    zN = jnp.zeros((Nn, H), jnp.float32)
    hid, cid = _lstm_ref(out[L - 1][:, None, :], zN, zN,
                         p["w_ih2"], p["w_hh2"], p["b2"])
    for idx in range(L - 2, -1, -1):
        ml = mapping[idx][:, 0]
        mr = mapping[idx][:, 1]
        pad = jnp.zeros((1, H), jnp.float32)
        nh = jnp.concatenate([pad, hid], axis=0)
        nc = jnp.concatenate([pad, cid], axis=0)
        hid = (jnp.take(nh, ml, axis=0) + jnp.take(nh, mr, axis=0)) / 2.0
        cid = (jnp.take(nc, ml, axis=0) + jnp.take(nc, mr, axis=0)) / 2.0
        hid, cid = _lstm_ref(out[idx][:, None, :], hid, cid,
                             p["w_ih2"], p["w_hh2"], p["b2"])

    output = hid[:batch_size]
    o = _batchnorm(output, p["bn2_g"], p["bn2_b"])
    o = _linear_ref(o, p["w_h2"], p["b_h2"], "relu")
    o = _batchnorm(o, p["bn3_g"], p["bn3_b"])
    o = _linear_ref(o, p["w_h3"], p["b_h3"], "relu")
    o = _linear_ref(o, p["w_out"], p["b_out"], "sigmoid")
    return o


# ----------------------------------------------------------------------------
if __name__ == "__main__":
    # Module configuration (small shapes)
    input_dim = 13            # condition_op_length
    hidden_dim = 32
    hid_dim = 32
    extra_info_size = 5
    num_level = 3
    num_node = 8
    num_cond_per_node = 4
    d_ops = 15
    feat2 = d_ops + extra_info_size + 2 * hid_dim   # lstm2 input size

    key = jax.random.PRNGKey(0)
    ks = jax.random.split(key, 16)

    def nrm(k, shape, s=0.1):
        return (s * jax.random.normal(k, shape)).astype(jnp.float32)

    params = {
        "w_ih1": nrm(ks[0], (input_dim, 4 * hidden_dim)),
        "w_hh1": nrm(ks[1], (hidden_dim, 4 * hidden_dim)),
        "b1":    nrm(ks[2], (1, 4 * hidden_dim)),
        "w_cond": nrm(ks[3], (hidden_dim, hid_dim)),
        "b_cond": nrm(ks[4], (1, hid_dim)),
        "w_samp": nrm(ks[5], (1000, hid_dim), 0.02),
        "b_samp": nrm(ks[6], (1, hid_dim)),
        "w_ih2": nrm(ks[7], (feat2, 4 * hidden_dim)),
        "w_hh2": nrm(ks[8], (hidden_dim, 4 * hidden_dim)),
        "b2":    nrm(ks[9], (1, 4 * hidden_dim)),
        "w_h2":  nrm(ks[10], (hidden_dim, hid_dim)),
        "b_h2":  nrm(ks[11], (1, hid_dim)),
        "w_h3":  nrm(ks[12], (hid_dim, hid_dim)),
        "b_h3":  nrm(ks[13], (1, hid_dim)),
        "w_out": nrm(ks[14], (hid_dim, 1)),
        "b_out": nrm(ks[15], (1, 1)),
        "bn1_g": jnp.ones((1, hid_dim), jnp.float32),
        "bn1_b": jnp.zeros((1, hid_dim), jnp.float32),
        "bn2_g": jnp.ones((1, hidden_dim), jnp.float32),
        "bn2_b": jnp.zeros((1, hidden_dim), jnp.float32),
        "bn3_g": jnp.ones((1, hid_dim), jnp.float32),
        "bn3_b": jnp.zeros((1, hid_dim), jnp.float32),
    }
    # one-time prep: weight-slice split + bf16 sample weight
    params = prepare_params(params, d_ops, extra_info_size, hid_dim)

    dk = jax.random.split(jax.random.PRNGKey(1), 8)
    operators = (jnp.abs(jax.random.normal(dk[0], (num_level, num_node, d_ops)))
                 + 0.1).astype(jnp.float32)
    # first 5 nodes of level 0 are real, the rest are zero padding
    valid = 5
    mask_nodes = (jnp.arange(num_node) < valid)[None, :, None]
    level_mask = jnp.concatenate(
        [mask_nodes, jnp.ones((num_level - 1, num_node, 1), bool)], axis=0)
    operators = (operators * level_mask).astype(jnp.float32)

    extra_infos = nrm(dk[1], (num_level, num_node, extra_info_size), 1.0)
    condition1s = nrm(dk[2], (num_level, num_node, num_cond_per_node, input_dim), 1.0)
    condition2s = nrm(dk[3], (num_level, num_node, num_cond_per_node, input_dim), 1.0)
    samples = (jax.random.uniform(dk[4], (num_level, num_node, 1000)) < 0.5
               ).astype(jnp.float32)
    condition_masks = (jax.random.uniform(dk[5], (num_level, num_node, 1)) < 0.7
                       ).astype(jnp.float32)
    mapping = jax.random.randint(dk[6], (num_level - 1, num_node, 2),
                                 0, num_node + 1).astype(jnp.int32)

    # data-dependent batch_size scan, exactly as in the PyTorch forward
    # (host-side since it determines an output *shape*)
    ops_np = np.asarray(operators)
    batch_size = 0
    for i in range(ops_np.shape[1]):
        if ops_np[0, i].sum() != 0:
            batch_size += 1
        else:
            break

    fwd_pallas = jax.jit(functools.partial(representation_forward_pallas,
                                           batch_size=batch_size))
    fwd_ref = jax.jit(functools.partial(representation_forward_ref,
                                        batch_size=batch_size))

    out = jax.block_until_ready(
        fwd_pallas(params, operators, extra_infos, condition1s, condition2s,
                   samples, condition_masks, mapping))
    ref = jax.block_until_ready(
        fwd_ref(params, operators, extra_infos, condition1s, condition2s,
                samples, condition_masks, mapping))

    assert out.shape == (batch_size, 1), out.shape
    np.testing.assert_allclose(np.asarray(out), np.asarray(ref),
                               rtol=2e-2, atol=2e-2)
    print("KERNEL_OK")
</pallas_src>

<mosaic_0001>
module attributes {stable_mosaic.version = 11 : i64} {
  func.func @_fused_kernel(%arg0: i32, %arg1: memref<192x13xf32, #tpu.memory_space<vmem>>, %arg2: memref<13x128xf32, #tpu.memory_space<vmem>>, %arg3: memref<32x128xf32, #tpu.memory_space<vmem>>, %arg4: memref<1x128xf32, #tpu.memory_space<vmem>>, %arg5: memref<32x32xf32, #tpu.memory_space<vmem>>, %arg6: memref<1x32xf32, #tpu.memory_space<vmem>>, %arg7: memref<1x32xf32, #tpu.memory_space<vmem>>, %arg8: memref<1x32xf32, #tpu.memory_space<vmem>>, %arg9: memref<24x15xf32, #tpu.memory_space<vmem>>, %arg10: memref<24x5xf32, #tpu.memory_space<vmem>>, %arg11: memref<24x1000xbf16, #tpu.memory_space<vmem>>, %arg12: memref<1000x32xbf16, #tpu.memory_space<vmem>>, %arg13: memref<1x32xf32, #tpu.memory_space<vmem>>, %arg14: memref<24x1xf32, #tpu.memory_space<vmem>>, %arg15: memref<15x128xf32, #tpu.memory_space<vmem>>, %arg16: memref<5x128xf32, #tpu.memory_space<vmem>>, %arg17: memref<32x128xf32, #tpu.memory_space<vmem>>, %arg18: memref<32x128xf32, #tpu.memory_space<vmem>>, %arg19: memref<1x128xf32, #tpu.memory_space<vmem>>, %arg20: memref<32x128xf32, #tpu.memory_space<vmem>>, %arg21: memref<2x8x2xi32, #tpu.memory_space<vmem>>, %arg22: memref<1x32xf32, #tpu.memory_space<vmem>>, %arg23: memref<1x32xf32, #tpu.memory_space<vmem>>, %arg24: memref<32x32xf32, #tpu.memory_space<vmem>>, %arg25: memref<1x32xf32, #tpu.memory_space<vmem>>, %arg26: memref<1x32xf32, #tpu.memory_space<vmem>>, %arg27: memref<1x32xf32, #tpu.memory_space<vmem>>, %arg28: memref<32x32xf32, #tpu.memory_space<vmem>>, %arg29: memref<1x32xf32, #tpu.memory_space<vmem>>, %arg30: memref<32x1xf32, #tpu.memory_space<vmem>>, %arg31: memref<1x1xf32, #tpu.memory_space<vmem>>, %arg32: memref<5x1xf32, #tpu.memory_space<vmem>>) attributes {dimension_semantics = [#tpu.dimension_semantics<arbitrary>], iteration_bounds = array<i64: 1>, scalar_prefetch = 0 : i64, scratch_operands = 0 : i64, tpu.core_type = #tpu.core_type<tc>, window_params = [{pipeline_mode = #tpu.pipeline_mode<synchronous>, transform_indices = @transform_0, window_bounds = array<i64: 192, 13>}, {pipeline_mode = #tpu.pipeline_mode<synchronous>, transform_indices = @transform_1, window_bounds = array<i64: 13, 128>}, {pipeline_mode = #tpu.pipeline_mode<synchronous>, transform_indices = @transform_2, window_bounds = array<i64: 32, 128>}, {pipeline_mode = #tpu.pipeline_mode<synchronous>, transform_indices = @transform_3, window_bounds = array<i64: 1, 128>}, {pipeline_mode = #tpu.pipeline_mode<synchronous>, transform_indices = @transform_4, window_bounds = array<i64: 32, 32>}, {pipeline_mode = #tpu.pipeline_mode<synchronous>, transform_indices = @transform_5, window_bounds = array<i64: 1, 32>}, {pipeline_mode = #tpu.pipeline_mode<synchronous>, transform_indices = @transform_6, window_bounds = array<i64: 1, 32>}, {pipeline_mode = #tpu.pipeline_mode<synchronous>, transform_indices = @transform_7, window_bounds = array<i64: 1, 32>}, {pipeline_mode = #tpu.pipeline_mode<synchronous>, transform_indices = @transform_8, window_bounds = array<i64: 24, 15>}, {pipeline_mode = #tpu.pipeline_mode<synchronous>, transform_indices = @transform_9, window_bounds = array<i64: 24, 5>}, {pipeline_mode = #tpu.pipeline_mode<synchronous>, transform_indices = @transform_10, window_bounds = array<i64: 24, 1000>}, {pipeline_mode = #tpu.pipeline_mode<synchronous>, transform_indices = @transform_11, window_bounds = array<i64: 1000, 32>}, {pipeline_mode = #tpu.pipeline_mode<synchronous>, transform_indices = @transform_12, window_bounds = array<i64: 1, 32>}, {pipeline_mode = #tpu.pipeline_mode<synchronous>, transform_indices = @transform_13, window_bounds = array<i64: 24, 1>}, {pipeline_mode = #tpu.pipeline_mode<synchronous>, transform_indices = @transform_14, window_bounds = array<i64: 15, 128>}, {pipeline_mode = #tpu.pipeline_mode<synchronous>, transform_indices = @transform_15, window_bounds = array<i64: 5, 128>}, {pipeline_mode = #tpu.pipeline_mode<synchronous>, transform_indices = @transform_16, window_bounds = array<i64: 32, 128>}, {pipeline_mode = #tpu.pipeline_mode<synchronous>, transform_indices = @transform_17, window_bounds = array<i64: 32, 128>}, {pipeline_mode = #tpu.pipeline_mode<synchronous>, transform_indices = @transform_18, window_bounds = array<i64: 1, 128>}, {pipeline_mode = #tpu.pipeline_mode<synchronous>, transform_indices = @transform_19, window_bounds = array<i64: 32, 128>}, {pipeline_mode = #tpu.pipeline_mode<synchronous>, transform_indices = @transform_20, window_bounds = array<i64: 2, 8, 2>}, {pipeline_mode = #tpu.pipeline_mode<synchronous>, transform_indices = @transform_21, window_bounds = array<i64: 1, 32>}, {pipeline_mode = #tpu.pipeline_mode<synchronous>, transform_indices = @transform_22, window_bounds = array<i64: 1, 32>}, {pipeline_mode = #tpu.pipeline_mode<synchronous>, transform_indices = @transform_23, window_bounds = array<i64: 32, 32>}, {pipeline_mode = #tpu.pipeline_mode<synchronous>, transform_indices = @transform_24, window_bounds = array<i64: 1, 32>}, {pipeline_mode = #tpu.pipeline_mode<synchronous>, transform_indices = @transform_25, window_bounds = array<i64: 1, 32>}, {pipeline_mode = #tpu.pipeline_mode<synchronous>, transform_indices = @transform_26, window_bounds = array<i64: 1, 32>}, {pipeline_mode = #tpu.pipeline_mode<synchronous>, transform_indices = @transform_27, window_bounds = array<i64: 32, 32>}, {pipeline_mode = #tpu.pipeline_mode<synchronous>, transform_indices = @transform_28, window_bounds = array<i64: 1, 32>}, {pipeline_mode = #tpu.pipeline_mode<synchronous>, transform_indices = @transform_29, window_bounds = array<i64: 32, 1>}, {pipeline_mode = #tpu.pipeline_mode<synchronous>, transform_indices = @transform_30, window_bounds = array<i64: 1, 1>}, {pipeline_mode = #tpu.pipeline_mode<synchronous>, transform_indices = @transform_31, window_bounds = array<i64: 5, 1>}]} {
    %c0 = arith.constant 0 : index
    %c0_0 = arith.constant 0 : index
    %0 = vector.load %arg1[%c0, %c0_0] : memref<192x13xf32, #tpu.memory_space<vmem>>, vector<192x13xf32>
    %c0_1 = arith.constant 0 : index
    %c0_2 = arith.constant 0 : index
    %1 = vector.load %arg2[%c0_1, %c0_2] : memref<13x128xf32, #tpu.memory_space<vmem>>, vector<13x128xf32>
    %cst = arith.constant dense<0.000000e+00> : vector<192x128xf32>
    %2 = tpu.matmul %0, %1, %cst {dimension_numbers = #tpu.dot_dimension_numbers<[1], [0], [0], [1], [0, 0, 1, 1], [], []>} : vector<192x13xf32>, vector<13x128xf32>, vector<192x128xf32> -> vector<192x128xf32>
    %c0_3 = arith.constant 0 : index
    %c0_4 = arith.constant 0 : index
    %3 = vector.load %arg4[%c0_3, %c0_4] : memref<1x128xf32, #tpu.memory_space<vmem>>, vector<1x128xf32>
    %4 = vector.broadcast %3 : vector<1x128xf32> to vector<192x128xf32>
    %5 = arith.addf %2, %4 : vector<192x128xf32>
    %c0_5 = arith.constant 0 : index
    %c0_6 = arith.constant 0 : index
    %6 = vector.load %arg3[%c0_5, %c0_6] : memref<32x128xf32, #tpu.memory_space<vmem>>, vector<32x128xf32>
    %7 = vector.extract_strided_slice %5 {offsets = [0, 0], sizes = [48, 128], strides = [1, 1]} : vector<192x128xf32> to vector<48x128xf32>
    %cst_7 = arith.constant 0.000000e+00 : f32
    %8 = vector.broadcast %cst_7 : f32 to vector<48x32xf32>
    %9 = vector.extract_strided_slice %7 {offsets = [0, 0], sizes = [48, 32], strides = [1, 1]} : vector<48x128xf32> to vector<48x32xf32>
    %10 = arith.negf %9 : vector<48x32xf32>
    %11 = math.exp %10 : vector<48x32xf32>
    %cst_8 = arith.constant 1.000000e+00 : f32
    %12 = vector.broadcast %cst_8 : f32 to vector<48x32xf32>
    %13 = arith.addf %12, %11 : vector<48x32xf32>
    %14 = arith.divf %12, %13 : vector<48x32xf32>
    %15 = vector.extract_strided_slice %7 {offsets = [0, 32], sizes = [48, 32], strides = [1, 1]} : vector<48x128xf32> to vector<48x32xf32>
    %16 = arith.negf %15 : vector<48x32xf32>
    %17 = math.exp %16 : vector<48x32xf32>
    %cst_9 = arith.constant 1.000000e+00 : f32
    %18 = vector.broadcast %cst_9 : f32 to vector<48x32xf32>
    %19 = arith.addf %18, %17 : vector<48x32xf32>
    %20 = arith.divf %18, %19 : vector<48x32xf32>
    %21 = vector.extract_strided_slice %7 {offsets = [0, 64], sizes = [48, 32], strides = [1, 1]} : vector<48x128xf32> to vector<48x32xf32>
    %22 = math.tanh %21 : vector<48x32xf32>
    %23 = vector.extract_strided_slice %7 {offsets = [0, 96], sizes = [48, 32], strides = [1, 1]} : vector<48x128xf32> to vector<48x32xf32>
    %24 = arith.negf %23 : vector<48x32xf32>
    %25 = math.exp %24 : vector<48x32xf32>
    %cst_10 = arith.constant 1.000000e+00 : f32
    %26 = vector.broadcast %cst_10 : f32 to vector<48x32xf32>
    %27 = arith.addf %26, %25 : vector<48x32xf32>
    %28 = arith.divf %26, %27 : vector<48x32xf32>
    %29 = arith.mulf %20, %8 : vector<48x32xf32>
    %30 = arith.mulf %14, %22 : vector<48x32xf32>
    %31 = arith.addf %29, %30 : vector<48x32xf32>
    %32 = math.tanh %31 : vector<48x32xf32>
    %33 = arith.mulf %28, %32 : vector<48x32xf32>
    %34 = vector.extract_strided_slice %5 {offsets = [48, 0], sizes = [48, 128], strides = [1, 1]} : vector<192x128xf32> to vector<48x128xf32>
    %cst_11 = arith.constant dense<0.000000e+00> : vector<48x128xf32>
    %35 = tpu.matmul %33, %6, %cst_11 {dimension_numbers = #tpu.dot_dimension_numbers<[1], [0], [0], [1], [0, 0, 1, 1], [], []>} : vector<48x32xf32>, vector<32x128xf32>, vector<48x128xf32> -> vector<48x128xf32>
    %36 = arith.addf %34, %35 : vector<48x128xf32>
    %37 = vector.extract_strided_slice %36 {offsets = [0, 0], sizes = [48, 32], strides = [1, 1]} : vector<48x128xf32> to vector<48x32xf32>
    %38 = arith.negf %37 : vector<48x32xf32>
    %39 = math.exp %38 : vector<48x32xf32>
    %cst_12 = arith.constant 1.000000e+00 : f32
    %40 = vector.broadcast %cst_12 : f32 to vector<48x32xf32>
    %41 = arith.addf %40, %39 : vector<48x32xf32>
    %42 = arith.divf %40, %41 : vector<48x32xf32>
    %43 = vector.extract_strided_slice %36 {offsets = [0, 32], sizes = [48, 32], strides = [1, 1]} : vector<48x128xf32> to vector<48x32xf32>
    %44 = arith.negf %43 : vector<48x32xf32>
    %45 = math.exp %44 : vector<48x32xf32>
    %cst_13 = arith.constant 1.000000e+00 : f32
    %46 = vector.broadcast %cst_13 : f32 to vector<48x32xf32>
    %47 = arith.addf %46, %45 : vector<48x32xf32>
    %48 = arith.divf %46, %47 : vector<48x32xf32>
    %49 = vector.extract_strided_slice %36 {offsets = [0, 64], sizes = [48, 32], strides = [1, 1]} : vector<48x128xf32> to vector<48x32xf32>
    %50 = math.tanh %49 : vector<48x32xf32>
    %51 = vector.extract_strided_slice %36 {offsets = [0, 96], sizes = [48, 32], strides = [1, 1]} : vector<48x128xf32> to vector<48x32xf32>
    %52 = arith.negf %51 : vector<48x32xf32>
    %53 = math.exp %52 : vector<48x32xf32>
    %cst_14 = arith.constant 1.000000e+00 : f32
    %54 = vector.broadcast %cst_14 : f32 to vector<48x32xf32>
    %55 = arith.addf %54, %53 : vector<48x32xf32>
    %56 = arith.divf %54, %55 : vector<48x32xf32>
    %57 = arith.mulf %48, %31 : vector<48x32xf32>
    %58 = arith.mulf %42, %50 : vector<48x32xf32>
    %59 = arith.addf %57, %58 : vector<48x32xf32>
    %60 = math.tanh %59 : vector<48x32xf32>
    %61 = arith.mulf %56, %60 : vector<48x32xf32>
    %62 = vector.extract_strided_slice %5 {offsets = [96, 0], sizes = [48, 128], strides = [1, 1]} : vector<192x128xf32> to vector<48x128xf32>
    %cst_15 = arith.constant dense<0.000000e+00> : vector<48x128xf32>
    %63 = tpu.matmul %61, %6, %cst_15 {dimension_numbers = #tpu.dot_dimension_numbers<[1], [0], [0], [1], [0, 0, 1, 1], [], []>} : vector<48x32xf32>, vector<32x128xf32>, vector<48x128xf32> -> vector<48x128xf32>
    %64 = arith.addf %62, %63 : vector<48x128xf32>
    %65 = vector.extract_strided_slice %64 {offsets = [0, 0], sizes = [48, 32], strides = [1, 1]} : vector<48x128xf32> to vector<48x32xf32>
    %66 = arith.negf %65 : vector<48x32xf32>
    %67 = math.exp %66 : vector<48x32xf32>
    %cst_16 = arith.constant 1.000000e+00 : f32
    %68 = vector.broadcast %cst_16 : f32 to vector<48x32xf32>
    %69 = arith.addf %68, %67 : vector<48x32xf32>
    %70 = arith.divf %68, %69 : vector<48x32xf32>
    %71 = vector.extract_strided_slice %64 {offsets = [0, 32], sizes = [48, 32], strides = [1, 1]} : vector<48x128xf32> to vector<48x32xf32>
    %72 = arith.negf %71 : vector<48x32xf32>
    %73 = math.exp %72 : vector<48x32xf32>
    %cst_17 = arith.constant 1.000000e+00 : f32
    %74 = vector.broadcast %cst_17 : f32 to vector<48x32xf32>
    %75 = arith.addf %74, %73 : vector<48x32xf32>
    %76 = arith.divf %74, %75 : vector<48x32xf32>
    %77 = vector.extract_strided_slice %64 {offsets = [0, 64], sizes = [48, 32], strides = [1, 1]} : vector<48x128xf32> to vector<48x32xf32>
    %78 = math.tanh %77 : vector<48x32xf32>
    %79 = vector.extract_strided_slice %64 {offsets = [0, 96], sizes = [48, 32], strides = [1, 1]} : vector<48x128xf32> to vector<48x32xf32>
    %80 = arith.negf %79 : vector<48x32xf32>
    %81 = math.exp %80 : vector<48x32xf32>
    %cst_18 = arith.constant 1.000000e+00 : f32
    %82 = vector.broadcast %cst_18 : f32 to vector<48x32xf32>
    %83 = arith.addf %82, %81 : vector<48x32xf32>
    %84 = arith.divf %82, %83 : vector<48x32xf32>
    %85 = arith.mulf %76, %59 : vector<48x32xf32>
    %86 = arith.mulf %70, %78 : vector<48x32xf32>
    %87 = arith.addf %85, %86 : vector<48x32xf32>
    %88 = math.tanh %87 : vector<48x32xf32>
    %89 = arith.mulf %84, %88 : vector<48x32xf32>
    %90 = vector.extract_strided_slice %5 {offsets = [144, 0], sizes = [48, 128], strides = [1, 1]} : vector<192x128xf32> to vector<48x128xf32>
    %cst_19 = arith.constant dense<0.000000e+00> : vector<48x128xf32>
    %91 = tpu.matmul %89, %6, %cst_19 {dimension_numbers = #tpu.dot_dimension_numbers<[1], [0], [0], [1], [0, 0, 1, 1], [], []>} : vector<48x32xf32>, vector<32x128xf32>, vector<48x128xf32> -> vector<48x128xf32>
    %92 = arith.addf %90, %91 : vector<48x128xf32>
    %93 = vector.extract_strided_slice %92 {offsets = [0, 0], sizes = [48, 32], strides = [1, 1]} : vector<48x128xf32> to vector<48x32xf32>
    %94 = arith.negf %93 : vector<48x32xf32>
    %95 = math.exp %94 : vector<48x32xf32>
    %cst_20 = arith.constant 1.000000e+00 : f32
    %96 = vector.broadcast %cst_20 : f32 to vector<48x32xf32>
    %97 = arith.addf %96, %95 : vector<48x32xf32>
    %98 = arith.divf %96, %97 : vector<48x32xf32>
    %99 = vector.extract_strided_slice %92 {offsets = [0, 32], sizes = [48, 32], strides = [1, 1]} : vector<48x128xf32> to vector<48x32xf32>
    %100 = arith.negf %99 : vector<48x32xf32>
    %101 = math.exp %100 : vector<48x32xf32>
    %cst_21 = arith.constant 1.000000e+00 : f32
    %102 = vector.broadcast %cst_21 : f32 to vector<48x32xf32>
    %103 = arith.addf %102, %101 : vector<48x32xf32>
    %104 = arith.divf %102, %103 : vector<48x32xf32>
    %105 = vector.extract_strided_slice %92 {offsets = [0, 64], sizes = [48, 32], strides = [1, 1]} : vector<48x128xf32> to vector<48x32xf32>
    %106 = math.tanh %105 : vector<48x32xf32>
    %107 = vector.extract_strided_slice %92 {offsets = [0, 96], sizes = [48, 32], strides = [1, 1]} : vector<48x128xf32> to vector<48x32xf32>
    %108 = arith.negf %107 : vector<48x32xf32>
    %109 = math.exp %108 : vector<48x32xf32>
    %cst_22 = arith.constant 1.000000e+00 : f32
    %110 = vector.broadcast %cst_22 : f32 to vector<48x32xf32>
    %111 = arith.addf %110, %109 : vector<48x32xf32>
    %112 = arith.divf %110, %111 : vector<48x32xf32>
    %113 = arith.mulf %104, %87 : vector<48x32xf32>
    %114 = arith.mulf %98, %106 : vector<48x32xf32>
    %115 = arith.addf %113, %114 : vector<48x32xf32>
    %116 = math.tanh %115 : vector<48x32xf32>
    %117 = arith.mulf %112, %116 : vector<48x32xf32>
    %c0_23 = arith.constant 0 : index
    %c0_24 = arith.constant 0 : index
    %118 = vector.load %arg5[%c0_23, %c0_24] : memref<32x32xf32, #tpu.memory_space<vmem>>, vector<32x32xf32>
    %cst_25 = arith.constant dense<0.000000e+00> : vector<48x32xf32>
    %119 = tpu.matmul %117, %118, %cst_25 {dimension_numbers = #tpu.dot_dimension_numbers<[1], [0], [0], [1], [0, 0, 1, 1], [], []>} : vector<48x32xf32>, vector<32x32xf32>, vector<48x32xf32> -> vector<48x32xf32>
    %c0_26 = arith.constant 0 : index
    %c0_27 = arith.constant 0 : index
    %120 = vector.load %arg6[%c0_26, %c0_27] : memref<1x32xf32, #tpu.memory_space<vmem>>, vector<1x32xf32>
    %121 = vector.broadcast %120 : vector<1x32xf32> to vector<48x32xf32>
    %122 = arith.addf %119, %121 : vector<48x32xf32>
    %cst_28 = arith.constant 0.000000e+00 : f32
    %123 = vector.broadcast %cst_28 : f32 to vector<48x32xf32>
    %124 = arith.maximumf %122, %123 : vector<48x32xf32>
    %125 = vector.extract_strided_slice %124 {offsets = [0, 0], sizes = [24, 32], strides = [1, 1]} : vector<48x32xf32> to vector<24x32xf32>
    %126 = vector.extract_strided_slice %124 {offsets = [24, 0], sizes = [24, 32], strides = [1, 1]} : vector<48x32xf32> to vector<24x32xf32>
    %127 = arith.addf %125, %126 : vector<24x32xf32>
    %cst_29 = arith.constant 5.000000e-01 : f32
    %128 = vector.broadcast %cst_29 : f32 to vector<24x32xf32>
    %129 = arith.mulf %127, %128 : vector<24x32xf32>
    %c0_30 = arith.constant 0 : index
    %c0_31 = arith.constant 0 : index
    %130 = vector.load %arg7[%c0_30, %c0_31] : memref<1x32xf32, #tpu.memory_space<vmem>>, vector<1x32xf32>
    %c0_32 = arith.constant 0 : index
    %c0_33 = arith.constant 0 : index
    %131 = vector.load %arg8[%c0_32, %c0_33] : memref<1x32xf32, #tpu.memory_space<vmem>>, vector<1x32xf32>
    %cst_34 = arith.constant dense<0.000000e+00> : vector<32xf32>
    %132 = vector.multi_reduction <add>, %129, %cst_34 [0] : vector<24x32xf32> to vector<32xf32>
    %133 = vector.shape_cast %132 : vector<32xf32> to vector<1x32xf32>
    %cst_35 = arith.constant 2.400000e+01 : f32
    %134 = vector.broadcast %cst_35 : f32 to vector<1x32xf32>
    %135 = arith.divf %133, %134 : vector<1x32xf32>
    %136 = vector.broadcast %135 : vector<1x32xf32> to vector<24x32xf32>
    %137 = arith.subf %129, %136 : vector<24x32xf32>
    %138 = arith.mulf %137, %137 : vector<24x32xf32>
    %cst_36 = arith.constant dense<0.000000e+00> : vector<32xf32>
    %139 = vector.multi_reduction <add>, %138, %cst_36 [0] : vector<24x32xf32> to vector<32xf32>
    %140 = vector.shape_cast %139 : vector<32xf32> to vector<1x32xf32>
    %cst_37 = arith.constant 2.400000e+01 : f32
    %141 = vector.broadcast %cst_37 : f32 to vector<1x32xf32>
    %142 = arith.divf %140, %141 : vector<1x32xf32>
    %143 = vector.broadcast %135 : vector<1x32xf32> to vector<24x32xf32>
    %144 = arith.subf %129, %143 : vector<24x32xf32>
    %cst_38 = arith.constant 9.99999974E-6 : f32
    %145 = vector.broadcast %cst_38 : f32 to vector<1x32xf32>
    %146 = arith.addf %142, %145 : vector<1x32xf32>
    %147 = math.rsqrt %146 : vector<1x32xf32>
    %148 = vector.broadcast %147 : vector<1x32xf32> to vector<24x32xf32>
    %149 = arith.mulf %144, %148 : vector<24x32xf32>
    %150 = vector.broadcast %130 : vector<1x32xf32> to vector<24x32xf32>
    %151 = arith.mulf %149, %150 : vector<24x32xf32>
    %152 = vector.broadcast %131 : vector<1x32xf32> to vector<24x32xf32>
    %153 = arith.addf %151, %152 : vector<24x32xf32>
    %c0_39 = arith.constant 0 : index
    %c0_40 = arith.constant 0 : index
    %154 = vector.load %arg11[%c0_39, %c0_40] : memref<24x1000xbf16, #tpu.memory_space<vmem>>, vector<24x1000xbf16>
    %c0_41 = arith.constant 0 : index
    %c0_42 = arith.constant 0 : index
    %155 = vector.load %arg12[%c0_41, %c0_42] : memref<1000x32xbf16, #tpu.memory_space<vmem>>, vector<1000x32xbf16>
    %cst_43 = arith.constant dense<0.000000e+00> : vector<24x32xf32>
    %156 = tpu.matmul %154, %155, %cst_43 {dimension_numbers = #tpu.dot_dimension_numbers<[1], [0], [0], [1], [0, 0, 1, 1], [], []>} : vector<24x1000xbf16>, vector<1000x32xbf16>, vector<24x32xf32> -> vector<24x32xf32>
    %c0_44 = arith.constant 0 : index
    %c0_45 = arith.constant 0 : index
    %157 = vector.load %arg13[%c0_44, %c0_45] : memref<1x32xf32, #tpu.memory_space<vmem>>, vector<1x32xf32>
    %158 = vector.broadcast %157 : vector<1x32xf32> to vector<24x32xf32>
    %159 = arith.addf %156, %158 : vector<24x32xf32>
    %cst_46 = arith.constant 0.000000e+00 : f32
    %160 = vector.broadcast %cst_46 : f32 to vector<24x32xf32>
    %161 = arith.maximumf %159, %160 : vector<24x32xf32>
    %c0_47 = arith.constant 0 : index
    %c0_48 = arith.constant 0 : index
    %162 = vector.load %arg14[%c0_47, %c0_48] : memref<24x1xf32, #tpu.memory_space<vmem>>, vector<24x1xf32>
    %163 = vector.broadcast %162 : vector<24x1xf32> to vector<24x32xf32>
    %164 = arith.mulf %161, %163 : vector<24x32xf32>
    %c0_49 = arith.constant 0 : index
    %c0_50 = arith.constant 0 : index
    %165 = vector.load %arg9[%c0_49, %c0_50] : memref<24x15xf32, #tpu.memory_space<vmem>>, vector<24x15xf32>
    %c0_51 = arith.constant 0 : index
    %c0_52 = arith.constant 0 : index
    %166 = vector.load %arg15[%c0_51, %c0_52] : memref<15x128xf32, #tpu.memory_space<vmem>>, vector<15x128xf32>
    %cst_53 = arith.constant dense<0.000000e+00> : vector<24x128xf32>
    %167 = tpu.matmul %165, %166, %cst_53 {dimension_numbers = #tpu.dot_dimension_numbers<[1], [0], [0], [1], [0, 0, 1, 1], [], []>} : vector<24x15xf32>, vector<15x128xf32>, vector<24x128xf32> -> vector<24x128xf32>
    %c0_54 = arith.constant 0 : index
    %c0_55 = arith.constant 0 : index
    %168 = vector.load %arg10[%c0_54, %c0_55] : memref<24x5xf32, #tpu.memory_space<vmem>>, vector<24x5xf32>
    %c0_56 = arith.constant 0 : index
    %c0_57 = arith.constant 0 : index
    %169 = vector.load %arg16[%c0_56, %c0_57] : memref<5x128xf32, #tpu.memory_space<vmem>>, vector<5x128xf32>
    %cst_58 = arith.constant dense<0.000000e+00> : vector<24x128xf32>
    %170 = tpu.matmul %168, %169, %cst_58 {dimension_numbers = #tpu.dot_dimension_numbers<[1], [0], [0], [1], [0, 0, 1, 1], [], []>} : vector<24x5xf32>, vector<5x128xf32>, vector<24x128xf32> -> vector<24x128xf32>
    %171 = arith.addf %167, %170 : vector<24x128xf32>
    %c0_59 = arith.constant 0 : index
    %c0_60 = arith.constant 0 : index
    %172 = vector.load %arg17[%c0_59, %c0_60] : memref<32x128xf32, #tpu.memory_space<vmem>>, vector<32x128xf32>
    %cst_61 = arith.constant dense<0.000000e+00> : vector<24x128xf32>
    %173 = tpu.matmul %153, %172, %cst_61 {dimension_numbers = #tpu.dot_dimension_numbers<[1], [0], [0], [1], [0, 0, 1, 1], [], []>} : vector<24x32xf32>, vector<32x128xf32>, vector<24x128xf32> -> vector<24x128xf32>
    %174 = arith.addf %171, %173 : vector<24x128xf32>
    %c0_62 = arith.constant 0 : index
    %c0_63 = arith.constant 0 : index
    %175 = vector.load %arg18[%c0_62, %c0_63] : memref<32x128xf32, #tpu.memory_space<vmem>>, vector<32x128xf32>
    %cst_64 = arith.constant dense<0.000000e+00> : vector<24x128xf32>
    %176 = tpu.matmul %164, %175, %cst_64 {dimension_numbers = #tpu.dot_dimension_numbers<[1], [0], [0], [1], [0, 0, 1, 1], [], []>} : vector<24x32xf32>, vector<32x128xf32>, vector<24x128xf32> -> vector<24x128xf32>
    %177 = arith.addf %174, %176 : vector<24x128xf32>
    %c0_65 = arith.constant 0 : index
    %c0_66 = arith.constant 0 : index
    %178 = vector.load %arg19[%c0_65, %c0_66] : memref<1x128xf32, #tpu.memory_space<vmem>>, vector<1x128xf32>
    %179 = vector.broadcast %178 : vector<1x128xf32> to vector<24x128xf32>
    %180 = arith.addf %177, %179 : vector<24x128xf32>
    %c0_67 = arith.constant 0 : index
    %c0_68 = arith.constant 0 : index
    %181 = vector.load %arg20[%c0_67, %c0_68] : memref<32x128xf32, #tpu.memory_space<vmem>>, vector<32x128xf32>
    %182 = vector.extract_strided_slice %180 {offsets = [16, 0], sizes = [8, 128], strides = [1, 1]} : vector<24x128xf32> to vector<8x128xf32>
    %cst_69 = arith.constant 0.000000e+00 : f32
    %183 = vector.broadcast %cst_69 : f32 to vector<8x32xf32>
    %184 = vector.extract_strided_slice %182 {offsets = [0, 0], sizes = [8, 32], strides = [1, 1]} : vector<8x128xf32> to vector<8x32xf32>
    %185 = arith.negf %184 : vector<8x32xf32>
    %186 = math.exp %185 : vector<8x32xf32>
    %cst_70 = arith.constant 1.000000e+00 : f32
    %187 = vector.broadcast %cst_70 : f32 to vector<8x32xf32>
    %188 = arith.addf %187, %186 : vector<8x32xf32>
    %189 = arith.divf %187, %188 : vector<8x32xf32>
    %190 = vector.extract_strided_slice %182 {offsets = [0, 32], sizes = [8, 32], strides = [1, 1]} : vector<8x128xf32> to vector<8x32xf32>
    %191 = arith.negf %190 : vector<8x32xf32>
    %192 = math.exp %191 : vector<8x32xf32>
    %cst_71 = arith.constant 1.000000e+00 : f32
    %193 = vector.broadcast %cst_71 : f32 to vector<8x32xf32>
    %194 = arith.addf %193, %192 : vector<8x32xf32>
    %195 = arith.divf %193, %194 : vector<8x32xf32>
    %196 = vector.extract_strided_slice %182 {offsets = [0, 64], sizes = [8, 32], strides = [1, 1]} : vector<8x128xf32> to vector<8x32xf32>
    %197 = math.tanh %196 : vector<8x32xf32>
    %198 = vector.extract_strided_slice %182 {offsets = [0, 96], sizes = [8, 32], strides = [1, 1]} : vector<8x128xf32> to vector<8x32xf32>
    %199 = arith.negf %198 : vector<8x32xf32>
    %200 = math.exp %199 : vector<8x32xf32>
    %cst_72 = arith.constant 1.000000e+00 : f32
    %201 = vector.broadcast %cst_72 : f32 to vector<8x32xf32>
    %202 = arith.addf %201, %200 : vector<8x32xf32>
    %203 = arith.divf %201, %202 : vector<8x32xf32>
    %204 = arith.mulf %195, %183 : vector<8x32xf32>
    %205 = arith.mulf %189, %197 : vector<8x32xf32>
    %206 = arith.addf %204, %205 : vector<8x32xf32>
    %207 = math.tanh %206 : vector<8x32xf32>
    %208 = arith.mulf %203, %207 : vector<8x32xf32>
    %209 = tpu.iota {dimensions = array<i32: 1>} : vector<8x8xi32>
    %c1_i32 = arith.constant 1 : i32
    %210 = vector.broadcast %c1_i32 : i32 to vector<8x8xi32>
    %211 = arith.addi %209, %210 : vector<8x8xi32>
    %c1 = arith.constant 1 : index
    %c0_73 = arith.constant 0 : index
    %c0_74 = arith.constant 0 : index
    %212 = vector.load %arg21[%c1, %c0_73, %c0_74] : memref<2x8x2xi32, #tpu.memory_space<vmem>>, vector<1x8x2xi32>
    %213 = vector.shape_cast %212 : vector<1x8x2xi32> to vector<8x2xi32>
    %214 = vector.extract_strided_slice %213 {offsets = [0, 0], sizes = [8, 1], strides = [1, 1]} : vector<8x2xi32> to vector<8x1xi32>
    %215 = vector.extract_strided_slice %213 {offsets = [0, 1], sizes = [8, 1], strides = [1, 1]} : vector<8x2xi32> to vector<8x1xi32>
    %216 = vector.broadcast %214 : vector<8x1xi32> to vector<8x8xi32>
    %217 = arith.cmpi eq, %216, %211 : vector<8x8xi32>
    %218 = arith.extui %217 : vector<8x8xi1> to vector<8x8xi32>
    %219 = arith.sitofp %218 : vector<8x8xi32> to vector<8x8xf32>
    %220 = vector.broadcast %215 : vector<8x1xi32> to vector<8x8xi32>
    %221 = arith.cmpi eq, %220, %211 : vector<8x8xi32>
    %222 = arith.extui %221 : vector<8x8xi1> to vector<8x8xi32>
    %223 = arith.sitofp %222 : vector<8x8xi32> to vector<8x8xf32>
    %224 = arith.addf %219, %223 : vector<8x8xf32>
    %cst_75 = arith.constant dense<0.000000e+00> : vector<8x32xf32>
    %225 = tpu.matmul %224, %208, %cst_75 {dimension_numbers = #tpu.dot_dimension_numbers<[1], [0], [0], [1], [0, 0, 1, 1], [], []>} : vector<8x8xf32>, vector<8x32xf32>, vector<8x32xf32> -> vector<8x32xf32>
    %cst_76 = arith.constant 5.000000e-01 : f32
    %226 = vector.broadcast %cst_76 : f32 to vector<8x32xf32>
    %227 = arith.mulf %226, %225 : vector<8x32xf32>
    %cst_77 = arith.constant dense<0.000000e+00> : vector<8x32xf32>
    %228 = tpu.matmul %224, %206, %cst_77 {dimension_numbers = #tpu.dot_dimension_numbers<[1], [0], [0], [1], [0, 0, 1, 1], [], []>} : vector<8x8xf32>, vector<8x32xf32>, vector<8x32xf32> -> vector<8x32xf32>
    %cst_78 = arith.constant 5.000000e-01 : f32
    %229 = vector.broadcast %cst_78 : f32 to vector<8x32xf32>
    %230 = arith.mulf %229, %228 : vector<8x32xf32>
    %231 = vector.extract_strided_slice %180 {offsets = [8, 0], sizes = [8, 128], strides = [1, 1]} : vector<24x128xf32> to vector<8x128xf32>
    %cst_79 = arith.constant dense<0.000000e+00> : vector<8x128xf32>
    %232 = tpu.matmul %227, %181, %cst_79 {dimension_numbers = #tpu.dot_dimension_numbers<[1], [0], [0], [1], [0, 0, 1, 1], [], []>} : vector<8x32xf32>, vector<32x128xf32>, vector<8x128xf32> -> vector<8x128xf32>
    %233 = arith.addf %231, %232 : vector<8x128xf32>
    %234 = vector.extract_strided_slice %233 {offsets = [0, 0], sizes = [8, 32], strides = [1, 1]} : vector<8x128xf32> to vector<8x32xf32>
    %235 = arith.negf %234 : vector<8x32xf32>
    %236 = math.exp %235 : vector<8x32xf32>
    %cst_80 = arith.constant 1.000000e+00 : f32
    %237 = vector.broadcast %cst_80 : f32 to vector<8x32xf32>
    %238 = arith.addf %237, %236 : vector<8x32xf32>
    %239 = arith.divf %237, %238 : vector<8x32xf32>
    %240 = vector.extract_strided_slice %233 {offsets = [0, 32], sizes = [8, 32], strides = [1, 1]} : vector<8x128xf32> to vector<8x32xf32>
    %241 = arith.negf %240 : vector<8x32xf32>
    %242 = math.exp %241 : vector<8x32xf32>
    %cst_81 = arith.constant 1.000000e+00 : f32
    %243 = vector.broadcast %cst_81 : f32 to vector<8x32xf32>
    %244 = arith.addf %243, %242 : vector<8x32xf32>
    %245 = arith.divf %243, %244 : vector<8x32xf32>
    %246 = vector.extract_strided_slice %233 {offsets = [0, 64], sizes = [8, 32], strides = [1, 1]} : vector<8x128xf32> to vector<8x32xf32>
    %247 = math.tanh %246 : vector<8x32xf32>
    %248 = vector.extract_strided_slice %233 {offsets = [0, 96], sizes = [8, 32], strides = [1, 1]} : vector<8x128xf32> to vector<8x32xf32>
    %249 = arith.negf %248 : vector<8x32xf32>
    %250 = math.exp %249 : vector<8x32xf32>
    %cst_82 = arith.constant 1.000000e+00 : f32
    %251 = vector.broadcast %cst_82 : f32 to vector<8x32xf32>
    %252 = arith.addf %251, %250 : vector<8x32xf32>
    %253 = arith.divf %251, %252 : vector<8x32xf32>
    %254 = arith.mulf %245, %230 : vector<8x32xf32>
    %255 = arith.mulf %239, %247 : vector<8x32xf32>
    %256 = arith.addf %254, %255 : vector<8x32xf32>
    %257 = math.tanh %256 : vector<8x32xf32>
    %258 = arith.mulf %253, %257 : vector<8x32xf32>
    %c0_83 = arith.constant 0 : index
    %c0_84 = arith.constant 0 : index
    %c0_85 = arith.constant 0 : index
    %259 = vector.load %arg21[%c0_83, %c0_84, %c0_85] : memref<2x8x2xi32, #tpu.memory_space<vmem>>, vector<1x8x2xi32>
    %260 = vector.shape_cast %259 : vector<1x8x2xi32> to vector<8x2xi32>
    %261 = vector.extract_strided_slice %260 {offsets = [0, 0], sizes = [8, 1], strides = [1, 1]} : vector<8x2xi32> to vector<8x1xi32>
    %262 = vector.extract_strided_slice %260 {offsets = [0, 1], sizes = [8, 1], strides = [1, 1]} : vector<8x2xi32> to vector<8x1xi32>
    %263 = vector.broadcast %261 : vector<8x1xi32> to vector<8x8xi32>
    %264 = arith.cmpi eq, %263, %211 : vector<8x8xi32>
    %265 = arith.extui %264 : vector<8x8xi1> to vector<8x8xi32>
    %266 = arith.sitofp %265 : vector<8x8xi32> to vector<8x8xf32>
    %267 = vector.broadcast %262 : vector<8x1xi32> to vector<8x8xi32>
    %268 = arith.cmpi eq, %267, %211 : vector<8x8xi32>
    %269 = arith.extui %268 : vector<8x8xi1> to vector<8x8xi32>
    %270 = arith.sitofp %269 : vector<8x8xi32> to vector<8x8xf32>
    %271 = arith.addf %266, %270 : vector<8x8xf32>
    %cst_86 = arith.constant dense<0.000000e+00> : vector<8x32xf32>
    %272 = tpu.matmul %271, %258, %cst_86 {dimension_numbers = #tpu.dot_dimension_numbers<[1], [0], [0], [1], [0, 0, 1, 1], [], []>} : vector<8x8xf32>, vector<8x32xf32>, vector<8x32xf32> -> vector<8x32xf32>
    %cst_87 = arith.constant 5.000000e-01 : f32
    %273 = vector.broadcast %cst_87 : f32 to vector<8x32xf32>
    %274 = arith.mulf %273, %272 : vector<8x32xf32>
    %cst_88 = arith.constant dense<0.000000e+00> : vector<8x32xf32>
    %275 = tpu.matmul %271, %256, %cst_88 {dimension_numbers = #tpu.dot_dimension_numbers<[1], [0], [0], [1], [0, 0, 1, 1], [], []>} : vector<8x8xf32>, vector<8x32xf32>, vector<8x32xf32> -> vector<8x32xf32>
    %cst_89 = arith.constant 5.000000e-01 : f32
    %276 = vector.broadcast %cst_89 : f32 to vector<8x32xf32>
    %277 = arith.mulf %276, %275 : vector<8x32xf32>
    %278 = vector.extract_strided_slice %180 {offsets = [0, 0], sizes = [8, 128], strides = [1, 1]} : vector<24x128xf32> to vector<8x128xf32>
    %cst_90 = arith.constant dense<0.000000e+00> : vector<8x128xf32>
    %279 = tpu.matmul %274, %181, %cst_90 {dimension_numbers = #tpu.dot_dimension_numbers<[1], [0], [0], [1], [0, 0, 1, 1], [], []>} : vector<8x32xf32>, vector<32x128xf32>, vector<8x128xf32> -> vector<8x128xf32>
    %280 = arith.addf %278, %279 : vector<8x128xf32>
    %281 = vector.extract_strided_slice %280 {offsets = [0, 0], sizes = [8, 32], strides = [1, 1]} : vector<8x128xf32> to vector<8x32xf32>
    %282 = arith.negf %281 : vector<8x32xf32>
    %283 = math.exp %282 : vector<8x32xf32>
    %cst_91 = arith.constant 1.000000e+00 : f32
    %284 = vector.broadcast %cst_91 : f32 to vector<8x32xf32>
    %285 = arith.addf %284, %283 : vector<8x32xf32>
    %286 = arith.divf %284, %285 : vector<8x32xf32>
    %287 = vector.extract_strided_slice %280 {offsets = [0, 32], sizes = [8, 32], strides = [1, 1]} : vector<8x128xf32> to vector<8x32xf32>
    %288 = arith.negf %287 : vector<8x32xf32>
    %289 = math.exp %288 : vector<8x32xf32>
    %cst_92 = arith.constant 1.000000e+00 : f32
    %290 = vector.broadcast %cst_92 : f32 to vector<8x32xf32>
    %291 = arith.addf %290, %289 : vector<8x32xf32>
    %292 = arith.divf %290, %291 : vector<8x32xf32>
    %293 = vector.extract_strided_slice %280 {offsets = [0, 64], sizes = [8, 32], strides = [1, 1]} : vector<8x128xf32> to vector<8x32xf32>
    %294 = math.tanh %293 : vector<8x32xf32>
    %295 = vector.extract_strided_slice %280 {offsets = [0, 96], sizes = [8, 32], strides = [1, 1]} : vector<8x128xf32> to vector<8x32xf32>
    %296 = arith.negf %295 : vector<8x32xf32>
    %297 = math.exp %296 : vector<8x32xf32>
    %cst_93 = arith.constant 1.000000e+00 : f32
    %298 = vector.broadcast %cst_93 : f32 to vector<8x32xf32>
    %299 = arith.addf %298, %297 : vector<8x32xf32>
    %300 = arith.divf %298, %299 : vector<8x32xf32>
    %301 = arith.mulf %292, %277 : vector<8x32xf32>
    %302 = arith.mulf %286, %294 : vector<8x32xf32>
    %303 = arith.addf %301, %302 : vector<8x32xf32>
    %304 = math.tanh %303 : vector<8x32xf32>
    %305 = arith.mulf %300, %304 : vector<8x32xf32>
    %306 = vector.extract_strided_slice %305 {offsets = [0, 0], sizes = [5, 32], strides = [1, 1]} : vector<8x32xf32> to vector<5x32xf32>
    %c0_94 = arith.constant 0 : index
    %c0_95 = arith.constant 0 : index
    %307 = vector.load %arg22[%c0_94, %c0_95] : memref<1x32xf32, #tpu.memory_space<vmem>>, vector<1x32xf32>
    %c0_96 = arith.constant 0 : index
    %c0_97 = arith.constant 0 : index
    %308 = vector.load %arg23[%c0_96, %c0_97] : memref<1x32xf32, #tpu.memory_space<vmem>>, vector<1x32xf32>
    %cst_98 = arith.constant dense<0.000000e+00> : vector<32xf32>
    %309 = vector.multi_reduction <add>, %306, %cst_98 [0] : vector<5x32xf32> to vector<32xf32>
    %310 = vector.shape_cast %309 : vector<32xf32> to vector<1x32xf32>
    %cst_99 = arith.constant 5.000000e+00 : f32
    %311 = vector.broadcast %cst_99 : f32 to vector<1x32xf32>
    %312 = arith.divf %310, %311 : vector<1x32xf32>
    %313 = vector.broadcast %312 : vector<1x32xf32> to vector<5x32xf32>
    %314 = arith.subf %306, %313 : vector<5x32xf32>
    %315 = arith.mulf %314, %314 : vector<5x32xf32>
    %cst_100 = arith.constant dense<0.000000e+00> : vector<32xf32>
    %316 = vector.multi_reduction <add>, %315, %cst_100 [0] : vector<5x32xf32> to vector<32xf32>
    %317 = vector.shape_cast %316 : vector<32xf32> to vector<1x32xf32>
    %cst_101 = arith.constant 5.000000e+00 : f32
    %318 = vector.broadcast %cst_101 : f32 to vector<1x32xf32>
    %319 = arith.divf %317, %318 : vector<1x32xf32>
    %320 = vector.broadcast %312 : vector<1x32xf32> to vector<5x32xf32>
    %321 = arith.subf %306, %320 : vector<5x32xf32>
    %cst_102 = arith.constant 9.99999974E-6 : f32
    %322 = vector.broadcast %cst_102 : f32 to vector<1x32xf32>
    %323 = arith.addf %319, %322 : vector<1x32xf32>
    %324 = math.rsqrt %323 : vector<1x32xf32>
    %325 = vector.broadcast %324 : vector<1x32xf32> to vector<5x32xf32>
    %326 = arith.mulf %321, %325 : vector<5x32xf32>
    %327 = vector.broadcast %307 : vector<1x32xf32> to vector<5x32xf32>
    %328 = arith.mulf %326, %327 : vector<5x32xf32>
    %329 = vector.broadcast %308 : vector<1x32xf32> to vector<5x32xf32>
    %330 = arith.addf %328, %329 : vector<5x32xf32>
    %c0_103 = arith.constant 0 : index
    %c0_104 = arith.constant 0 : index
    %331 = vector.load %arg24[%c0_103, %c0_104] : memref<32x32xf32, #tpu.memory_space<vmem>>, vector<32x32xf32>
    %cst_105 = arith.constant dense<0.000000e+00> : vector<5x32xf32>
    %332 = tpu.matmul %330, %331, %cst_105 {dimension_numbers = #tpu.dot_dimension_numbers<[1], [0], [0], [1], [0, 0, 1, 1], [], []>} : vector<5x32xf32>, vector<32x32xf32>, vector<5x32xf32> -> vector<5x32xf32>
    %c0_106 = arith.constant 0 : index
    %c0_107 = arith.constant 0 : index
    %333 = vector.load %arg25[%c0_106, %c0_107] : memref<1x32xf32, #tpu.memory_space<vmem>>, vector<1x32xf32>
    %334 = vector.broadcast %333 : vector<1x32xf32> to vector<5x32xf32>
    %335 = arith.addf %332, %334 : vector<5x32xf32>
    %cst_108 = arith.constant 0.000000e+00 : f32
    %336 = vector.broadcast %cst_108 : f32 to vector<5x32xf32>
    %337 = arith.maximumf %335, %336 : vector<5x32xf32>
    %c0_109 = arith.constant 0 : index
    %c0_110 = arith.constant 0 : index
    %338 = vector.load %arg26[%c0_109, %c0_110] : memref<1x32xf32, #tpu.memory_space<vmem>>, vector<1x32xf32>
    %c0_111 = arith.constant 0 : index
    %c0_112 = arith.constant 0 : index
    %339 = vector.load %arg27[%c0_111, %c0_112] : memref<1x32xf32, #tpu.memory_space<vmem>>, vector<1x32xf32>
    %cst_113 = arith.constant dense<0.000000e+00> : vector<32xf32>
    %340 = vector.multi_reduction <add>, %337, %cst_113 [0] : vector<5x32xf32> to vector<32xf32>
    %341 = vector.shape_cast %340 : vector<32xf32> to vector<1x32xf32>
    %cst_114 = arith.constant 5.000000e+00 : f32
    %342 = vector.broadcast %cst_114 : f32 to vector<1x32xf32>
    %343 = arith.divf %341, %342 : vector<1x32xf32>
    %344 = vector.broadcast %343 : vector<1x32xf32> to vector<5x32xf32>
    %345 = arith.subf %337, %344 : vector<5x32xf32>
    %346 = arith.mulf %345, %345 : vector<5x32xf32>
    %cst_115 = arith.constant dense<0.000000e+00> : vector<32xf32>
    %347 = vector.multi_reduction <add>, %346, %cst_115 [0] : vector<5x32xf32> to vector<32xf32>
    %348 = vector.shape_cast %347 : vector<32xf32> to vector<1x32xf32>
    %cst_116 = arith.constant 5.000000e+00 : f32
    %349 = vector.broadcast %cst_116 : f32 to vector<1x32xf32>
    %350 = arith.divf %348, %349 : vector<1x32xf32>
    %351 = vector.broadcast %343 : vector<1x32xf32> to vector<5x32xf32>
    %352 = arith.subf %337, %351 : vector<5x32xf32>
    %cst_117 = arith.constant 9.99999974E-6 : f32
    %353 = vector.broadcast %cst_117 : f32 to vector<1x32xf32>
    %354 = arith.addf %350, %353 : vector<1x32xf32>
    %355 = math.rsqrt %354 : vector<1x32xf32>
    %356 = vector.broadcast %355 : vector<1x32xf32> to vector<5x32xf32>
    %357 = arith.mulf %352, %356 : vector<5x32xf32>
    %358 = vector.broadcast %338 : vector<1x32xf32> to vector<5x32xf32>
    %359 = arith.mulf %357, %358 : vector<5x32xf32>
    %360 = vector.broadcast %339 : vector<1x32xf32> to vector<5x32xf32>
    %361 = arith.addf %359, %360 : vector<5x32xf32>
    %c0_118 = arith.constant 0 : index
    %c0_119 = arith.constant 0 : index
    %362 = vector.load %arg28[%c0_118, %c0_119] : memref<32x32xf32, #tpu.memory_space<vmem>>, vector<32x32xf32>
    %cst_120 = arith.constant dense<0.000000e+00> : vector<5x32xf32>
    %363 = tpu.matmul %361, %362, %cst_120 {dimension_numbers = #tpu.dot_dimension_numbers<[1], [0], [0], [1], [0, 0, 1, 1], [], []>} : vector<5x32xf32>, vector<32x32xf32>, vector<5x32xf32> -> vector<5x32xf32>
    %c0_121 = arith.constant 0 : index
    %c0_122 = arith.constant 0 : index
    %364 = vector.load %arg29[%c0_121, %c0_122] : memref<1x32xf32, #tpu.memory_space<vmem>>, vector<1x32xf32>
    %365 = vector.broadcast %364 : vector<1x32xf32> to vector<5x32xf32>
    %366 = arith.addf %363, %365 : vector<5x32xf32>
    %cst_123 = arith.constant 0.000000e+00 : f32
    %367 = vector.broadcast %cst_123 : f32 to vector<5x32xf32>
    %368 = arith.maximumf %366, %367 : vector<5x32xf32>
    %c0_124 = arith.constant 0 : index
    %c0_125 = arith.constant 0 : index
    %369 = vector.load %arg30[%c0_124, %c0_125] : memref<32x1xf32, #tpu.memory_space<vmem>>, vector<32x1xf32>
    %cst_126 = arith.constant dense<0.000000e+00> : vector<5x1xf32>
    %370 = tpu.matmul %368, %369, %cst_126 {dimension_numbers = #tpu.dot_dimension_numbers<[1], [0], [0], [1], [0, 0, 1, 1], [], []>} : vector<5x32xf32>, vector<32x1xf32>, vector<5x1xf32> -> vector<5x1xf32>
    %c0_127 = arith.constant 0 : index
    %c0_128 = arith.constant 0 : index
    %371 = vector.load %arg31[%c0_127, %c0_128] : memref<1x1xf32, #tpu.memory_space<vmem>>, vector<1x1xf32>
    %372 = vector.broadcast %371 : vector<1x1xf32> to vector<5x1xf32>
    %373 = arith.addf %370, %372 : vector<5x1xf32>
    %374 = arith.negf %373 : vector<5x1xf32>
    %375 = math.exp %374 : vector<5x1xf32>
    %cst_129 = arith.constant 1.000000e+00 : f32
    %376 = vector.broadcast %cst_129 : f32 to vector<5x1xf32>
    %377 = arith.addf %376, %375 : vector<5x1xf32>
    %378 = arith.divf %376, %377 : vector<5x1xf32>
    %c0_130 = arith.constant 0 : index
    %c0_131 = arith.constant 0 : index
    %379 = vector.load %arg32[%c0_130, %c0_131] : memref<5x1xf32, #tpu.memory_space<vmem>>, vector<5x1xf32>
    tpu.vector_store %arg32[%c0_130, %c0_131], %378 {strides = array<i32>} : memref<5x1xf32, #tpu.memory_space<vmem>>, vector<5x1xf32>,
    return
  }
  func.func @transform_0(%arg0: i32) -> (i32, i32) {
    %c0_i32 = arith.constant 0 : i32
    %c0_i32_0 = arith.constant 0 : i32
    %c0_i32_1 = arith.constant 0 : i32
    return %c0_i32, %c0_i32_0 : i32, i32
  }
  func.func @transform_1(%arg0: i32) -> (i32, i32) {
    %c0_i32 = arith.constant 0 : i32
    %c0_i32_0 = arith.constant 0 : i32
    %c0_i32_1 = arith.constant 0 : i32
    return %c0_i32, %c0_i32_0 : i32, i32
  }
  func.func @transform_2(%arg0: i32) -> (i32, i32) {
    %c0_i32 = arith.constant 0 : i32
    %c0_i32_0 = arith.constant 0 : i32
    %c0_i32_1 = arith.constant 0 : i32
    return %c0_i32, %c0_i32_0 : i32, i32
  }
  func.func @transform_3(%arg0: i32) -> (i32, i32) {
    %c0_i32 = arith.constant 0 : i32
    %c0_i32_0 = arith.constant 0 : i32
    %c0_i32_1 = arith.constant 0 : i32
    return %c0_i32, %c0_i32_0 : i32, i32
  }
  func.func @transform_4(%arg0: i32) -> (i32, i32) {
    %c0_i32 = arith.constant 0 : i32
    %c0_i32_0 = arith.constant 0 : i32
    %c0_i32_1 = arith.constant 0 : i32
    return %c0_i32, %c0_i32_0 : i32, i32
  }
  func.func @transform_5(%arg0: i32) -> (i32, i32) {
    %c0_i32 = arith.constant 0 : i32
    %c0_i32_0 = arith.constant 0 : i32
    %c0_i32_1 = arith.constant 0 : i32
    return %c0_i32, %c0_i32_0 : i32, i32
  }
  func.func @transform_6(%arg0: i32) -> (i32, i32) {
    %c0_i32 = arith.constant 0 : i32
    %c0_i32_0 = arith.constant 0 : i32
    %c0_i32_1 = arith.constant 0 : i32
    return %c0_i32, %c0_i32_0 : i32, i32
  }
  func.func @transform_7(%arg0: i32) -> (i32, i32) {
    %c0_i32 = arith.constant 0 : i32
    %c0_i32_0 = arith.constant 0 : i32
    %c0_i32_1 = arith.constant 0 : i32
    return %c0_i32, %c0_i32_0 : i32, i32
  }
  func.func @transform_8(%arg0: i32) -> (i32, i32) {
    %c0_i32 = arith.constant 0 : i32
    %c0_i32_0 = arith.constant 0 : i32
    %c0_i32_1 = arith.constant 0 : i32
    return %c0_i32, %c0_i32_0 : i32, i32
  }
  func.func @transform_9(%arg0: i32) -> (i32, i32) {
    %c0_i32 = arith.constant 0 : i32
    %c0_i32_0 = arith.constant 0 : i32
    %c0_i32_1 = arith.constant 0 : i32
    return %c0_i32, %c0_i32_0 : i32, i32
  }
  func.func @transform_10(%arg0: i32) -> (i32, i32) {
    %c0_i32 = arith.constant 0 : i32
    %c0_i32_0 = arith.constant 0 : i32
    %c0_i32_1 = arith.constant 0 : i32
    return %c0_i32, %c0_i32_0 : i32, i32
  }
  func.func @transform_11(%arg0: i32) -> (i32, i32) {
    %c0_i32 = arith.constant 0 : i32
    %c0_i32_0 = arith.constant 0 : i32
    %c0_i32_1 = arith.constant 0 : i32
    return %c0_i32, %c0_i32_0 : i32, i32
  }
  func.func @transform_12(%arg0: i32) -> (i32, i32) {
    %c0_i32 = arith.constant 0 : i32
    %c0_i32_0 = arith.constant 0 : i32
    %c0_i32_1 = arith.constant 0 : i32
    return %c0_i32, %c0_i32_0 : i32, i32
  }
  func.func @transform_13(%arg0: i32) -> (i32, i32) {
    %c0_i32 = arith.constant 0 : i32
    %c0_i32_0 = arith.constant 0 : i32
    %c0_i32_1 = arith.constant 0 : i32
    return %c0_i32, %c0_i32_0 : i32, i32
  }
  func.func @transform_14(%arg0: i32) -> (i32, i32) {
    %c0_i32 = arith.constant 0 : i32
    %c0_i32_0 = arith.constant 0 : i32
    %c0_i32_1 = arith.constant 0 : i32
    return %c0_i32, %c0_i32_0 : i32, i32
  }
  func.func @transform_15(%arg0: i32) -> (i32, i32) {
    %c0_i32 = arith.constant 0 : i32
    %c0_i32_0 = arith.constant 0 : i32
    %c0_i32_1 = arith.constant 0 : i32
    return %c0_i32, %c0_i32_0 : i32, i32
  }
  func.func @transform_16(%arg0: i32) -> (i32, i32) {
    %c0_i32 = arith.constant 0 : i32
    %c0_i32_0 = arith.constant 0 : i32
    %c0_i32_1 = arith.constant 0 : i32
    return %c0_i32, %c0_i32_0 : i32, i32
  }
  func.func @transform_17(%arg0: i32) -> (i32, i32) {
    %c0_i32 = arith.constant 0 : i32
    %c0_i32_0 = arith.constant 0 : i32
    %c0_i32_1 = arith.constant 0 : i32
    return %c0_i32, %c0_i32_0 : i32, i32
  }
  func.func @transform_18(%arg0: i32) -> (i32, i32) {
    %c0_i32 = arith.constant 0 : i32
    %c0_i32_0 = arith.constant 0 : i32
    %c0_i32_1 = arith.constant 0 : i32
    return %c0_i32, %c0_i32_0 : i32, i32
  }
  func.func @transform_19(%arg0: i32) -> (i32, i32) {
    %c0_i32 = arith.constant 0 : i32
    %c0_i32_0 = arith.constant 0 : i32
    %c0_i32_1 = arith.constant 0 : i32
    return %c0_i32, %c0_i32_0 : i32, i32
  }
  func.func @transform_20(%arg0: i32) -> (i32, i32, i32) {
    %c0_i32 = arith.constant 0 : i32
    %c0_i32_0 = arith.constant 0 : i32
    %c0_i32_1 = arith.constant 0 : i32
    %c0_i32_2 = arith.constant 0 : i32
    return %c0_i32, %c0_i32_0, %c0_i32_1 : i32, i32, i32
  }
  func.func @transform_21(%arg0: i32) -> (i32, i32) {
    %c0_i32 = arith.constant 0 : i32
    %c0_i32_0 = arith.constant 0 : i32
    %c0_i32_1 = arith.constant 0 : i32
    return %c0_i32, %c0_i32_0 : i32, i32
  }
  func.func @transform_22(%arg0: i32) -> (i32, i32) {
    %c0_i32 = arith.constant 0 : i32
    %c0_i32_0 = arith.constant 0 : i32
    %c0_i32_1 = arith.constant 0 : i32
    return %c0_i32, %c0_i32_0 : i32, i32
  }
  func.func @transform_23(%arg0: i32) -> (i32, i32) {
    %c0_i32 = arith.constant 0 : i32
    %c0_i32_0 = arith.constant 0 : i32
    %c0_i32_1 = arith.constant 0 : i32
    return %c0_i32, %c0_i32_0 : i32, i32
  }
  func.func @transform_24(%arg0: i32) -> (i32, i32) {
    %c0_i32 = arith.constant 0 : i32
    %c0_i32_0 = arith.constant 0 : i32
    %c0_i32_1 = arith.constant 0 : i32
    return %c0_i32, %c0_i32_0 : i32, i32
  }
  func.func @transform_25(%arg0: i32) -> (i32, i32) {
    %c0_i32 = arith.constant 0 : i32
    %c0_i32_0 = arith.constant 0 : i32
    %c0_i32_1 = arith.constant 0 : i32
    return %c0_i32, %c0_i32_0 : i32, i32
  }
  func.func @transform_26(%arg0: i32) -> (i32, i32) {
    %c0_i32 = arith.constant 0 : i32
    %c0_i32_0 = arith.constant 0 : i32
    %c0_i32_1 = arith.constant 0 : i32
    return %c0_i32, %c0_i32_0 : i32, i32
  }
  func.func @transform_27(%arg0: i32) -> (i32, i32) {
    %c0_i32 = arith.constant 0 : i32
    %c0_i32_0 = arith.constant 0 : i32
    %c0_i32_1 = arith.constant 0 : i32
    return %c0_i32, %c0_i32_0 : i32, i32
  }
  func.func @transform_28(%arg0: i32) -> (i32, i32) {
    %c0_i32 = arith.constant 0 : i32
    %c0_i32_0 = arith.constant 0 : i32
    %c0_i32_1 = arith.constant 0 : i32
    return %c0_i32, %c0_i32_0 : i32, i32
  }
  func.func @transform_29(%arg0: i32) -> (i32, i32) {
    %c0_i32 = arith.constant 0 : i32
    %c0_i32_0 = arith.constant 0 : i32
    %c0_i32_1 = arith.constant 0 : i32
    return %c0_i32, %c0_i32_0 : i32, i32
  }
  func.func @transform_30(%arg0: i32) -> (i32, i32) {
    %c0_i32 = arith.constant 0 : i32
    %c0_i32_0 = arith.constant 0 : i32
    %c0_i32_1 = arith.constant 0 : i32
    return %c0_i32, %c0_i32_0 : i32, i32
  }
  func.func @transform_31(%arg0: i32) -> (i32, i32) {
    %c0_i32 = arith.constant 0 : i32
    %c0_i32_0 = arith.constant 0 : i32
    %c0_i32_1 = arith.constant 0 : i32
    return %c0_i32, %c0_i32_0 : i32, i32
  }
}

</mosaic_0001>

<llo_original>
// kernel: representation_forward_pallas.1
$region0: #{representation_forward_pallas.1}
  #allocation0 [shape = 'u32[]', space=smem, size = 0x4, offset = 0x4, fixed_abs, tag = 'smem constant byte address 0x4 - core index']
  #allocation1 [shape = 'u32[72,128]{1,0:T(1,128)}', space=vmem, size = 0x9000, scoped, tag = 'internal scratch']
  #allocation2 [shape = 'f32[1,1]{1,0:T(1,128)S(1)}', space=vmem, size = 0x200, scoped, tag = 'scoped memory for representation_forward_pallas.1']
  %s0 = inlined_call_operand.smem [shape: u32[32], index: -1, kind: input, shape index: {}]
  %s1 = sld [smem:[%s0]]
  %s2 = scalar_lea.smem %s0, 1
  %s3 = sld [smem:[%s2]]
  %s4 = scalar_lea.smem %s0, 2
  %s5 = sld [smem:[%s4]]
  %s6 = scalar_lea.smem %s0, 3
  %s7 = sld [smem:[%s6]]
  %s8 = scalar_lea.smem %s0, 4
  %s9 = sld [smem:[%s8]]
  %s10 = scalar_lea.smem %s0, 5
  %s11 = sld [smem:[%s10]]
  %s12 = scalar_lea.smem %s0, 6
  %s13 = sld [smem:[%s12]]
  %s14 = scalar_lea.smem %s0, 7
  %s15 = sld [smem:[%s14]]
  %s16 = scalar_lea.smem %s0, 8
  %s17 = sld [smem:[%s16]]
  %s18 = scalar_lea.smem %s0, 9
  %s19 = sld [smem:[%s18]]
  %s20 = scalar_lea.smem %s0, 10
  %s21 = sld [smem:[%s20]]
  %s22 = scalar_lea.smem %s0, 11
  %s23 = sld [smem:[%s22]]
  %s24 = scalar_lea.smem %s0, 12
  %s25 = sld [smem:[%s24]]
  %s26 = scalar_lea.smem %s0, 13
  %s27 = sld [smem:[%s26]]
  %s28 = scalar_lea.smem %s0, 14
  %s29 = sld [smem:[%s28]]
  %s30 = scalar_lea.smem %s0, 15
  %s31 = sld [smem:[%s30]]
  %s32 = scalar_lea.smem %s0, 16
  %s33 = sld [smem:[%s32]]
  %s34 = scalar_lea.smem %s0, 17
  %s35 = sld [smem:[%s34]]
  %s36 = scalar_lea.smem %s0, 18
  %s37 = sld [smem:[%s36]]
  %s38 = scalar_lea.smem %s0, 19
  %s39 = sld [smem:[%s38]]
  %s40 = scalar_lea.smem %s0, 20
  %s41 = sld [smem:[%s40]]
  %s42 = scalar_lea.smem %s0, 21
  %s43 = sld [smem:[%s42]]
  %s44 = scalar_lea.smem %s0, 22
  %s45 = sld [smem:[%s44]]
  %s46 = scalar_lea.smem %s0, 23
  %s47 = sld [smem:[%s46]]
  %s48 = scalar_lea.smem %s0, 24
  %s49 = sld [smem:[%s48]]
  %s50 = scalar_lea.smem %s0, 25
  %s51 = sld [smem:[%s50]]
  %s52 = scalar_lea.smem %s0, 26
  %s53 = sld [smem:[%s52]]
  %s54 = scalar_lea.smem %s0, 27
  %s55 = sld [smem:[%s54]]
  %s56 = scalar_lea.smem %s0, 28
  %s57 = sld [smem:[%s56]]
  %s58 = scalar_lea.smem %s0, 29
  %s59 = sld [smem:[%s58]]
  %s60 = scalar_lea.smem %s0, 30
  %s61 = sld [smem:[%s60]]
  %s62 = scalar_lea.smem %s0, 31
  %s63 = sld [smem:[%s62]]
  %s64 = sld [smem:[#allocation0]]
  $region134: #{representation_forward_pallas.1} parent=0
    _
  %s66 = ssub.s32 1, %s64
  %s67 = scalar_select 0, %s66, %s64
  %v68 = vstv %s61
  %69 = vst [vmem:[#allocation2] sm:$0x1] %v68
  // Predicated region
  $region2: #{representation_forward_pallas.1} parent=0 // pred_check
    _
  $region3: #{representation_forward_pallas.1} parent=0 // pred_check_branch
    %71 = sbr.rel (0) target = $region5
  $region4: #{representation_forward_pallas.1} parent=0 // pred_region
    _
  $region5: #{representation_forward_pallas.1} parent=0 // pred_fallthru
    _
  // Predicated region
  $region6: #{representation_forward_pallas.1} parent=0 // pred_check
    _
  $region7: #{representation_forward_pallas.1} parent=0 // pred_check_branch
    %73 = sbr.rel (0) target = $region9
  $region8: #{representation_forward_pallas.1} parent=0 // pred_region
    _
  $region9: #{representation_forward_pallas.1} parent=0 // pred_fallthru
    _
  // Predicated region
  $region10: #{representation_forward_pallas.1} parent=0 // pred_check
    _
  $region11: #{representation_forward_pallas.1} parent=0 // pred_check_branch
    %75 = sbr.rel (0) target = $region13
  $region12: #{representation_forward_pallas.1} parent=0 // pred_region
    _
  $region13: #{representation_forward_pallas.1} parent=0 // pred_fallthru
    _
  // Predicated region
  $region14: #{representation_forward_pallas.1} parent=0 // pred_check
    _
  $region15: #{representation_forward_pallas.1} parent=0 // pred_check_branch
    %77 = sbr.rel (0) target = $region17
  $region16: #{representation_forward_pallas.1} parent=0 // pred_region
    _
  $region17: #{representation_forward_pallas.1} parent=0 // pred_fallthru
    _
  // Predicated region
  $region18: #{representation_forward_pallas.1} parent=0 // pred_check
    _
  $region19: #{representation_forward_pallas.1} parent=0 // pred_check_branch
    %79 = sbr.rel (0) target = $region21
  $region20: #{representation_forward_pallas.1} parent=0 // pred_region
    _
  $region21: #{representation_forward_pallas.1} parent=0 // pred_fallthru
    _
  // Predicated region
  $region22: #{representation_forward_pallas.1} parent=0 // pred_check
    _
  $region23: #{representation_forward_pallas.1} parent=0 // pred_check_branch
    %81 = sbr.rel (0) target = $region25
  $region24: #{representation_forward_pallas.1} parent=0 // pred_region
    _
  $region25: #{representation_forward_pallas.1} parent=0 // pred_fallthru
    _
  // Predicated region
  $region26: #{representation_forward_pallas.1} parent=0 // pred_check
    _
  $region27: #{representation_forward_pallas.1} parent=0 // pred_check_branch
    %83 = sbr.rel (0) target = $region29
  $region28: #{representation_forward_pallas.1} parent=0 // pred_region
    _
  $region29: #{representation_forward_pallas.1} parent=0 // pred_fallthru
    _
  // Predicated region
  $region30: #{representation_forward_pallas.1} parent=0 // pred_check
    _
  $region31: #{representation_forward_pallas.1} parent=0 // pred_check_branch
    %85 = sbr.rel (0) target = $region33
  $region32: #{representation_forward_pallas.1} parent=0 // pred_region
    _
  $region33: #{representation_forward_pallas.1} parent=0 // pred_fallthru
    _
  // Predicated region
  $region34: #{representation_forward_pallas.1} parent=0 // pred_check
    _
  $region35: #{representation_forward_pallas.1} parent=0 // pred_check_branch
    %87 = sbr.rel (0) target = $region37
  $region36: #{representation_forward_pallas.1} parent=0 // pred_region
    _
  $region37: #{representation_forward_pallas.1} parent=0 // pred_fallthru
    _
  // Predicated region
  $region38: #{representation_forward_pallas.1} parent=0 // pred_check
    _
  $region39: #{representation_forward_pallas.1} parent=0 // pred_check_branch
    %89 = sbr.rel (0) target = $region41
  $region40: #{representation_forward_pallas.1} parent=0 // pred_region
    _
  $region41: #{representation_forward_pallas.1} parent=0 // pred_fallthru
    _
  // Predicated region
  $region42: #{representation_forward_pallas.1} parent=0 // pred_check
    _
  $region43: #{representation_forward_pallas.1} parent=0 // pred_check_branch
    %91 = sbr.rel (0) target = $region45
  $region44: #{representation_forward_pallas.1} parent=0 // pred_region
    _
  $region45: #{representation_forward_pallas.1} parent=0 // pred_fallthru
    _
  // Predicated region
  $region46: #{representation_forward_pallas.1} parent=0 // pred_check
    _
  $region47: #{representation_forward_pallas.1} parent=0 // pred_check_branch
    %93 = sbr.rel (0) target = $region49
  $region48: #{representation_forward_pallas.1} parent=0 // pred_region
    _
  $region49: #{representation_forward_pallas.1} parent=0 // pred_fallthru
    _
  // Predicated region
  $region50: #{representation_forward_pallas.1} parent=0 // pred_check
    _
  $region51: #{representation_forward_pallas.1} parent=0 // pred_check_branch
    %95 = sbr.rel (0) target = $region53
  $region52: #{representation_forward_pallas.1} parent=0 // pred_region
    _
  $region53: #{representation_forward_pallas.1} parent=0 // pred_fallthru
    _
  // Predicated region
  $region54: #{representation_forward_pallas.1} parent=0 // pred_check
    _
  $region55: #{representation_forward_pallas.1} parent=0 // pred_check_branch
    %97 = sbr.rel (0) target = $region57
  $region56: #{representation_forward_pallas.1} parent=0 // pred_region
    _
  $region57: #{representation_forward_pallas.1} parent=0 // pred_fallthru
    _
  // Predicated region
  $region58: #{representation_forward_pallas.1} parent=0 // pred_check
    _
  $region59: #{representation_forward_pallas.1} parent=0 // pred_check_branch
    %99 = sbr.rel (0) target = $region61
  $region60: #{representation_forward_pallas.1} parent=0 // pred_region
    _
  $region61: #{representation_forward_pallas.1} parent=0 // pred_fallthru
    _
  // Predicated region
  $region62: #{representation_forward_pallas.1} parent=0 // pred_check
    _
  $region63: #{representation_forward_pallas.1} parent=0 // pred_check_branch
    %101 = sbr.rel (0) target = $region65
  $region64: #{representation_forward_pallas.1} parent=0 // pred_region
    _
  $region65: #{representation_forward_pallas.1} parent=0 // pred_fallthru
    _
  // Predicated region
  $region66: #{representation_forward_pallas.1} parent=0 // pred_check
    _
  $region67: #{representation_forward_pallas.1} parent=0 // pred_check_branch
    %103 = sbr.rel (0) target = $region69
  $region68: #{representation_forward_pallas.1} parent=0 // pred_region
    _
  $region69: #{representation_forward_pallas.1} parent=0 // pred_fallthru
    _
  // Predicated region
  $region70: #{representation_forward_pallas.1} parent=0 // pred_check
    _
  $region71: #{representation_forward_pallas.1} parent=0 // pred_check_branch
    %105 = sbr.rel (0) target = $region73
  $region72: #{representation_forward_pallas.1} parent=0 // pred_region
    _
  $region73: #{representation_forward_pallas.1} parent=0 // pred_fallthru
    _
  // Predicated region
  $region74: #{representation_forward_pallas.1} parent=0 // pred_check
    _
  $region75: #{representation_forward_pallas.1} parent=0 // pred_check_branch
    %107 = sbr.rel (0) target = $region77
  $region76: #{representation_forward_pallas.1} parent=0 // pred_region
    _
  $region77: #{representation_forward_pallas.1} parent=0 // pred_fallthru
    _
  // Predicated region
  $region78: #{representation_forward_pallas.1} parent=0 // pred_check
    _
  $region79: #{representation_forward_pallas.1} parent=0 // pred_check_branch
    %109 = sbr.rel (0) target = $region81
  $region80: #{representation_forward_pallas.1} parent=0 // pred_region
    _
  $region81: #{representation_forward_pallas.1} parent=0 // pred_fallthru
    _
  // Predicated region
  $region82: #{representation_forward_pallas.1} parent=0 // pred_check
    _
  $region83: #{representation_forward_pallas.1} parent=0 // pred_check_branch
    %111 = sbr.rel (0) target = $region85
  $region84: #{representation_forward_pallas.1} parent=0 // pred_region
    _
  $region85: #{representation_forward_pallas.1} parent=0 // pred_fallthru
    _
  // Predicated region
  $region86: #{representation_forward_pallas.1} parent=0 // pred_check
    _
  $region87: #{representation_forward_pallas.1} parent=0 // pred_check_branch
    %113 = sbr.rel (0) target = $region89
  $region88: #{representation_forward_pallas.1} parent=0 // pred_region
    _
  $region89: #{representation_forward_pallas.1} parent=0 // pred_fallthru
    _
  // Predicated region
  $region90: #{representation_forward_pallas.1} parent=0 // pred_check
    _
  $region91: #{representation_forward_pallas.1} parent=0 // pred_check_branch
    %115 = sbr.rel (0) target = $region93
  $region92: #{representation_forward_pallas.1} parent=0 // pred_region
    _
  $region93: #{representation_forward_pallas.1} parent=0 // pred_fallthru
    _
  // Predicated region
  $region94: #{representation_forward_pallas.1} parent=0 // pred_check
    _
  $region95: #{representation_forward_pallas.1} parent=0 // pred_check_branch
    %117 = sbr.rel (0) target = $region97
  $region96: #{representation_forward_pallas.1} parent=0 // pred_region
    _
  $region97: #{representation_forward_pallas.1} parent=0 // pred_fallthru
    _
  // Predicated region
  $region98: #{representation_forward_pallas.1} parent=0 // pred_check
    _
  $region99: #{representation_forward_pallas.1} parent=0 // pred_check_branch
    %119 = sbr.rel (0) target = $region101
  $region100: #{representation_forward_pallas.1} parent=0 // pred_region
    _
  $region101: #{representation_forward_pallas.1} parent=0 // pred_fallthru
    _
  // Predicated region
  $region102: #{representation_forward_pallas.1} parent=0 // pred_check
    _
  $region103: #{representation_forward_pallas.1} parent=0 // pred_check_branch
    %121 = sbr.rel (0) target = $region105
  $region104: #{representation_forward_pallas.1} parent=0 // pred_region
    _
  $region105: #{representation_forward_pallas.1} parent=0 // pred_fallthru
    _
  // Predicated region
  $region106: #{representation_forward_pallas.1} parent=0 // pred_check
    _
  $region107: #{representation_forward_pallas.1} parent=0 // pred_check_branch
    %123 = sbr.rel (0) target = $region109
  $region108: #{representation_forward_pallas.1} parent=0 // pred_region
    _
  $region109: #{representation_forward_pallas.1} parent=0 // pred_fallthru
    _
  // Predicated region
  $region110: #{representation_forward_pallas.1} parent=0 // pred_check
    _
  $region111: #{representation_forward_pallas.1} parent=0 // pred_check_branch
    %125 = sbr.rel (0) target = $region113
  $region112: #{representation_forward_pallas.1} parent=0 // pred_region
    _
  $region113: #{representation_forward_pallas.1} parent=0 // pred_fallthru
    _
  // Predicated region
  $region114: #{representation_forward_pallas.1} parent=0 // pred_check
    _
  $region115: #{representation_forward_pallas.1} parent=0 // pred_check_branch
    %127 = sbr.rel (0) target = $region117
  $region116: #{representation_forward_pallas.1} parent=0 // pred_region
    _
  $region117: #{representation_forward_pallas.1} parent=0 // pred_fallthru
    _
  // Predicated region
  $region118: #{representation_forward_pallas.1} parent=0 // pred_check
    _
  $region119: #{representation_forward_pallas.1} parent=0 // pred_check_branch
    %129 = sbr.rel (0) target = $region121
  $region120: #{representation_forward_pallas.1} parent=0 // pred_region
    _
  $region121: #{representation_forward_pallas.1} parent=0 // pred_fallthru
    _
  // Predicated region
  $region122: #{representation_forward_pallas.1} parent=0 // pred_check
    _
  $region123: #{representation_forward_pallas.1} parent=0 // pred_check_branch
    %131 = sbr.rel (0) target = $region125
  $region124: #{representation_forward_pallas.1} parent=0 // pred_region
    _
  $region125: #{representation_forward_pallas.1} parent=0 // pred_fallthru
    _
  %v133 = vld [vmem:[%s1] sm:$0xff]
  %v134 = vld [vmem:[%s1 + $0x8] sm:$0xff]
  %v135 = vld [vmem:[%s1 + $0x10] sm:$0xff]
  %v136 = vld [vmem:[%s1 + $0x18] sm:$0xff]
  %v137 = vld [vmem:[%s1 + $0x20] sm:$0xff]
  %v138 = vld [vmem:[%s1 + $0x28] sm:$0xff]
  %v139 = vld [vmem:[%s1 + $0x30] sm:$0xff]
  %v140 = vld [vmem:[%s1 + $0x38] sm:$0xff]
  %v141 = vld [vmem:[%s1 + $0x40] sm:$0xff]
  %v142 = vld [vmem:[%s1 + $0x48] sm:$0xff]
  %v143 = vld [vmem:[%s1 + $0x50] sm:$0xff]
  %v144 = vld [vmem:[%s1 + $0x58] sm:$0xff]
  %v145 = vld [vmem:[%s1 + $0x60] sm:$0xff]
  %v146 = vld [vmem:[%s1 + $0x68] sm:$0xff]
  %v147 = vld [vmem:[%s1 + $0x70] sm:$0xff]
  %v148 = vld [vmem:[%s1 + $0x78] sm:$0xff]
  %v149 = vld [vmem:[%s1 + $0x80] sm:$0xff]
  %v150 = vld [vmem:[%s1 + $0x88] sm:$0xff]
  %v151 = vld [vmem:[%s1 + $0x90] sm:$0xff]
  %v152 = vld [vmem:[%s1 + $0x98] sm:$0xff]
  %v153 = vld [vmem:[%s1 + $0xa0] sm:$0xff]
  %v154 = vld [vmem:[%s1 + $0xa8] sm:$0xff]
  %v155 = vld [vmem:[%s1 + $0xb0] sm:$0xff]
  %v156 = vld [vmem:[%s1 + $0xb8] sm:$0xff]
  %v157 = vld [vmem:[%s3] sm:$0xff]
  %v158 = vld [vmem:[%s3 + $0x8] sm:$0x1f]
  %v159 = vld [vmem:[%s7] sm:$0x1]
  %v161 = vperm.slane %v159, 0
  %vm163 = vcmask 105472
  %v165 = vsel %vm163, %v133, 0
  %v168 = vsel %vm163, %v134, 0
  %v171 = vsel %vm163, %v135, 0
  %v174 = vsel %vm163, %v136, 0
  %v177 = vsel %vm163, %v137, 0
  %v180 = vsel %vm163, %v138, 0
  %v183 = vsel %vm163, %v139, 0
  %v186 = vsel %vm163, %v140, 0
  %v189 = vsel %vm163, %v141, 0
  %v192 = vsel %vm163, %v142, 0
  %v195 = vsel %vm163, %v143, 0
  %v198 = vsel %vm163, %v144, 0
  %v201 = vsel %vm163, %v145, 0
  %v204 = vsel %vm163, %v146, 0
  %v207 = vsel %vm163, %v147, 0
  %v210 = vsel %vm163, %v148, 0
  %v213 = vsel %vm163, %v149, 0
  %v216 = vsel %vm163, %v150, 0
  %v219 = vsel %vm163, %v151, 0
  %v222 = vsel %vm163, %v152, 0
  %v225 = vsel %vm163, %v153, 0
  %v228 = vsel %vm163, %v154, 0
  %v231 = vsel %vm163, %v155, 0
  %v234 = vsel %vm163, %v156, 0
  %vm236 = vcmask 1044480
  %v238 = vsel %vm236, %v158, 0
  %240 = vmatpush.msra.mxu0 0.0
  %241 = vmatpush.msra.mxu0 0.0
  %242 = vmatpush.msra.mxu0 0.0
  %243 = vmatpush.msra.mxu0 0.0
  %244 = vmatpush.msra.mxu0 0.0
  %245 = vmatpush.msra.mxu0 0.0
  %246 = vmatpush.msra.mxu0 0.0
  %247 = vmatpush.msra.mxu0 0.0
  %248 = vmatpush.msra.mxu0 0.0
  %249 = vmatpush.msra.mxu0 0.0
  %250 = vmatpush.msra.mxu0 0.0
  %251 = vmatpush.msra.mxu0 0.0
  %252 = vmatpush.msra.mxu0 0.0
  %253 = vmatpush.msra.mxu0 0.0
  %254 = vmatpush.msra.mxu0 %v238
  %255 = vmatpush.msra.mxu0 %v157
  %256 = vmatmul.f32.gmra.mxu0 %v165
  %v257 = vpop.f32.mrf.mxu0
  %v258 = vadd.f32 %v161, %v257
  %259 = vmatmul.f32.gmra.mxu0 %v168
  %v260 = vpop.f32.mrf.mxu0
  %v261 = vadd.f32 %v161, %v260
  %262 = vmatmul.f32.gmra.mxu0 %v171
  %v263 = vpop.f32.mrf.mxu0
  %v264 = vadd.f32 %v161, %v263
  %265 = vmatmul.f32.gmra.mxu0 %v174
  %v266 = vpop.f32.mrf.mxu0
  %v267 = vadd.f32 %v161, %v266
  %268 = vmatmul.f32.gmra.mxu0 %v177
  %v269 = vpop.f32.mrf.mxu0
  %v270 = vadd.f32 %v161, %v269
  %271 = vmatmul.f32.gmra.mxu0 %v180
  %v272 = vpop.f32.mrf.mxu0
  %v273 = vadd.f32 %v161, %v272
  %274 = vmatmul.f32.gmra.mxu0 %v183
  %v275 = vpop.f32.mrf.mxu0
  %v276 = vadd.f32 %v161, %v275
  %277 = vmatmul.f32.gmra.mxu0 %v186
  %v278 = vpop.f32.mrf.mxu0
  %v279 = vadd.f32 %v161, %v278
  %280 = vmatmul.f32.gmra.mxu0 %v189
  %v281 = vpop.f32.mrf.mxu0
  %v282 = vadd.f32 %v161, %v281
  %283 = vmatmul.f32.gmra.mxu0 %v192
  %v284 = vpop.f32.mrf.mxu0
  %v285 = vadd.f32 %v161, %v284
  %286 = vmatmul.f32.gmra.mxu0 %v195
  %v287 = vpop.f32.mrf.mxu0
  %v288 = vadd.f32 %v161, %v287
  %289 = vmatmul.f32.gmra.mxu0 %v198
  %v290 = vpop.f32.mrf.mxu0
  %v291 = vadd.f32 %v161, %v290
  %292 = vmatmul.f32.gmra.mxu0 %v201
  %v293 = vpop.f32.mrf.mxu0
  %v294 = vadd.f32 %v161, %v293
  %295 = vmatmul.f32.gmra.mxu0 %v204
  %v296 = vpop.f32.mrf.mxu0
  %v297 = vadd.f32 %v161, %v296
  %298 = vmatmul.f32.gmra.mxu0 %v207
  %v299 = vpop.f32.mrf.mxu0
  %v300 = vadd.f32 %v161, %v299
  %301 = vmatmul.f32.gmra.mxu0 %v210
  %v302 = vpop.f32.mrf.mxu0
  %v303 = vadd.f32 %v161, %v302
  %304 = vmatmul.f32.gmra.mxu0 %v213
  %v305 = vpop.f32.mrf.mxu0
  %v306 = vadd.f32 %v161, %v305
  %307 = vmatmul.f32.gmra.mxu0 %v216
  %v308 = vpop.f32.mrf.mxu0
  %v309 = vadd.f32 %v161, %v308
  %310 = vmatmul.f32.gmra.mxu0 %v219
  %v311 = vpop.f32.mrf.mxu0
  %v312 = vadd.f32 %v161, %v311
  %313 = vmatmul.f32.gmra.mxu0 %v222
  %v314 = vpop.f32.mrf.mxu0
  %v315 = vadd.f32 %v161, %v314
  %316 = vmatmul.f32.gmra.mxu0 %v225
  %v317 = vpop.f32.mrf.mxu0
  %v318 = vadd.f32 %v161, %v317
  %319 = vmatmul.f32.gmra.mxu0 %v228
  %v320 = vpop.f32.mrf.mxu0
  %v321 = vadd.f32 %v161, %v320
  %322 = vmatmul.f32.gmra.mxu0 %v231
  %v323 = vpop.f32.mrf.mxu0
  %v324 = vadd.f32 %v161, %v323
  %325 = vmatmul.f32.gmra.mxu0 %v234
  %v326 = vpop.f32.mrf.mxu0
  %v327 = vadd.f32 %v161, %v326
  %328 = vdwg.mxu0
  %v329 = vld [vmem:[%s5] sm:$0xff]
  %v330 = vld [vmem:[%s5 + $0x8] sm:$0xff]
  %v331 = vld [vmem:[%s5 + $0x10] sm:$0xff]
  %v332 = vld [vmem:[%s5 + $0x18] sm:$0xff]
  %v333 = vxor.u32 %v258, 2147483648
  %v334 = vxor.u32 %v261, 2147483648
  %v335 = vxor.u32 %v264, 2147483648
  %v336 = vxor.u32 %v267, 2147483648
  %v337 = vxor.u32 %v270, 2147483648
  %v338 = vxor.u32 %v273, 2147483648
  %v339 = vmul.f32 %v333, 1.442695
  %v340 = vpow.pop %v339
  %v341 = vmul.f32 %v334, 1.442695
  %v342 = vpow.pop %v341
  %v343 = vmul.f32 %v335, 1.442695
  %v344 = vpow.pop %v343
  %v345 = vmul.f32 %v336, 1.442695
  %v346 = vpow.pop %v345
  %v347 = vmul.f32 %v337, 1.442695
  %v348 = vpow.pop %v347
  %v349 = vmul.f32 %v338, 1.442695
  %v350 = vpow.pop %v349
  %v351 = vadd.f32 %v340, 1.0
  %v352 = vadd.f32 %v342, 1.0
  %v353 = vadd.f32 %v344, 1.0
  %v354 = vadd.f32 %v346, 1.0
  %v355 = vadd.f32 %v348, 1.0
  %v356 = vadd.f32 %v350, 1.0
  %v357 = vrcp.pop %v351
  %v358 = vmul.f32 %v351, %v357
  %v359 = vsub.f32 1.0, %v358
  %v360 = vmul.f32 %v357, %v359
  %v361 = vadd.f32 %v357, %v360
  %vm362 = vweird.f32 %v351
  %vm363 = vweird.f32 %v357
  %vm364 = vmor %vm362, %vm363
  %v365 = vsel %vm364, %v357, %v361
  %v366 = vand.u32 2147483647, %v351
  %vm367 = vcmp.eq.f32.partialorder %v366, 8.507059e+37
  %v368 = vand.u32 %v351, 2147483648
  %v369 = vor.u32 1.1754944e-38, %v368
  %v370 = vsel %vm367, %v369, %v365
  %v371 = vmul.f32 1.0, %v370
  %v372 = vrcp.pop %v352
  %v373 = vmul.f32 %v352, %v372
  %v374 = vsub.f32 1.0, %v373
  %v375 = vmul.f32 %v372, %v374
  %v376 = vadd.f32 %v372, %v375
  %vm377 = vweird.f32 %v352
  %vm378 = vweird.f32 %v372
  %vm379 = vmor %vm377, %vm378
  %v380 = vsel %vm379, %v372, %v376
  %v381 = vand.u32 2147483647, %v352
  %vm382 = vcmp.eq.f32.partialorder %v381, 8.507059e+37
  %v383 = vand.u32 %v352, 2147483648
  %v384 = vor.u32 1.1754944e-38, %v383
  %v385 = vsel %vm382, %v384, %v380
  %v386 = vmul.f32 1.0, %v385
  %v387 = vrcp.pop %v353
  %v388 = vmul.f32 %v353, %v387
  %v389 = vsub.f32 1.0, %v388
  %v390 = vmul.f32 %v387, %v389
  %v391 = vadd.f32 %v387, %v390
  %vm392 = vweird.f32 %v353
  %vm393 = vweird.f32 %v387
  %vm394 = vmor %vm392, %vm393
  %v395 = vsel %vm394, %v387, %v391
  %v396 = vand.u32 2147483647, %v353
  %vm397 = vcmp.eq.f32.partialorder %v396, 8.507059e+37
  %v398 = vand.u32 %v353, 2147483648
  %v399 = vor.u32 1.1754944e-38, %v398
  %v400 = vsel %vm397, %v399, %v395
  %v401 = vmul.f32 1.0, %v400
  %v402 = vrcp.pop %v354
  %v403 = vmul.f32 %v354, %v402
  %v404 = vsub.f32 1.0, %v403
  %v405 = vmul.f32 %v402, %v404
  %v406 = vadd.f32 %v402, %v405
  %vm407 = vweird.f32 %v354
  %vm408 = vweird.f32 %v402
  %vm409 = vmor %vm407, %vm408
  %v410 = vsel %vm409, %v402, %v406
  %v411 = vand.u32 2147483647, %v354
  %vm412 = vcmp.eq.f32.partialorder %v411, 8.507059e+37
  %v413 = vand.u32 %v354, 2147483648
  %v414 = vor.u32 1.1754944e-38, %v413
  %v415 = vsel %vm412, %v414, %v410
  %v416 = vmul.f32 1.0, %v415
  %v417 = vrcp.pop %v355
  %v418 = vmul.f32 %v355, %v417
  %v419 = vsub.f32 1.0, %v418
  %v420 = vmul.f32 %v417, %v419
  %v421 = vadd.f32 %v417, %v420
  %vm422 = vweird.f32 %v355
  %vm423 = vweird.f32 %v417
  %vm424 = vmor %vm422, %vm423
  %v425 = vsel %vm424, %v417, %v421
  %v426 = vand.u32 2147483647, %v355
  %vm427 = vcmp.eq.f32.partialorder %v426, 8.507059e+37
  %v428 = vand.u32 %v355, 2147483648
  %v429 = vor.u32 1.1754944e-38, %v428
  %v430 = vsel %vm427, %v429, %v425
  %v431 = vmul.f32 1.0, %v430
  %v432 = vrcp.pop %v356
  %v433 = vmul.f32 %v356, %v432
  %v434 = vsub.f32 1.0, %v433
  %v435 = vmul.f32 %v432, %v434
  %v436 = vadd.f32 %v432, %v435
  %vm437 = vweird.f32 %v356
  %vm438 = vweird.f32 %v432
  %vm439 = vmor %vm437, %vm438
  %v440 = vsel %vm439, %v432, %v436
  %v441 = vand.u32 2147483647, %v356
  %vm442 = vcmp.eq.f32.partialorder %v441, 8.507059e+37
  %v443 = vand.u32 %v356, 2147483648
  %v444 = vor.u32 1.1754944e-38, %v443
  %v445 = vsel %vm442, %v444, %v440
  %v446 = vmul.f32 1.0, %v445
  %v447 = vtanh.pop %v258
  %v448 = vtanh.pop %v261
  %v449 = vtanh.pop %v264
  %v450 = vtanh.pop %v267
  %v451 = vtanh.pop %v270
  %v452 = vtanh.pop %v273
  %v453 = vmul.f32 %v371, 0.0
  %v454 = vmul.f32 %v386, 0.0
  %v455 = vmul.f32 %v401, 0.0
  %v456 = vmul.f32 %v416, 0.0
  %v457 = vmul.f32 %v431, 0.0
  %v458 = vmul.f32 %v446, 0.0
  %465 = vrot.lane.b32.xlu0 %v447, 64
  %v466 = vpop.permute.xlu0 %465
  %467 = vrot.lane.b32.xlu0 %v448, 64
  %v468 = vpop.permute.xlu0 %467
  %469 = vrot.lane.b32.xlu0 %v449, 64
  %v470 = vpop.permute.xlu0 %469
  %471 = vrot.lane.b32.xlu0 %v450, 64
  %v472 = vpop.permute.xlu0 %471
  %473 = vrot.lane.b32.xlu0 %v451, 64
  %v474 = vpop.permute.xlu0 %473
  %475 = vrot.lane.b32.xlu0 %v452, 64
  %v476 = vpop.permute.xlu0 %475
  %v483 = vmul.f32 %v371, %v466
  %v484 = vmul.f32 %v386, %v468
  %v485 = vmul.f32 %v401, %v470
  %v486 = vmul.f32 %v416, %v472
  %v487 = vmul.f32 %v431, %v474
  %v488 = vmul.f32 %v446, %v476
  %495 = vrot.lane.b32.xlu0 %v483, 32
  %v496 = vpop.permute.xlu0 %495
  %497 = vrot.lane.b32.xlu0 %v484, 32
  %v498 = vpop.permute.xlu0 %497
  %499 = vrot.lane.b32.xlu0 %v485, 32
  %v500 = vpop.permute.xlu0 %499
  %501 = vrot.lane.b32.xlu0 %v486, 32
  %v502 = vpop.permute.xlu0 %501
  %503 = vrot.lane.b32.xlu0 %v487, 32
  %v504 = vpop.permute.xlu0 %503
  %505 = vrot.lane.b32.xlu0 %v488, 32
  %v506 = vpop.permute.xlu0 %505
  %v513 = vadd.f32 %v453, %v496
  %v514 = vadd.f32 %v454, %v498
  %v515 = vadd.f32 %v455, %v500
  %v516 = vadd.f32 %v456, %v502
  %v517 = vadd.f32 %v457, %v504
  %v518 = vadd.f32 %v458, %v506
  %v519 = vtanh.pop %v513
  %v520 = vtanh.pop %v514
  %v521 = vtanh.pop %v515
  %v522 = vtanh.pop %v516
  %v523 = vtanh.pop %v517
  %v524 = vtanh.pop %v518
  %531 = vrot.lane.b32.xlu0 %v519, 64
  %v532 = vpop.permute.xlu0 %531
  %533 = vrot.lane.b32.xlu0 %v520, 64
  %v534 = vpop.permute.xlu0 %533
  %535 = vrot.lane.b32.xlu0 %v521, 64
  %v536 = vpop.permute.xlu0 %535
  %537 = vrot.lane.b32.xlu0 %v522, 64
  %v538 = vpop.permute.xlu0 %537
  %539 = vrot.lane.b32.xlu0 %v523, 64
  %v540 = vpop.permute.xlu0 %539
  %541 = vrot.lane.b32.xlu0 %v524, 64
  %v542 = vpop.permute.xlu0 %541
  %v549 = vmul.f32 %v371, %v532
  %v550 = vmul.f32 %v386, %v534
  %v551 = vmul.f32 %v401, %v536
  %v552 = vmul.f32 %v416, %v538
  %v553 = vmul.f32 %v431, %v540
  %v554 = vmul.f32 %v446, %v542
  %561 = vrot.lane.b32.xlu0 %v549, 32
  %v562 = vpop.permute.xlu0 %561
  %563 = vrot.lane.b32.xlu0 %v550, 32
  %v564 = vpop.permute.xlu0 %563
  %565 = vrot.lane.b32.xlu0 %v551, 32
  %v566 = vpop.permute.xlu0 %565
  %567 = vrot.lane.b32.xlu0 %v552, 32
  %v568 = vpop.permute.xlu0 %567
  %569 = vrot.lane.b32.xlu0 %v553, 32
  %v570 = vpop.permute.xlu0 %569
  %571 = vrot.lane.b32.xlu0 %v554, 32
  %v572 = vpop.permute.xlu0 %571
  %vm573 = vcmask 261120
  %v574 = vsel %vm573, %v562, 0
  %v576 = vsel %vm573, %v564, 0
  %v578 = vsel %vm573, %v566, 0
  %v580 = vsel %vm573, %v568, 0
  %v582 = vsel %vm573, %v570, 0
  %v584 = vsel %vm573, %v572, 0
  %586 = vmatpush.msra.mxu0 0.0
  %587 = vmatpush.msra.mxu0 0.0
  %588 = vmatpush.msra.mxu0 0.0
  %589 = vmatpush.msra.mxu0 0.0
  %590 = vmatpush.msra.mxu0 0.0
  %591 = vmatpush.msra.mxu0 0.0
  %592 = vmatpush.msra.mxu0 0.0
  %593 = vmatpush.msra.mxu0 0.0
  %594 = vmatpush.msra.mxu0 0.0
  %595 = vmatpush.msra.mxu0 0.0
  %596 = vmatpush.msra.mxu0 0.0
  %597 = vmatpush.msra.mxu0 0.0
  %598 = vmatpush.msra.mxu0 %v332
  %599 = vmatpush.msra.mxu0 %v331
  %600 = vmatpush.msra.mxu0 %v330
  %601 = vmatpush.msra.mxu0 %v329
  %602 = vmatmul.f32.gmra.mxu0 %v574
  %v603 = vpop.f32.mrf.mxu0
  %v604 = vadd.f32 0.0, %v603
  %605 = vmatmul.f32.gmra.mxu0 %v576
  %v606 = vpop.f32.mrf.mxu0
  %v607 = vadd.f32 0.0, %v606
  %608 = vmatmul.f32.gmra.mxu0 %v578
  %v609 = vpop.f32.mrf.mxu0
  %v610 = vadd.f32 0.0, %v609
  %611 = vmatmul.f32.gmra.mxu0 %v580
  %v612 = vpop.f32.mrf.mxu0
  %v613 = vadd.f32 0.0, %v612
  %614 = vmatmul.f32.gmra.mxu0 %v582
  %v615 = vpop.f32.mrf.mxu0
  %v616 = vadd.f32 0.0, %v615
  %617 = vmatmul.f32.gmra.mxu0 %v584
  %v618 = vpop.f32.mrf.mxu0
  %v619 = vadd.f32 0.0, %v618
  %620 = vdwg.mxu0
  %v621 = vadd.f32 %v276, %v604
  %v622 = vadd.f32 %v279, %v607
  %v623 = vadd.f32 %v282, %v610
  %v624 = vadd.f32 %v285, %v613
  %v625 = vadd.f32 %v288, %v616
  %v626 = vadd.f32 %v291, %v619
  %v627 = vxor.u32 %v621, 2147483648
  %v628 = vxor.u32 %v622, 2147483648
  %v629 = vxor.u32 %v623, 2147483648
  %v630 = vxor.u32 %v624, 2147483648
  %v631 = vxor.u32 %v625, 2147483648
  %v632 = vxor.u32 %v626, 2147483648
  %v633 = vmul.f32 %v627, 1.442695
  %v634 = vpow.pop %v633
  %v635 = vmul.f32 %v628, 1.442695
  %v636 = vpow.pop %v635
  %v637 = vmul.f32 %v629, 1.442695
  %v638 = vpow.pop %v637
  %v639 = vmul.f32 %v630, 1.442695
  %v640 = vpow.pop %v639
  %v641 = vmul.f32 %v631, 1.442695
  %v642 = vpow.pop %v641
  %v643 = vmul.f32 %v632, 1.442695
  %v644 = vpow.pop %v643
  %v645 = vadd.f32 %v634, 1.0
  %v646 = vadd.f32 %v636, 1.0
  %v647 = vadd.f32 %v638, 1.0
  %v648 = vadd.f32 %v640, 1.0
  %v649 = vadd.f32 %v642, 1.0
  %v650 = vadd.f32 %v644, 1.0
  %v651 = vrcp.pop %v645
  %v652 = vmul.f32 %v645, %v651
  %v653 = vsub.f32 1.0, %v652
  %v654 = vmul.f32 %v651, %v653
  %v655 = vadd.f32 %v651, %v654
  %vm656 = vweird.f32 %v645
  %vm657 = vweird.f32 %v651
  %vm658 = vmor %vm656, %vm657
  %v659 = vsel %vm658, %v651, %v655
  %v660 = vand.u32 2147483647, %v645
  %vm661 = vcmp.eq.f32.partialorder %v660, 8.507059e+37
  %v662 = vand.u32 %v645, 2147483648
  %v663 = vor.u32 1.1754944e-38, %v662
  %v664 = vsel %vm661, %v663, %v659
  %v665 = vmul.f32 1.0, %v664
  %v666 = vrcp.pop %v646
  %v667 = vmul.f32 %v646, %v666
  %v668 = vsub.f32 1.0, %v667
  %v669 = vmul.f32 %v666, %v668
  %v670 = vadd.f32 %v666, %v669
  %vm671 = vweird.f32 %v646
  %vm672 = vweird.f32 %v666
  %vm673 = vmor %vm671, %vm672
  %v674 = vsel %vm673, %v666, %v670
  %v675 = vand.u32 2147483647, %v646
  %vm676 = vcmp.eq.f32.partialorder %v675, 8.507059e+37
  %v677 = vand.u32 %v646, 2147483648
  %v678 = vor.u32 1.1754944e-38, %v677
  %v679 = vsel %vm676, %v678, %v674
  %v680 = vmul.f32 1.0, %v679
  %v681 = vrcp.pop %v647
  %v682 = vmul.f32 %v647, %v681
  %v683 = vsub.f32 1.0, %v682
  %v684 = vmul.f32 %v681, %v683
  %v685 = vadd.f32 %v681, %v684
  %vm686 = vweird.f32 %v647
  %vm687 = vweird.f32 %v681
  %vm688 = vmor %vm686, %vm687
  %v689 = vsel %vm688, %v681, %v685
  %v690 = vand.u32 2147483647, %v647
  %vm691 = vcmp.eq.f32.partialorder %v690, 8.507059e+37
  %v692 = vand.u32 %v647, 2147483648
  %v693 = vor.u32 1.1754944e-38, %v692
  %v694 = vsel %vm691, %v693, %v689
  %v695 = vmul.f32 1.0, %v694
  %v696 = vrcp.pop %v648
  %v697 = vmul.f32 %v648, %v696
  %v698 = vsub.f32 1.0, %v697
  %v699 = vmul.f32 %v696, %v698
  %v700 = vadd.f32 %v696, %v699
  %vm701 = vweird.f32 %v648
  %vm702 = vweird.f32 %v696
  %vm703 = vmor %vm701, %vm702
  %v704 = vsel %vm703, %v696, %v700
  %v705 = vand.u32 2147483647, %v648
  %vm706 = vcmp.eq.f32.partialorder %v705, 8.507059e+37
  %v707 = vand.u32 %v648, 2147483648
  %v708 = vor.u32 1.1754944e-38, %v707
  %v709 = vsel %vm706, %v708, %v704
  %v710 = vmul.f32 1.0, %v709
  %v711 = vrcp.pop %v649
  %v712 = vmul.f32 %v649, %v711
  %v713 = vsub.f32 1.0, %v712
  %v714 = vmul.f32 %v711, %v713
  %v715 = vadd.f32 %v711, %v714
  %vm716 = vweird.f32 %v649
  %vm717 = vweird.f32 %v711
  %vm718 = vmor %vm716, %vm717
  %v719 = vsel %vm718, %v711, %v715
  %v720 = vand.u32 2147483647, %v649
  %vm721 = vcmp.eq.f32.partialorder %v720, 8.507059e+37
  %v722 = vand.u32 %v649, 2147483648
  %v723 = vor.u32 1.1754944e-38, %v722
  %v724 = vsel %vm721, %v723, %v719
  %v725 = vmul.f32 1.0, %v724
  %v726 = vrcp.pop %v650
  %v727 = vmul.f32 %v650, %v726
  %v728 = vsub.f32 1.0, %v727
  %v729 = vmul.f32 %v726, %v728
  %v730 = vadd.f32 %v726, %v729
  %vm731 = vweird.f32 %v650
  %vm732 = vweird.f32 %v726
  %vm733 = vmor %vm731, %vm732
  %v734 = vsel %vm733, %v726, %v730
  %v735 = vand.u32 2147483647, %v650
  %vm736 = vcmp.eq.f32.partialorder %v735, 8.507059e+37
  %v737 = vand.u32 %v650, 2147483648
  %v738 = vor.u32 1.1754944e-38, %v737
  %v739 = vsel %vm736, %v738, %v734
  %v740 = vmul.f32 1.0, %v739
  %v741 = vtanh.pop %v621
  %v742 = vtanh.pop %v622
  %v743 = vtanh.pop %v623
  %v744 = vtanh.pop %v624
  %v745 = vtanh.pop %v625
  %v746 = vtanh.pop %v626
  %v747 = vmul.f32 %v665, %v513
  %v748 = vmul.f32 %v680, %v514
  %v749 = vmul.f32 %v695, %v515
  %v750 = vmul.f32 %v710, %v516
  %v751 = vmul.f32 %v725, %v517
  %v752 = vmul.f32 %v740, %v518
  %759 = vrot.lane.b32.xlu0 %v741, 64
  %v760 = vpop.permute.xlu0 %759
  %761 = vrot.lane.b32.xlu0 %v742, 64
  %v762 = vpop.permute.xlu0 %761
  %763 = vrot.lane.b32.xlu0 %v743, 64
  %v764 = vpop.permute.xlu0 %763
  %765 = vrot.lane.b32.xlu0 %v744, 64
  %v766 = vpop.permute.xlu0 %765
  %767 = vrot.lane.b32.xlu0 %v745, 64
  %v768 = vpop.permute.xlu0 %767
  %769 = vrot.lane.b32.xlu0 %v746, 64
  %v770 = vpop.permute.xlu0 %769
  %v777 = vmul.f32 %v665, %v760
  %v778 = vmul.f32 %v680, %v762
  %v779 = vmul.f32 %v695, %v764
  %v780 = vmul.f32 %v710, %v766
  %v781 = vmul.f32 %v725, %v768
  %v782 = vmul.f32 %v740, %v770
  %789 = vrot.lane.b32.xlu0 %v777, 32
  %v790 = vpop.permute.xlu0 %789
  %791 = vrot.lane.b32.xlu0 %v778, 32
  %v792 = vpop.permute.xlu0 %791
  %793 = vrot.lane.b32.xlu0 %v779, 32
  %v794 = vpop.permute.xlu0 %793
  %795 = vrot.lane.b32.xlu0 %v780, 32
  %v796 = vpop.permute.xlu0 %795
  %797 = vrot.lane.b32.xlu0 %v781, 32
  %v798 = vpop.permute.xlu0 %797
  %799 = vrot.lane.b32.xlu0 %v782, 32
  %v800 = vpop.permute.xlu0 %799
  %v807 = vadd.f32 %v747, %v790
  %v808 = vadd.f32 %v748, %v792
  %v809 = vadd.f32 %v749, %v794
  %v810 = vadd.f32 %v750, %v796
  %v811 = vadd.f32 %v751, %v798
  %v812 = vadd.f32 %v752, %v800
  %v813 = vtanh.pop %v807
  %v814 = vtanh.pop %v808
  %v815 = vtanh.pop %v809
  %v816 = vtanh.pop %v810
  %v817 = vtanh.pop %v811
  %v818 = vtanh.pop %v812
  %825 = vrot.lane.b32.xlu0 %v813, 64
  %v826 = vpop.permute.xlu0 %825
  %827 = vrot.lane.b32.xlu0 %v814, 64
  %v828 = vpop.permute.xlu0 %827
  %829 = vrot.lane.b32.xlu0 %v815, 64
  %v830 = vpop.permute.xlu0 %829
  %831 = vrot.lane.b32.xlu0 %v816, 64
  %v832 = vpop.permute.xlu0 %831
  %833 = vrot.lane.b32.xlu0 %v817, 64
  %v834 = vpop.permute.xlu0 %833
  %835 = vrot.lane.b32.xlu0 %v818, 64
  %v836 = vpop.permute.xlu0 %835
  %v843 = vmul.f32 %v665, %v826
  %v844 = vmul.f32 %v680, %v828
  %v845 = vmul.f32 %v695, %v830
  %v846 = vmul.f32 %v710, %v832
  %v847 = vmul.f32 %v725, %v834
  %v848 = vmul.f32 %v740, %v836
  %855 = vrot.lane.b32.xlu0 %v843, 32
  %v856 = vpop.permute.xlu0 %855
  %857 = vrot.lane.b32.xlu0 %v844, 32
  %v858 = vpop.permute.xlu0 %857
  %859 = vrot.lane.b32.xlu0 %v845, 32
  %v860 = vpop.permute.xlu0 %859
  %861 = vrot.lane.b32.xlu0 %v846, 32
  %v862 = vpop.permute.xlu0 %861
  %863 = vrot.lane.b32.xlu0 %v847, 32
  %v864 = vpop.permute.xlu0 %863
  %865 = vrot.lane.b32.xlu0 %v848, 32
  %v866 = vpop.permute.xlu0 %865
  %v867 = vsel %vm573, %v856, 0
  %v869 = vsel %vm573, %v858, 0
  %v871 = vsel %vm573, %v860, 0
  %v873 = vsel %vm573, %v862, 0
  %v875 = vsel %vm573, %v864, 0
  %v877 = vsel %vm573, %v866, 0
  %879 = vmatpush.msra.mxu0 0.0
  %880 = vmatpush.msra.mxu0 0.0
  %881 = vmatpush.msra.mxu0 0.0
  %882 = vmatpush.msra.mxu0 0.0
  %883 = vmatpush.msra.mxu0 0.0
  %884 = vmatpush.msra.mxu0 0.0
  %885 = vmatpush.msra.mxu0 0.0
  %886 = vmatpush.msra.mxu0 0.0
  %887 = vmatpush.msra.mxu0 0.0
  %888 = vmatpush.msra.mxu0 0.0
  %889 = vmatpush.msra.mxu0 0.0
  %890 = vmatpush.msra.mxu0 0.0
  %891 = vmatpush.msra.mxu0 %v332
  %892 = vmatpush.msra.mxu0 %v331
  %893 = vmatpush.msra.mxu0 %v330
  %894 = vmatpush.msra.mxu0 %v329
  %895 = vmatmul.f32.gmra.mxu0 %v867
  %v896 = vpop.f32.mrf.mxu0
  %v897 = vadd.f32 0.0, %v896
  %898 = vmatmul.f32.gmra.mxu0 %v869
  %v899 = vpop.f32.mrf.mxu0
  %v900 = vadd.f32 0.0, %v899
  %901 = vmatmul.f32.gmra.mxu0 %v871
  %v902 = vpop.f32.mrf.mxu0
  %v903 = vadd.f32 0.0, %v902
  %904 = vmatmul.f32.gmra.mxu0 %v873
  %v905 = vpop.f32.mrf.mxu0
  %v906 = vadd.f32 0.0, %v905
  %907 = vmatmul.f32.gmra.mxu0 %v875
  %v908 = vpop.f32.mrf.mxu0
  %v909 = vadd.f32 0.0, %v908
  %910 = vmatmul.f32.gmra.mxu0 %v877
  %v911 = vpop.f32.mrf.mxu0
  %v912 = vadd.f32 0.0, %v911
  %913 = vdwg.mxu0
  %v914 = vadd.f32 %v294, %v897
  %v915 = vadd.f32 %v297, %v900
  %v916 = vadd.f32 %v300, %v903
  %v917 = vadd.f32 %v303, %v906
  %v918 = vadd.f32 %v306, %v909
  %v919 = vadd.f32 %v309, %v912
  %v920 = vxor.u32 %v914, 2147483648
  %v921 = vxor.u32 %v915, 2147483648
  %v922 = vxor.u32 %v916, 2147483648
  %v923 = vxor.u32 %v917, 2147483648
  %v924 = vxor.u32 %v918, 2147483648
  %v925 = vxor.u32 %v919, 2147483648
  %v926 = vmul.f32 %v920, 1.442695
  %v927 = vpow.pop %v926
  %v928 = vmul.f32 %v921, 1.442695
  %v929 = vpow.pop %v928
  %v930 = vmul.f32 %v922, 1.442695
  %v931 = vpow.pop %v930
  %v932 = vmul.f32 %v923, 1.442695
  %v933 = vpow.pop %v932
  %v934 = vmul.f32 %v924, 1.442695
  %v935 = vpow.pop %v934
  %v936 = vmul.f32 %v925, 1.442695
  %v937 = vpow.pop %v936
  %v938 = vadd.f32 %v927, 1.0
  %v939 = vadd.f32 %v929, 1.0
  %v940 = vadd.f32 %v931, 1.0
  %v941 = vadd.f32 %v933, 1.0
  %v942 = vadd.f32 %v935, 1.0
  %v943 = vadd.f32 %v937, 1.0
  %v944 = vrcp.pop %v938
  %v945 = vmul.f32 %v938, %v944
  %v946 = vsub.f32 1.0, %v945
  %v947 = vmul.f32 %v944, %v946
  %v948 = vadd.f32 %v944, %v947
  %vm949 = vweird.f32 %v938
  %vm950 = vweird.f32 %v944
  %vm951 = vmor %vm949, %vm950
  %v952 = vsel %vm951, %v944, %v948
  %v953 = vand.u32 2147483647, %v938
  %vm954 = vcmp.eq.f32.partialorder %v953, 8.507059e+37
  %v955 = vand.u32 %v938, 2147483648
  %v956 = vor.u32 1.1754944e-38, %v955
  %v957 = vsel %vm954, %v956, %v952
  %v958 = vmul.f32 1.0, %v957
  %v959 = vrcp.pop %v939
  %v960 = vmul.f32 %v939, %v959
  %v961 = vsub.f32 1.0, %v960
  %v962 = vmul.f32 %v959, %v961
  %v963 = vadd.f32 %v959, %v962
  %vm964 = vweird.f32 %v939
  %vm965 = vweird.f32 %v959
  %vm966 = vmor %vm964, %vm965
  %v967 = vsel %vm966, %v959, %v963
  %v968 = vand.u32 2147483647, %v939
  %vm969 = vcmp.eq.f32.partialorder %v968, 8.507059e+37
  %v970 = vand.u32 %v939, 2147483648
  %v971 = vor.u32 1.1754944e-38, %v970
  %v972 = vsel %vm969, %v971, %v967
  %v973 = vmul.f32 1.0, %v972
  %v974 = vrcp.pop %v940
  %v975 = vmul.f32 %v940, %v974
  %v976 = vsub.f32 1.0, %v975
  %v977 = vmul.f32 %v974, %v976
  %v978 = vadd.f32 %v974, %v977
  %vm979 = vweird.f32 %v940
  %vm980 = vweird.f32 %v974
  %vm981 = vmor %vm979, %vm980
  %v982 = vsel %vm981, %v974, %v978
  %v983 = vand.u32 2147483647, %v940
  %vm984 = vcmp.eq.f32.partialorder %v983, 8.507059e+37
  %v985 = vand.u32 %v940, 2147483648
  %v986 = vor.u32 1.1754944e-38, %v985
  %v987 = vsel %vm984, %v986, %v982
  %v988 = vmul.f32 1.0, %v987
  %v989 = vrcp.pop %v941
  %v990 = vmul.f32 %v941, %v989
  %v991 = vsub.f32 1.0, %v990
  %v992 = vmul.f32 %v989, %v991
  %v993 = vadd.f32 %v989, %v992
  %vm994 = vweird.f32 %v941
  %vm995 = vweird.f32 %v989
  %vm996 = vmor %vm994, %vm995
  %v997 = vsel %vm996, %v989, %v993
  %v998 = vand.u32 2147483647, %v941
  %vm999 = vcmp.eq.f32.partialorder %v998, 8.507059e+37
  %v1000 = vand.u32 %v941, 2147483648
  %v1001 = vor.u32 1.1754944e-38, %v1000
  %v1002 = vsel %vm999, %v1001, %v997
  %v1003 = vmul.f32 1.0, %v1002
  %v1004 = vrcp.pop %v942
  %v1005 = vmul.f32 %v942, %v1004
  %v1006 = vsub.f32 1.0, %v1005
  %v1007 = vmul.f32 %v1004, %v1006
  %v1008 = vadd.f32 %v1004, %v1007
  %vm1009 = vweird.f32 %v942
  %vm1010 = vweird.f32 %v1004
  %vm1011 = vmor %vm1009, %vm1010
  %v1012 = vsel %vm1011, %v1004, %v1008
  %v1013 = vand.u32 2147483647, %v942
  %vm1014 = vcmp.eq.f32.partialorder %v1013, 8.507059e+37
  %v1015 = vand.u32 %v942, 2147483648
  %v1016 = vor.u32 1.1754944e-38, %v1015
  %v1017 = vsel %vm1014, %v1016, %v1012
  %v1018 = vmul.f32 1.0, %v1017
  %v1019 = vrcp.pop %v943
  %v1020 = vmul.f32 %v943, %v1019
  %v1021 = vsub.f32 1.0, %v1020
  %v1022 = vmul.f32 %v1019, %v1021
  %v1023 = vadd.f32 %v1019, %v1022
  %vm1024 = vweird.f32 %v943
  %vm1025 = vweird.f32 %v1019
  %vm1026 = vmor %vm1024, %vm1025
  %v1027 = vsel %vm1026, %v1019, %v1023
  %v1028 = vand.u32 2147483647, %v943
  %vm1029 = vcmp.eq.f32.partialorder %v1028, 8.507059e+37
  %v1030 = vand.u32 %v943, 2147483648
  %v1031 = vor.u32 1.1754944e-38, %v1030
  %v1032 = vsel %vm1029, %v1031, %v1027
  %v1033 = vmul.f32 1.0, %v1032
  %v1034 = vtanh.pop %v914
  %v1035 = vtanh.pop %v915
  %v1036 = vtanh.pop %v916
  %v1037 = vtanh.pop %v917
  %v1038 = vtanh.pop %v918
  %v1039 = vtanh.pop %v919
  %v1040 = vmul.f32 %v958, %v807
  %v1041 = vmul.f32 %v973, %v808
  %v1042 = vmul.f32 %v988, %v809
  %v1043 = vmul.f32 %v1003, %v810
  %v1044 = vmul.f32 %v1018, %v811
  %v1045 = vmul.f32 %v1033, %v812
  %1052 = vrot.lane.b32.xlu0 %v1034, 64
  %v1053 = vpop.permute.xlu0 %1052
  %1054 = vrot.lane.b32.xlu0 %v1035, 64
  %v1055 = vpop.permute.xlu0 %1054
  %1056 = vrot.lane.b32.xlu0 %v1036, 64
  %v1057 = vpop.permute.xlu0 %1056
  %1058 = vrot.lane.b32.xlu0 %v1037, 64
  %v1059 = vpop.permute.xlu0 %1058
  %1060 = vrot.lane.b32.xlu0 %v1038, 64
  %v1061 = vpop.permute.xlu0 %1060
  %1062 = vrot.lane.b32.xlu0 %v1039, 64
  %v1063 = vpop.permute.xlu0 %1062
  %v1070 = vmul.f32 %v958, %v1053
  %v1071 = vmul.f32 %v973, %v1055
  %v1072 = vmul.f32 %v988, %v1057
  %v1073 = vmul.f32 %v1003, %v1059
  %v1074 = vmul.f32 %v1018, %v1061
  %v1075 = vmul.f32 %v1033, %v1063
  %1082 = vrot.lane.b32.xlu0 %v1070, 32
  %v1083 = vpop.permute.xlu0 %1082
  %1084 = vrot.lane.b32.xlu0 %v1071, 32
  %v1085 = vpop.permute.xlu0 %1084
  %1086 = vrot.lane.b32.xlu0 %v1072, 32
  %v1087 = vpop.permute.xlu0 %1086
  %1088 = vrot.lane.b32.xlu0 %v1073, 32
  %v1089 = vpop.permute.xlu0 %1088
  %1090 = vrot.lane.b32.xlu0 %v1074, 32
  %v1091 = vpop.permute.xlu0 %1090
  %1092 = vrot.lane.b32.xlu0 %v1075, 32
  %v1093 = vpop.permute.xlu0 %1092
  %v1100 = vadd.f32 %v1040, %v1083
  %v1101 = vadd.f32 %v1041, %v1085
  %v1102 = vadd.f32 %v1042, %v1087
  %v1103 = vadd.f32 %v1043, %v1089
  %v1104 = vadd.f32 %v1044, %v1091
  %v1105 = vadd.f32 %v1045, %v1093
  %v1106 = vtanh.pop %v1100
  %v1107 = vtanh.pop %v1101
  %v1108 = vtanh.pop %v1102
  %v1109 = vtanh.pop %v1103
  %v1110 = vtanh.pop %v1104
  %v1111 = vtanh.pop %v1105
  %1118 = vrot.lane.b32.xlu0 %v1106, 64
  %v1119 = vpop.permute.xlu0 %1118
  %1120 = vrot.lane.b32.xlu0 %v1107, 64
  %v1121 = vpop.permute.xlu0 %1120
  %1122 = vrot.lane.b32.xlu0 %v1108, 64
  %v1123 = vpop.permute.xlu0 %1122
  %1124 = vrot.lane.b32.xlu0 %v1109, 64
  %v1125 = vpop.permute.xlu0 %1124
  %1126 = vrot.lane.b32.xlu0 %v1110, 64
  %v1127 = vpop.permute.xlu0 %1126
  %1128 = vrot.lane.b32.xlu0 %v1111, 64
  %v1129 = vpop.permute.xlu0 %1128
  %v1136 = vmul.f32 %v958, %v1119
  %v1137 = vmul.f32 %v973, %v1121
  %v1138 = vmul.f32 %v988, %v1123
  %v1139 = vmul.f32 %v1003, %v1125
  %v1140 = vmul.f32 %v1018, %v1127
  %v1141 = vmul.f32 %v1033, %v1129
  %1148 = vrot.lane.b32.xlu0 %v1136, 32
  %v1149 = vpop.permute.xlu0 %1148
  %1150 = vrot.lane.b32.xlu0 %v1137, 32
  %v1151 = vpop.permute.xlu0 %1150
  %1152 = vrot.lane.b32.xlu0 %v1138, 32
  %v1153 = vpop.permute.xlu0 %1152
  %1154 = vrot.lane.b32.xlu0 %v1139, 32
  %v1155 = vpop.permute.xlu0 %1154
  %1156 = vrot.lane.b32.xlu0 %v1140, 32
  %v1157 = vpop.permute.xlu0 %1156
  %1158 = vrot.lane.b32.xlu0 %v1141, 32
  %v1159 = vpop.permute.xlu0 %1158
  %v1160 = vsel %vm573, %v1149, 0
  %v1162 = vsel %vm573, %v1151, 0
  %v1164 = vsel %vm573, %v1153, 0
  %v1166 = vsel %vm573, %v1155, 0
  %v1168 = vsel %vm573, %v1157, 0
  %v1170 = vsel %vm573, %v1159, 0
  %1172 = vmatpush.msra.mxu0 0.0
  %1173 = vmatpush.msra.mxu0 0.0
  %1174 = vmatpush.msra.mxu0 0.0
  %1175 = vmatpush.msra.mxu0 0.0
  %1176 = vmatpush.msra.mxu0 0.0
  %1177 = vmatpush.msra.mxu0 0.0
  %1178 = vmatpush.msra.mxu0 0.0
  %1179 = vmatpush.msra.mxu0 0.0
  %1180 = vmatpush.msra.mxu0 0.0
  %1181 = vmatpush.msra.mxu0 0.0
  %1182 = vmatpush.msra.mxu0 0.0
  %1183 = vmatpush.msra.mxu0 0.0
  %1184 = vmatpush.msra.mxu0 %v332
  %1185 = vmatpush.msra.mxu0 %v331
  %1186 = vmatpush.msra.mxu0 %v330
  %1187 = vmatpush.msra.mxu0 %v329
  %1188 = vmatmul.f32.gmra.mxu0 %v1160
  %v1189 = vpop.f32.mrf.mxu0
  %v1190 = vadd.f32 0.0, %v1189
  %1191 = vmatmul.f32.gmra.mxu0 %v1162
  %v1192 = vpop.f32.mrf.mxu0
  %v1193 = vadd.f32 0.0, %v1192
  %1194 = vmatmul.f32.gmra.mxu0 %v1164
  %v1195 = vpop.f32.mrf.mxu0
  %v1196 = vadd.f32 0.0, %v1195
  %1197 = vmatmul.f32.gmra.mxu0 %v1166
  %v1198 = vpop.f32.mrf.mxu0
  %v1199 = vadd.f32 0.0, %v1198
  %1200 = vmatmul.f32.gmra.mxu0 %v1168
  %v1201 = vpop.f32.mrf.mxu0
  %v1202 = vadd.f32 0.0, %v1201
  %1203 = vmatmul.f32.gmra.mxu0 %v1170
  %v1204 = vpop.f32.mrf.mxu0
  %v1205 = vadd.f32 0.0, %v1204
  %1206 = vdwg.mxu0
  %v1207 = vadd.f32 %v312, %v1190
  %v1208 = vadd.f32 %v315, %v1193
  %v1209 = vadd.f32 %v318, %v1196
  %v1210 = vadd.f32 %v321, %v1199
  %v1211 = vadd.f32 %v324, %v1202
  %v1212 = vadd.f32 %v327, %v1205
  %v1213 = vxor.u32 %v1207, 2147483648
  %v1214 = vxor.u32 %v1208, 2147483648
  %v1215 = vxor.u32 %v1209, 2147483648
  %v1216 = vxor.u32 %v1210, 2147483648
  %v1217 = vxor.u32 %v1211, 2147483648
  %v1218 = vxor.u32 %v1212, 2147483648
  %v1219 = vmul.f32 %v1213, 1.442695
  %v1220 = vpow.pop %v1219
  %v1221 = vmul.f32 %v1214, 1.442695
  %v1222 = vpow.pop %v1221
  %v1223 = vmul.f32 %v1215, 1.442695
  %v1224 = vpow.pop %v1223
  %v1225 = vmul.f32 %v1216, 1.442695
  %v1226 = vpow.pop %v1225
  %v1227 = vmul.f32 %v1217, 1.442695
  %v1228 = vpow.pop %v1227
  %v1229 = vmul.f32 %v1218, 1.442695
  %v1230 = vpow.pop %v1229
  %v1231 = vadd.f32 %v1220, 1.0
  %v1232 = vadd.f32 %v1222, 1.0
  %v1233 = vadd.f32 %v1224, 1.0
  %v1234 = vadd.f32 %v1226, 1.0
  %v1235 = vadd.f32 %v1228, 1.0
  %v1236 = vadd.f32 %v1230, 1.0
  %v1237 = vrcp.pop %v1231
  %v1238 = vmul.f32 %v1231, %v1237
  %v1239 = vsub.f32 1.0, %v1238
  %v1240 = vmul.f32 %v1237, %v1239
  %v1241 = vadd.f32 %v1237, %v1240
  %vm1242 = vweird.f32 %v1231
  %vm1243 = vweird.f32 %v1237
  %vm1244 = vmor %vm1242, %vm1243
  %v1245 = vsel %vm1244, %v1237, %v1241
  %v1246 = vand.u32 2147483647, %v1231
  %vm1247 = vcmp.eq.f32.partialorder %v1246, 8.507059e+37
  %v1248 = vand.u32 %v1231, 2147483648
  %v1249 = vor.u32 1.1754944e-38, %v1248
  %v1250 = vsel %vm1247, %v1249, %v1245
  %v1251 = vmul.f32 1.0, %v1250
  %v1252 = vrcp.pop %v1232
  %v1253 = vmul.f32 %v1232, %v1252
  %v1254 = vsub.f32 1.0, %v1253
  %v1255 = vmul.f32 %v1252, %v1254
  %v1256 = vadd.f32 %v1252, %v1255
  %vm1257 = vweird.f32 %v1232
  %vm1258 = vweird.f32 %v1252
  %vm1259 = vmor %vm1257, %vm1258
  %v1260 = vsel %vm1259, %v1252, %v1256
  %v1261 = vand.u32 2147483647, %v1232
  %vm1262 = vcmp.eq.f32.partialorder %v1261, 8.507059e+37
  %v1263 = vand.u32 %v1232, 2147483648
  %v1264 = vor.u32 1.1754944e-38, %v1263
  %v1265 = vsel %vm1262, %v1264, %v1260
  %v1266 = vmul.f32 1.0, %v1265
  %v1267 = vrcp.pop %v1233
  %v1268 = vmul.f32 %v1233, %v1267
  %v1269 = vsub.f32 1.0, %v1268
  %v1270 = vmul.f32 %v1267, %v1269
  %v1271 = vadd.f32 %v1267, %v1270
  %vm1272 = vweird.f32 %v1233
  %vm1273 = vweird.f32 %v1267
  %vm1274 = vmor %vm1272, %vm1273
  %v1275 = vsel %vm1274, %v1267, %v1271
  %v1276 = vand.u32 2147483647, %v1233
  %vm1277 = vcmp.eq.f32.partialorder %v1276, 8.507059e+37
  %v1278 = vand.u32 %v1233, 2147483648
  %v1279 = vor.u32 1.1754944e-38, %v1278
  %v1280 = vsel %vm1277, %v1279, %v1275
  %v1281 = vmul.f32 1.0, %v1280
  %v1282 = vrcp.pop %v1234
  %v1283 = vmul.f32 %v1234, %v1282
  %v1284 = vsub.f32 1.0, %v1283
  %v1285 = vmul.f32 %v1282, %v1284
  %v1286 = vadd.f32 %v1282, %v1285
  %vm1287 = vweird.f32 %v1234
  %vm1288 = vweird.f32 %v1282
  %vm1289 = vmor %vm1287, %vm1288
  %v1290 = vsel %vm1289, %v1282, %v1286
  %v1291 = vand.u32 2147483647, %v1234
  %vm1292 = vcmp.eq.f32.partialorder %v1291, 8.507059e+37
  %v1293 = vand.u32 %v1234, 2147483648
  %v1294 = vor.u32 1.1754944e-38, %v1293
  %v1295 = vsel %vm1292, %v1294, %v1290
  %v1296 = vmul.f32 1.0, %v1295
  %v1297 = vrcp.pop %v1235
  %v1298 = vmul.f32 %v1235, %v1297
  %v1299 = vsub.f32 1.0, %v1298
  %v1300 = vmul.f32 %v1297, %v1299
  %v1301 = vadd.f32 %v1297, %v1300
  %vm1302 = vweird.f32 %v1235
  %vm1303 = vweird.f32 %v1297
  %vm1304 = vmor %vm1302, %vm1303
  %v1305 = vsel %vm1304, %v1297, %v1301
  %v1306 = vand.u32 2147483647, %v1235
  %vm1307 = vcmp.eq.f32.partialorder %v1306, 8.507059e+37
  %v1308 = vand.u32 %v1235, 2147483648
  %v1309 = vor.u32 1.1754944e-38, %v1308
  %v1310 = vsel %vm1307, %v1309, %v1305
  %v1311 = vmul.f32 1.0, %v1310
  %v1312 = vrcp.pop %v1236
  %v1313 = vmul.f32 %v1236, %v1312
  %v1314 = vsub.f32 1.0, %v1313
  %v1315 = vmul.f32 %v1312, %v1314
  %v1316 = vadd.f32 %v1312, %v1315
  %vm1317 = vweird.f32 %v1236
  %vm1318 = vweird.f32 %v1312
  %vm1319 = vmor %vm1317, %vm1318
  %v1320 = vsel %vm1319, %v1312, %v1316
  %v1321 = vand.u32 2147483647, %v1236
  %vm1322 = vcmp.eq.f32.partialorder %v1321, 8.507059e+37
  %v1323 = vand.u32 %v1236, 2147483648
  %v1324 = vor.u32 1.1754944e-38, %v1323
  %v1325 = vsel %vm1322, %v1324, %v1320
  %v1326 = vmul.f32 1.0, %v1325
  %v1327 = vtanh.pop %v1207
  %v1328 = vtanh.pop %v1208
  %v1329 = vtanh.pop %v1209
  %v1330 = vtanh.pop %v1210
  %v1331 = vtanh.pop %v1211
  %v1332 = vtanh.pop %v1212
  %v1333 = vmul.f32 %v1251, %v1100
  %v1334 = vmul.f32 %v1266, %v1101
  %v1335 = vmul.f32 %v1281, %v1102
  %v1336 = vmul.f32 %v1296, %v1103
  %v1337 = vmul.f32 %v1311, %v1104
  %v1338 = vmul.f32 %v1326, %v1105
  %1345 = vrot.lane.b32.xlu0 %v1327, 64
  %v1346 = vpop.permute.xlu0 %1345
  %1347 = vrot.lane.b32.xlu0 %v1328, 64
  %v1348 = vpop.permute.xlu0 %1347
  %1349 = vrot.lane.b32.xlu0 %v1329, 64
  %v1350 = vpop.permute.xlu0 %1349
  %1351 = vrot.lane.b32.xlu0 %v1330, 64
  %v1352 = vpop.permute.xlu0 %1351
  %1353 = vrot.lane.b32.xlu0 %v1331, 64
  %v1354 = vpop.permute.xlu0 %1353
  %1355 = vrot.lane.b32.xlu0 %v1332, 64
  %v1356 = vpop.permute.xlu0 %1355
  %v1363 = vmul.f32 %v1251, %v1346
  %v1364 = vmul.f32 %v1266, %v1348
  %v1365 = vmul.f32 %v1281, %v1350
  %v1366 = vmul.f32 %v1296, %v1352
  %v1367 = vmul.f32 %v1311, %v1354
  %v1368 = vmul.f32 %v1326, %v1356
  %1375 = vrot.lane.b32.xlu0 %v1363, 32
  %v1376 = vpop.permute.xlu0 %1375
  %1377 = vrot.lane.b32.xlu0 %v1364, 32
  %v1378 = vpop.permute.xlu0 %1377
  %1379 = vrot.lane.b32.xlu0 %v1365, 32
  %v1380 = vpop.permute.xlu0 %1379
  %1381 = vrot.lane.b32.xlu0 %v1366, 32
  %v1382 = vpop.permute.xlu0 %1381
  %1383 = vrot.lane.b32.xlu0 %v1367, 32
  %v1384 = vpop.permute.xlu0 %1383
  %1385 = vrot.lane.b32.xlu0 %v1368, 32
  %v1386 = vpop.permute.xlu0 %1385
  %v1393 = vadd.f32 %v1333, %v1376
  %v1394 = vadd.f32 %v1334, %v1378
  %v1395 = vadd.f32 %v1335, %v1380
  %v1396 = vadd.f32 %v1336, %v1382
  %v1397 = vadd.f32 %v1337, %v1384
  %v1398 = vadd.f32 %v1338, %v1386
  %v1399 = vtanh.pop %v1393
  %v1400 = vtanh.pop %v1394
  %v1401 = vtanh.pop %v1395
  %v1402 = vtanh.pop %v1396
  %v1403 = vtanh.pop %v1397
  %v1404 = vtanh.pop %v1398
  %1411 = vrot.lane.b32.xlu0 %v1399, 64
  %v1412 = vpop.permute.xlu0 %1411
  %1413 = vrot.lane.b32.xlu0 %v1400, 64
  %v1414 = vpop.permute.xlu0 %1413
  %1415 = vrot.lane.b32.xlu0 %v1401, 64
  %v1416 = vpop.permute.xlu0 %1415
  %1417 = vrot.lane.b32.xlu0 %v1402, 64
  %v1418 = vpop.permute.xlu0 %1417
  %1419 = vrot.lane.b32.xlu0 %v1403, 64
  %v1420 = vpop.permute.xlu0 %1419
  %1421 = vrot.lane.b32.xlu0 %v1404, 64
  %v1422 = vpop.permute.xlu0 %1421
  %v1429 = vmul.f32 %v1251, %v1412
  %v1430 = vmul.f32 %v1266, %v1414
  %v1431 = vmul.f32 %v1281, %v1416
  %v1432 = vmul.f32 %v1296, %v1418
  %v1433 = vmul.f32 %v1311, %v1420
  %v1434 = vmul.f32 %v1326, %v1422
  %v1435 = vld [vmem:[%s9] sm:$0xff]
  %v1436 = vld [vmem:[%s9 + $0x8] sm:$0xff]
  %v1437 = vld [vmem:[%s9 + $0x10] sm:$0xff]
  %v1438 = vld [vmem:[%s9 + $0x18] sm:$0xff]
  %v1439 = vld [vmem:[%s11] sm:$0x1]
  %v1441 = vperm.slane %v1439, 0
  %1449 = vrot.lane.b32.xlu0 %v1429, 32
  %v1450 = vpop.permute.xlu0 %1449
  %1451 = vrot.lane.b32.xlu0 %v1430, 32
  %v1452 = vpop.permute.xlu0 %1451
  %1453 = vrot.lane.b32.xlu0 %v1431, 32
  %v1454 = vpop.permute.xlu0 %1453
  %1455 = vrot.lane.b32.xlu0 %v1432, 32
  %v1456 = vpop.permute.xlu0 %1455
  %1457 = vrot.lane.b32.xlu0 %v1433, 32
  %v1458 = vpop.permute.xlu0 %1457
  %1459 = vrot.lane.b32.xlu0 %v1434, 32
  %v1460 = vpop.permute.xlu0 %1459
  %v1461 = vsel %vm573, %v1450, 0
  %v1463 = vsel %vm573, %v1452, 0
  %v1465 = vsel %vm573, %v1454, 0
  %v1467 = vsel %vm573, %v1456, 0
  %v1469 = vsel %vm573, %v1458, 0
  %v1471 = vsel %vm573, %v1460, 0
  %1473 = vmatpush.msra.mxu0 0.0
  %1474 = vmatpush.msra.mxu0 0.0
  %1475 = vmatpush.msra.mxu0 0.0
  %1476 = vmatpush.msra.mxu0 0.0
  %1477 = vmatpush.msra.mxu0 0.0
  %1478 = vmatpush.msra.mxu0 0.0
  %1479 = vmatpush.msra.mxu0 0.0
  %1480 = vmatpush.msra.mxu0 0.0
  %1481 = vmatpush.msra.mxu0 0.0
  %1482 = vmatpush.msra.mxu0 0.0
  %1483 = vmatpush.msra.mxu0 0.0
  %1484 = vmatpush.msra.mxu0 0.0
  %1485 = vmatpush.msra.mxu0 %v1438
  %1486 = vmatpush.msra.mxu0 %v1437
  %1487 = vmatpush.msra.mxu0 %v1436
  %1488 = vmatpush.msra.mxu0 %v1435
  %1489 = vmatmul.f32.gmra.mxu0 %v1461
  %v1490 = vpop.f32.mrf.mxu0
  %v1491 = vadd.f32 %v1441, %v1490
  %1492 = vmatmul.f32.gmra.mxu0 %v1463
  %v1493 = vpop.f32.mrf.mxu0
  %v1494 = vadd.f32 %v1441, %v1493
  %1495 = vmatmul.f32.gmra.mxu0 %v1465
  %v1496 = vpop.f32.mrf.mxu0
  %v1497 = vadd.f32 %v1441, %v1496
  %1498 = vmatmul.f32.gmra.mxu0 %v1467
  %v1499 = vpop.f32.mrf.mxu0
  %v1500 = vadd.f32 %v1441, %v1499
  %1501 = vmatmul.f32.gmra.mxu0 %v1469
  %v1502 = vpop.f32.mrf.mxu0
  %v1503 = vadd.f32 %v1441, %v1502
  %1504 = vmatmul.f32.gmra.mxu0 %v1471
  %v1505 = vpop.f32.mrf.mxu0
  %v1506 = vadd.f32 %v1441, %v1505
  %1507 = vdwg.mxu0
  %v1508 = vmax.f32 %v1491, 0.0
  %v1509 = vmax.f32 %v1494, 0.0
  %v1510 = vmax.f32 %v1497, 0.0
  %v1511 = vmax.f32 %v1500, 0.0
  %v1512 = vmax.f32 %v1503, 0.0
  %v1513 = vmax.f32 %v1506, 0.0
  %v1514 = vadd.f32 %v1508, %v1511
  %v1515 = vadd.f32 %v1509, %v1512
  %v1516 = vadd.f32 %v1510, %v1513
  %v1517 = vmul.f32 %v1514, 0.5
  %v1518 = vmul.f32 %v1515, 0.5
  %v1519 = vmul.f32 %v1516, 0.5
  %v1520 = vld [vmem:[%s13] sm:$0x1]
  %v1521 = vld [vmem:[%s15] sm:$0x1]
  %v1522 = vsel %vm573, %v1517, 0.0
  %v1523 = vsel %vm573, %v1518, 0.0
  %v1524 = vadd.f32 %v1522, %v1523
  %v1525 = vsel %vm573, %v1519, 0.0
  %v1526 = vadd.f32 %v1524, %v1525
  %v1527 = vrot.slane %v1526, 4
  %v1528 = vadd.f32 %v1526, %v1527
  %v1529 = vrot.slane %v1528, 2
  %v1530 = vadd.f32 %v1528, %v1529
  %v1531 = vrot.slane %v1530, 1
  %v1532 = vadd.f32 %v1530, %v1531
  %v1533 = vrcp.pop 24.0
  %v1534 = vmul.f32 24.0, %v1533
  %v1535 = vsub.f32 1.0, %v1534
  %v1536 = vmul.f32 %v1533, %v1535
  %v1537 = vadd.f32 %v1533, %v1536
  %vm1538 = vweird.f32 %v1533
  %v1539 = vsel %vm1538, %v1533, %v1537
  %v1540 = vmul.f32 %v1532, %v1539
  %v1541 = vsub.f32 %v1517, %v1540
  %v1542 = vsub.f32 %v1518, %v1540
  %v1543 = vsub.f32 %v1519, %v1540
  %v1544 = vmul.f32 %v1541, %v1541
  %v1545 = vmul.f32 %v1542, %v1542
  %v1546 = vmul.f32 %v1543, %v1543
  %v1547 = vsel %vm573, %v1544, 0.0
  %v1548 = vsel %vm573, %v1545, 0.0
  %v1549 = vadd.f32 %v1547, %v1548
  %v1550 = vsel %vm573, %v1546, 0.0
  %v1551 = vadd.f32 %v1549, %v1550
  %v1552 = vrot.slane %v1551, 4
  %v1553 = vadd.f32 %v1551, %v1552
  %v1554 = vrot.slane %v1553, 2
  %v1555 = vadd.f32 %v1553, %v1554
  %v1556 = vrot.slane %v1555, 1
  %v1557 = vadd.f32 %v1555, %v1556
  %v1558 = vmul.f32 %v1557, %v1539
  %v1559 = vadd.f32 %v1558, 1e-05
  %v1560 = vrsqrt.pop %v1559
  %v1561 = vmul.f32 %v1560, %v1559
  %v1562 = vmul.f32 %v1561, %v1560
  %v1563 = vmul.f32 0.5, %v1562
  %v1564 = vsub.f32 1.5, %v1563
  %v1565 = vmul.f32 %v1560, %v1564
  %vm1566 = vweird.f32 %v1559
  %vm1567 = vweird.f32 %v1560
  %vm1568 = vmor %vm1566, %vm1567
  %v1569 = vsel %vm1568, %v1560, %v1565
  %v1570 = vmul.f32 %v1541, %v1569
  %v1571 = vmul.f32 %v1542, %v1569
  %v1572 = vmul.f32 %v1543, %v1569
  %v1574 = vperm.slane %v1520, 0
  %v1576 = vmul.f32 %v1570, %v1574
  %v1577 = vmul.f32 %v1571, %v1574
  %v1578 = vmul.f32 %v1572, %v1574
  %v1580 = vperm.slane %v1521, 0
  %v1582 = vadd.f32 %v1576, %v1580
  %v1583 = vadd.f32 %v1577, %v1580
  %v1584 = vadd.f32 %v1578, %v1580
  %v1585 = vld [vmem:[%s21] sm:$0xff]
  %v1586 = vld [vmem:[%s21 + $0x8] sm:$0xff]
  %v1587 = vld [vmem:[%s21 + $0x10] sm:$0xff]
  %v1588 = vld [vmem:[%s21 + $0x18] sm:$0xff]
  %v1589 = vld [vmem:[%s21 + $0x20] sm:$0xff]
  %v1590 = vld [vmem:[%s21 + $0x28] sm:$0xff]
  %v1591 = vld [vmem:[%s21 + $0x30] sm:$0xff]
  %v1592 = vld [vmem:[%s21 + $0x38] sm:$0xff]
  %v1593 = vld [vmem:[%s21 + $0x40] sm:$0xff]
  %v1594 = vld [vmem:[%s21 + $0x48] sm:$0xff]
  %v1595 = vld [vmem:[%s21 + $0x50] sm:$0xff]
  %v1596 = vld [vmem:[%s21 + $0x58] sm:$0xff]
  %v1597 = vld [vmem:[%s23] sm:$0xf]
  %v1598 = vld [vmem:[%s23 + $0x4] sm:$0xf]
  %v1599 = vld [vmem:[%s23 + $0x8] sm:$0xf]
  %v1600 = vld [vmem:[%s23 + $0xc] sm:$0xf]
  %v1601 = vld [vmem:[%s23 + $0x10] sm:$0xf]
  %v1602 = vld [vmem:[%s23 + $0x14] sm:$0xf]
  %v1603 = vld [vmem:[%s23 + $0x18] sm:$0xf]
  %v1604 = vld [vmem:[%s23 + $0x1c] sm:$0xf]
  %v1605 = vld [vmem:[%s23 + $0x20] sm:$0xf]
  %v1606 = vld [vmem:[%s23 + $0x24] sm:$0xf]
  %v1607 = vld [vmem:[%s23 + $0x28] sm:$0xf]
  %v1608 = vld [vmem:[%s23 + $0x2c] sm:$0xf]
  %v1609 = vld [vmem:[%s23 + $0x30] sm:$0xf]
  %v1610 = vld [vmem:[%s23 + $0x34] sm:$0xf]
  %v1611 = vld [vmem:[%s23 + $0x38] sm:$0xf]
  %v1612 = vld [vmem:[%s23 + $0x3c] sm:$0xf]
  %v1613 = vld [vmem:[%s23 + $0x40] sm:$0xf]
  %v1614 = vld [vmem:[%s23 + $0x44] sm:$0xf]
  %v1615 = vld [vmem:[%s23 + $0x48] sm:$0xf]
  %v1616 = vld [vmem:[%s23 + $0x4c] sm:$0xf]
  %v1617 = vld [vmem:[%s23 + $0x50] sm:$0xf]
  %v1618 = vld [vmem:[%s23 + $0x54] sm:$0xf]
  %v1619 = vld [vmem:[%s23 + $0x58] sm:$0xf]
  %v1620 = vld [vmem:[%s23 + $0x5c] sm:$0xf]
  %v1621 = vld [vmem:[%s23 + $0x60] sm:$0xf]
  %v1622 = vld [vmem:[%s23 + $0x64] sm:$0xf]
  %v1623 = vld [vmem:[%s23 + $0x68] sm:$0xf]
  %v1624 = vld [vmem:[%s23 + $0x6c] sm:$0xf]
  %v1625 = vld [vmem:[%s23 + $0x70] sm:$0xf]
  %v1626 = vld [vmem:[%s23 + $0x74] sm:$0xf]
  %v1627 = vld [vmem:[%s23 + $0x78] sm:$0xf]
  %v1628 = vld [vmem:[%s23 + $0x7c] sm:$0xf]
  %v1629 = vld [vmem:[%s23 + $0x80] sm:$0xf]
  %v1630 = vld [vmem:[%s23 + $0x84] sm:$0xf]
  %v1631 = vld [vmem:[%s23 + $0x88] sm:$0xf]
  %v1632 = vld [vmem:[%s23 + $0x8c] sm:$0xf]
  %v1633 = vld [vmem:[%s23 + $0x90] sm:$0xf]
  %v1634 = vld [vmem:[%s23 + $0x94] sm:$0xf]
  %v1635 = vld [vmem:[%s23 + $0x98] sm:$0xf]
  %v1636 = vld [vmem:[%s23 + $0x9c] sm:$0xf]
  %v1637 = vld [vmem:[%s23 + $0xa0] sm:$0xf]
  %v1638 = vld [vmem:[%s23 + $0xa4] sm:$0xf]
  %v1639 = vld [vmem:[%s23 + $0xa8] sm:$0xf]
  %v1640 = vld [vmem:[%s23 + $0xac] sm:$0xf]
  %v1641 = vld [vmem:[%s23 + $0xb0] sm:$0xf]
  %v1642 = vld [vmem:[%s23 + $0xb4] sm:$0xf]
  %v1643 = vld [vmem:[%s23 + $0xb8] sm:$0xf]
  %v1644 = vld [vmem:[%s23 + $0xbc] sm:$0xf]
  %v1645 = vld [vmem:[%s23 + $0xc0] sm:$0xf]
  %v1646 = vld [vmem:[%s23 + $0xc4] sm:$0xf]
  %v1647 = vld [vmem:[%s23 + $0xc8] sm:$0xf]
  %v1648 = vld [vmem:[%s23 + $0xcc] sm:$0xf]
  %v1649 = vld [vmem:[%s23 + $0xd0] sm:$0xf]
  %v1650 = vld [vmem:[%s23 + $0xd4] sm:$0xf]
  %v1651 = vld [vmem:[%s23 + $0xd8] sm:$0xf]
  %v1652 = vld [vmem:[%s23 + $0xdc] sm:$0xf]
  %v1653 = vld [vmem:[%s23 + $0xe0] sm:$0xf]
  %v1654 = vld [vmem:[%s23 + $0xe4] sm:$0xf]
  %v1655 = vld [vmem:[%s23 + $0xe8] sm:$0xf]
  %v1656 = vld [vmem:[%s23 + $0xec] sm:$0xf]
  %v1657 = vld [vmem:[%s23 + $0xf0] sm:$0xf]
  %v1658 = vld [vmem:[%s23 + $0xf4] sm:$0xf]
  %v1659 = vld [vmem:[%s23 + $0xf8] sm:$0xf]
  %v1660 = vld [vmem:[%s23 + $0xfc] sm:$0xf]
  %v1661 = vld [vmem:[%s23 + $0x100] sm:$0xf]
  %v1662 = vld [vmem:[%s23 + $0x104] sm:$0xf]
  %v1663 = vld [vmem:[%s23 + $0x108] sm:$0xf]
  %v1664 = vld [vmem:[%s23 + $0x10c] sm:$0xf]
  %v1665 = vld [vmem:[%s23 + $0x110] sm:$0xf]
  %v1666 = vld [vmem:[%s23 + $0x114] sm:$0xf]
  %v1667 = vld [vmem:[%s23 + $0x118] sm:$0xf]
  %v1668 = vld [vmem:[%s23 + $0x11c] sm:$0xf]
  %v1669 = vld [vmem:[%s23 + $0x120] sm:$0xf]
  %v1670 = vld [vmem:[%s23 + $0x124] sm:$0xf]
  %v1671 = vld [vmem:[%s23 + $0x128] sm:$0xf]
  %v1672 = vld [vmem:[%s23 + $0x12c] sm:$0xf]
  %v1673 = vld [vmem:[%s23 + $0x130] sm:$0xf]
  %v1674 = vld [vmem:[%s23 + $0x134] sm:$0xf]
  %v1675 = vld [vmem:[%s23 + $0x138] sm:$0xf]
  %v1676 = vld [vmem:[%s23 + $0x13c] sm:$0xf]
  %v1677 = vld [vmem:[%s23 + $0x140] sm:$0xf]
  %v1678 = vld [vmem:[%s23 + $0x144] sm:$0xf]
  %v1679 = vld [vmem:[%s23 + $0x148] sm:$0xf]
  %v1680 = vld [vmem:[%s23 + $0x14c] sm:$0xf]
  %v1681 = vld [vmem:[%s23 + $0x150] sm:$0xf]
  %v1682 = vld [vmem:[%s23 + $0x154] sm:$0xf]
  %v1683 = vld [vmem:[%s23 + $0x158] sm:$0xf]
  %v1684 = vld [vmem:[%s23 + $0x15c] sm:$0xf]
  %v1685 = vld [vmem:[%s23 + $0x160] sm:$0xf]
  %v1686 = vld [vmem:[%s23 + $0x164] sm:$0xf]
  %v1687 = vld [vmem:[%s23 + $0x168] sm:$0xf]
  %v1688 = vld [vmem:[%s23 + $0x16c] sm:$0xf]
  %v1689 = vld [vmem:[%s23 + $0x170] sm:$0xf]
  %v1690 = vld [vmem:[%s23 + $0x174] sm:$0xf]
  %v1691 = vld [vmem:[%s23 + $0x178] sm:$0xf]
  %v1692 = vld [vmem:[%s23 + $0x17c] sm:$0xf]
  %v1693 = vld [vmem:[%s23 + $0x180] sm:$0xf]
  %v1694 = vld [vmem:[%s23 + $0x184] sm:$0xf]
  %v1695 = vld [vmem:[%s23 + $0x188] sm:$0xf]
  %v1696 = vld [vmem:[%s23 + $0x18c] sm:$0xf]
  %v1697 = vld [vmem:[%s23 + $0x190] sm:$0xf]
  %v1698 = vld [vmem:[%s23 + $0x194] sm:$0xf]
  %v1699 = vld [vmem:[%s23 + $0x198] sm:$0xf]
  %v1700 = vld [vmem:[%s23 + $0x19c] sm:$0xf]
  %v1701 = vld [vmem:[%s23 + $0x1a0] sm:$0xf]
  %v1702 = vld [vmem:[%s23 + $0x1a4] sm:$0xf]
  %v1703 = vld [vmem:[%s23 + $0x1a8] sm:$0xf]
  %v1704 = vld [vmem:[%s23 + $0x1ac] sm:$0xf]
  %v1705 = vld [vmem:[%s23 + $0x1b0] sm:$0xf]
  %v1706 = vld [vmem:[%s23 + $0x1b4] sm:$0xf]
  %v1707 = vld [vmem:[%s23 + $0x1b8] sm:$0xf]
  %v1708 = vld [vmem:[%s23 + $0x1bc] sm:$0xf]
  %v1709 = vld [vmem:[%s23 + $0x1c0] sm:$0xf]
  %v1710 = vld [vmem:[%s23 + $0x1c4] sm:$0xf]
  %v1711 = vld [vmem:[%s23 + $0x1c8] sm:$0xf]
  %v1712 = vld [vmem:[%s23 + $0x1cc] sm:$0xf]
  %v1713 = vld [vmem:[%s23 + $0x1d0] sm:$0xf]
  %v1714 = vld [vmem:[%s23 + $0x1d4] sm:$0xf]
  %v1715 = vld [vmem:[%s23 + $0x1d8] sm:$0xf]
  %v1716 = vld [vmem:[%s23 + $0x1dc] sm:$0xf]
  %v1717 = vld [vmem:[%s23 + $0x1e0] sm:$0xf]
  %v1718 = vld [vmem:[%s23 + $0x1e4] sm:$0xf]
  %v1719 = vld [vmem:[%s23 + $0x1e8] sm:$0xf]
  %v1720 = vld [vmem:[%s23 + $0x1ec] sm:$0xf]
  %v1721 = vld [vmem:[%s23 + $0x1f0] sm:$0xf]
  %v1722 = vld [vmem:[%s25] sm:$0x1]
  %v1724 = vperm.slane %v1722, 0
  %v1738 = vunpack.c.l.b16 %v1585
  %v1739 = vunpack.c.h.b16 %v1585
  %v1740 = vunpack.c.l.b16 %v1586
  %v1741 = vunpack.c.h.b16 %v1586
  %v1742 = vunpack.c.l.b16 %v1587
  %v1743 = vunpack.c.h.b16 %v1587
  %v1744 = vunpack.c.l.b16 %v1588
  %v1745 = vunpack.c.h.b16 %v1588
  %v1746 = vunpack.c.l.b16 %v1589
  %v1747 = vunpack.c.h.b16 %v1589
  %v1748 = vunpack.c.l.b16 %v1590
  %v1749 = vunpack.c.h.b16 %v1590
  %v1750 = vunpack.c.l.b16 %v1591
  %v1751 = vunpack.c.h.b16 %v1591
  %v1752 = vunpack.c.l.b16 %v1592
  %v1753 = vunpack.c.h.b16 %v1592
  %v1754 = vunpack.c.l.b16 %v1593
  %v1755 = vunpack.c.h.b16 %v1593
  %v1756 = vunpack.c.l.b16 %v1594
  %v1757 = vunpack.c.h.b16 %v1594
  %v1758 = vunpack.c.l.b16 %v1595
  %v1759 = vunpack.c.h.b16 %v1595
  %v1760 = vunpack.c.l.b16 %v1596
  %v1761 = vunpack.c.h.b16 %v1596
  %v1762 = vpack.c.b16 %v1746, %v1738
  %v1763 = vpack.c.b16 %v1747, %v1739
  %v1764 = vpack.c.b16 %v1748, %v1740
  %v1765 = vpack.c.b16 %v1749, %v1741
  %v1766 = vpack.c.b16 %v1750, %v1742
  %v1767 = vpack.c.b16 %v1751, %v1743
  %v1768 = vpack.c.b16 %v1752, %v1744
  %v1769 = vpack.c.b16 %v1753, %v1745
  %v1770 = vpack.c.b16 %v1754, %v1754
  %v1771 = vpack.c.b16 %v1755, %v1755
  %v1772 = vpack.c.b16 %v1756, %v1756
  %v1773 = vpack.c.b16 %v1757, %v1757
  %v1774 = vpack.c.b16 %v1758, %v1758
  %v1775 = vpack.c.b16 %v1759, %v1759
  %v1776 = vpack.c.b16 %v1760, %v1760
  %v1777 = vpack.c.b16 %v1761, %v1761
  %v1917 = vunpack.c.l.b16 %v1597
  %v1918 = vunpack.c.l.b16 %v1598
  %v1919 = vunpack.c.l.b16 %v1599
  %v1920 = vunpack.c.l.b16 %v1600
  %v1921 = vunpack.c.l.b16 %v1601
  %v1922 = vunpack.c.l.b16 %v1602
  %v1923 = vunpack.c.l.b16 %v1603
  %v1924 = vunpack.c.l.b16 %v1604
  %v1925 = vunpack.c.l.b16 %v1605
  %v1926 = vunpack.c.l.b16 %v1606
  %v1927 = vunpack.c.l.b16 %v1607
  %v1928 = vunpack.c.l.b16 %v1608
  %v1929 = vunpack.c.l.b16 %v1609
  %v1930 = vunpack.c.l.b16 %v1610
  %v1931 = vunpack.c.l.b16 %v1611
  %v1932 = vunpack.c.l.b16 %v1612
  %v1933 = vunpack.c.l.b16 %v1613
  %v1934 = vunpack.c.l.b16 %v1614
  %v1935 = vunpack.c.l.b16 %v1615
  %v1936 = vunpack.c.l.b16 %v1616
  %v1937 = vunpack.c.l.b16 %v1617
  %v1938 = vunpack.c.l.b16 %v1618
  %v1939 = vunpack.c.l.b16 %v1619
  %v1940 = vunpack.c.l.b16 %v1620
  %v1941 = vunpack.c.l.b16 %v1621
  %v1942 = vunpack.c.l.b16 %v1622
  %v1943 = vunpack.c.l.b16 %v1623
  %v1944 = vunpack.c.l.b16 %v1624
  %v1945 = vunpack.c.l.b16 %v1625
  %v1946 = vunpack.c.l.b16 %v1626
  %v1947 = vunpack.c.l.b16 %v1627
  %v1948 = vunpack.c.l.b16 %v1628
  %v1949 = vunpack.c.l.b16 %v1629
  %v1950 = vunpack.c.l.b16 %v1630
  %v1951 = vunpack.c.l.b16 %v1631
  %v1952 = vunpack.c.l.b16 %v1632
  %v1953 = vunpack.c.l.b16 %v1633
  %v1954 = vunpack.c.l.b16 %v1634
  %v1955 = vunpack.c.l.b16 %v1635
  %v1956 = vunpack.c.l.b16 %v1636
  %v1957 = vunpack.c.l.b16 %v1637
  %v1958 = vunpack.c.l.b16 %v1638
  %v1959 = vunpack.c.l.b16 %v1639
  %v1960 = vunpack.c.l.b16 %v1640
  %v1961 = vunpack.c.l.b16 %v1641
  %v1962 = vunpack.c.l.b16 %v1642
  %v1963 = vunpack.c.l.b16 %v1643
  %v1964 = vunpack.c.l.b16 %v1644
  %v1965 = vunpack.c.l.b16 %v1645
  %v1966 = vunpack.c.l.b16 %v1646
  %v1967 = vunpack.c.l.b16 %v1647
  %v1968 = vunpack.c.l.b16 %v1648
  %v1969 = vunpack.c.l.b16 %v1649
  %v1970 = vunpack.c.l.b16 %v1650
  %v1971 = vunpack.c.l.b16 %v1651
  %v1972 = vunpack.c.l.b16 %v1652
  %v1973 = vunpack.c.l.b16 %v1653
  %v1974 = vunpack.c.l.b16 %v1654
  %v1975 = vunpack.c.l.b16 %v1655
  %v1976 = vunpack.c.l.b16 %v1656
  %v1977 = vunpack.c.l.b16 %v1657
  %v1978 = vunpack.c.l.b16 %v1658
  %v1979 = vunpack.c.l.b16 %v1659
  %v1980 = vunpack.c.l.b16 %v1660
  %v1981 = vunpack.c.l.b16 %v1661
  %v1982 = vunpack.c.l.b16 %v1662
  %v1983 = vunpack.c.l.b16 %v1663
  %v1984 = vunpack.c.l.b16 %v1664
  %v1985 = vunpack.c.l.b16 %v1665
  %v1986 = vunpack.c.l.b16 %v1666
  %v1987 = vunpack.c.l.b16 %v1667
  %v1988 = vunpack.c.l.b16 %v1668
  %v1989 = vunpack.c.l.b16 %v1669
  %v1990 = vunpack.c.l.b16 %v1670
  %v1991 = vunpack.c.l.b16 %v1671
  %v1992 = vunpack.c.l.b16 %v1672
  %v1993 = vunpack.c.l.b16 %v1673
  %v1994 = vunpack.c.l.b16 %v1674
  %v1995 = vunpack.c.l.b16 %v1675
  %v1996 = vunpack.c.l.b16 %v1676
  %v1997 = vunpack.c.l.b16 %v1677
  %v1998 = vunpack.c.l.b16 %v1678
  %v1999 = vunpack.c.l.b16 %v1679
  %v2000 = vunpack.c.l.b16 %v1680
  %v2001 = vunpack.c.l.b16 %v1681
  %v2002 = vunpack.c.l.b16 %v1682
  %v2003 = vunpack.c.l.b16 %v1683
  %v2004 = vunpack.c.l.b16 %v1684
  %v2005 = vunpack.c.l.b16 %v1685
  %v2006 = vunpack.c.l.b16 %v1686
  %v2007 = vunpack.c.l.b16 %v1687
  %v2008 = vunpack.c.l.b16 %v1688
  %v2009 = vunpack.c.l.b16 %v1689
  %v2010 = vunpack.c.l.b16 %v1690
  %v2011 = vunpack.c.l.b16 %v1691
  %v2012 = vunpack.c.l.b16 %v1692
  %v2013 = vunpack.c.l.b16 %v1693
  %v2014 = vunpack.c.l.b16 %v1694
  %v2015 = vunpack.c.l.b16 %v1695
  %v2016 = vunpack.c.l.b16 %v1696
  %v2017 = vunpack.c.l.b16 %v1697
  %v2018 = vunpack.c.l.b16 %v1698
  %v2019 = vunpack.c.l.b16 %v1699
  %v2020 = vunpack.c.l.b16 %v1700
  %v2021 = vunpack.c.l.b16 %v1701
  %v2022 = vunpack.c.l.b16 %v1702
  %v2023 = vunpack.c.l.b16 %v1703
  %v2024 = vunpack.c.l.b16 %v1704
  %v2025 = vunpack.c.l.b16 %v1705
  %v2026 = vunpack.c.l.b16 %v1706
  %v2027 = vunpack.c.l.b16 %v1707
  %v2028 = vunpack.c.l.b16 %v1708
  %v2029 = vunpack.c.l.b16 %v1709
  %v2030 = vunpack.c.l.b16 %v1710
  %v2031 = vunpack.c.l.b16 %v1711
  %v2032 = vunpack.c.l.b16 %v1712
  %v2033 = vunpack.c.l.b16 %v1713
  %v2034 = vunpack.c.l.b16 %v1714
  %v2035 = vunpack.c.l.b16 %v1715
  %v2036 = vunpack.c.l.b16 %v1716
  %v2037 = vunpack.c.l.b16 %v1717
  %v2038 = vunpack.c.l.b16 %v1718
  %v2039 = vunpack.c.l.b16 %v1719
  %v2040 = vunpack.c.l.b16 %v1720
  %v2041 = vunpack.c.l.b16 %v1721
  %v2042 = vpack.c.b16 %v1918, %v1917
  %v2043 = vpack.c.b16 %v1920, %v1919
  %v2044 = vpack.c.b16 %v1922, %v1921
  %v2045 = vpack.c.b16 %v1924, %v1923
  %v2046 = vpack.c.b16 %v1926, %v1925
  %v2047 = vpack.c.b16 %v1928, %v1927
  %v2048 = vpack.c.b16 %v1930, %v1929
  %v2049 = vpack.c.b16 %v1932, %v1931
  %v2050 = vpack.c.b16 %v1934, %v1933
  %v2051 = vpack.c.b16 %v1936, %v1935
  %v2052 = vpack.c.b16 %v1938, %v1937
  %v2053 = vpack.c.b16 %v1940, %v1939
  %v2054 = vpack.c.b16 %v1942, %v1941
  %v2055 = vpack.c.b16 %v1944, %v1943
  %v2056 = vpack.c.b16 %v1946, %v1945
  %v2057 = vpack.c.b16 %v1948, %v1947
  %v2058 = vpack.c.b16 %v1950, %v1949
  %v2059 = vpack.c.b16 %v1952, %v1951
  %v2060 = vpack.c.b16 %v1954, %v1953
  %v2061 = vpack.c.b16 %v1956, %v1955
  %v2062 = vpack.c.b16 %v1958, %v1957
  %v2063 = vpack.c.b16 %v1960, %v1959
  %v2064 = vpack.c.b16 %v1962, %v1961
  %v2065 = vpack.c.b16 %v1964, %v1963
  %v2066 = vpack.c.b16 %v1966, %v1965
  %v2067 = vpack.c.b16 %v1968, %v1967
  %v2068 = vpack.c.b16 %v1970, %v1969
  %v2069 = vpack.c.b16 %v1972, %v1971
  %v2070 = vpack.c.b16 %v1974, %v1973
  %v2071 = vpack.c.b16 %v1976, %v1975
  %v2072 = vpack.c.b16 %v1978, %v1977
  %v2073 = vpack.c.b16 %v1980, %v1979
  %v2074 = vpack.c.b16 %v1982, %v1981
  %v2075 = vpack.c.b16 %v1984, %v1983
  %v2076 = vpack.c.b16 %v1986, %v1985
  %v2077 = vpack.c.b16 %v1988, %v1987
  %v2078 = vpack.c.b16 %v1990, %v1989
  %v2079 = vpack.c.b16 %v1992, %v1991
  %v2080 = vpack.c.b16 %v1994, %v1993
  %v2081 = vpack.c.b16 %v1996, %v1995
  %v2082 = vpack.c.b16 %v1998, %v1997
  %v2083 = vpack.c.b16 %v2000, %v1999
  %v2084 = vpack.c.b16 %v2002, %v2001
  %v2085 = vpack.c.b16 %v2004, %v2003
  %v2086 = vpack.c.b16 %v2006, %v2005
  %v2087 = vpack.c.b16 %v2008, %v2007
  %v2088 = vpack.c.b16 %v2010, %v2009
  %v2089 = vpack.c.b16 %v2012, %v2011
  %v2090 = vpack.c.b16 %v2014, %v2013
  %v2091 = vpack.c.b16 %v2016, %v2015
  %v2092 = vpack.c.b16 %v2018, %v2017
  %v2093 = vpack.c.b16 %v2020, %v2019
  %v2094 = vpack.c.b16 %v2022, %v2021
  %v2095 = vpack.c.b16 %v2024, %v2023
  %v2096 = vpack.c.b16 %v2026, %v2025
  %v2097 = vpack.c.b16 %v2028, %v2027
  %v2098 = vpack.c.b16 %v2030, %v2029
  %v2099 = vpack.c.b16 %v2032, %v2031
  %v2100 = vpack.c.b16 %v2034, %v2033
  %v2101 = vpack.c.b16 %v2036, %v2035
  %v2102 = vpack.c.b16 %v2038, %v2037
  %v2103 = vpack.c.b16 %v2040, %v2039
  %v2104 = vpack.c.b16 %v2041, %v2041
  %vm2167 = vcmask 850944
  %v2169 = vsel %vm2167, %v1769, 0
  %v2172 = vsel %vm2167, %v1777, 0
  %vm2174 = vcmask 1043456
  %v2176 = vsel %vm2174, %v2104, 0
  %2178 = vmatpush.bf16.msra.mxu0 %v2049
  %2179 = vmatpush.bf16.msra.mxu0 %v2048
  %2180 = vmatpush.bf16.msra.mxu0 %v2047
  %2181 = vmatpush.bf16.msra.mxu0 %v2046
  %2182 = vmatpush.bf16.msra.mxu0 %v2045
  %2183 = vmatpush.bf16.msra.mxu0 %v2044
  %2184 = vmatpush.bf16.msra.mxu0 %v2043
  %2185 = vmatpush.bf16.msra.mxu0 %v2042
  %2186 = vmatmul.bf16.gmra.mxu0 %v1762
  %v2187 = vpop.f32.mrf.mxu0
  %v2188 = vadd.f32 %v1724, %v2187
  %v2189 = vpop.f32.mrf.mxu0
  %v2190 = vadd.f32 %v1724, %v2189
  %2191 = vmatmul.bf16.gmra.mxu0 %v1770
  %v2192 = vpop.f32.mrf.mxu0
  %v2193 = vadd.f32 %v1724, %v2192
  %v2194 = vpop.f32.mrf.mxu0
  %2195 = vdwg.mxu0
  %2196 = vmatpush.bf16.msra.mxu0 %v2057
  %2197 = vmatpush.bf16.msra.mxu0 %v2056
  %2198 = vmatpush.bf16.msra.mxu0 %v2055
  %2199 = vmatpush.bf16.msra.mxu0 %v2054
  %2200 = vmatpush.bf16.msra.mxu0 %v2053
  %2201 = vmatpush.bf16.msra.mxu0 %v2052
  %2202 = vmatpush.bf16.msra.mxu0 %v2051
  %2203 = vmatpush.bf16.msra.mxu0 %v2050
  %2204 = vmatmul.bf16.gmra.mxu0 %v1763
  %v2205 = vpop.f32.mrf.mxu0
  %v2206 = vadd.f32 %v2188, %v2205
  %v2207 = vpop.f32.mrf.mxu0
  %v2208 = vadd.f32 %v2190, %v2207
  %2209 = vmatmul.bf16.gmra.mxu0 %v1771
  %v2210 = vpop.f32.mrf.mxu0
  %v2211 = vadd.f32 %v2193, %v2210
  %v2212 = vpop.f32.mrf.mxu0
  %2213 = vdwg.mxu0
  %2214 = vmatpush.bf16.msra.mxu0 %v2065
  %2215 = vmatpush.bf16.msra.mxu0 %v2064
  %2216 = vmatpush.bf16.msra.mxu0 %v2063
  %2217 = vmatpush.bf16.msra.mxu0 %v2062
  %2218 = vmatpush.bf16.msra.mxu0 %v2061
  %2219 = vmatpush.bf16.msra.mxu0 %v2060
  %2220 = vmatpush.bf16.msra.mxu0 %v2059
  %2221 = vmatpush.bf16.msra.mxu0 %v2058
  %2222 = vmatmul.bf16.gmra.mxu0 %v1764
  %v2223 = vpop.f32.mrf.mxu0
  %v2224 = vadd.f32 %v2206, %v2223
  %v2225 = vpop.f32.mrf.mxu0
  %v2226 = vadd.f32 %v2208, %v2225
  %2227 = vmatmul.bf16.gmra.mxu0 %v1772
  %v2228 = vpop.f32.mrf.mxu0
  %v2229 = vadd.f32 %v2211, %v2228
  %v2230 = vpop.f32.mrf.mxu0
  %2231 = vdwg.mxu0
  %2232 = vmatpush.bf16.msra.mxu0 %v2073
  %2233 = vmatpush.bf16.msra.mxu0 %v2072
  %2234 = vmatpush.bf16.msra.mxu0 %v2071
  %2235 = vmatpush.bf16.msra.mxu0 %v2070
  %2236 = vmatpush.bf16.msra.mxu0 %v2069
  %2237 = vmatpush.bf16.msra.mxu0 %v2068
  %2238 = vmatpush.bf16.msra.mxu0 %v2067
  %2239 = vmatpush.bf16.msra.mxu0 %v2066
  %2240 = vmatmul.bf16.gmra.mxu0 %v1765
  %v2241 = vpop.f32.mrf.mxu0
  %v2242 = vadd.f32 %v2224, %v2241
  %v2243 = vpop.f32.mrf.mxu0
  %v2244 = vadd.f32 %v2226, %v2243
  %2245 = vmatmul.bf16.gmra.mxu0 %v1773
  %v2246 = vpop.f32.mrf.mxu0
  %v2247 = vadd.f32 %v2229, %v2246
  %v2248 = vpop.f32.mrf.mxu0
  %2249 = vdwg.mxu0
  %2250 = vmatpush.bf16.msra.mxu0 %v2081
  %2251 = vmatpush.bf16.msra.mxu0 %v2080
  %2252 = vmatpush.bf16.msra.mxu0 %v2079
  %2253 = vmatpush.bf16.msra.mxu0 %v2078
  %2254 = vmatpush.bf16.msra.mxu0 %v2077
  %2255 = vmatpush.bf16.msra.mxu0 %v2076
  %2256 = vmatpush.bf16.msra.mxu0 %v2075
  %2257 = vmatpush.bf16.msra.mxu0 %v2074
  %2258 = vmatmul.bf16.gmra.mxu0 %v1766
  %v2259 = vpop.f32.mrf.mxu0
  %v2260 = vadd.f32 %v2242, %v2259
  %v2261 = vpop.f32.mrf.mxu0
  %v2262 = vadd.f32 %v2244, %v2261
  %2263 = vmatmul.bf16.gmra.mxu0 %v1774
  %v2264 = vpop.f32.mrf.mxu0
  %v2265 = vadd.f32 %v2247, %v2264
  %v2266 = vpop.f32.mrf.mxu0
  %2267 = vdwg.mxu0
  %2268 = vmatpush.bf16.msra.mxu0 %v2089
  %2269 = vmatpush.bf16.msra.mxu0 %v2088
  %2270 = vmatpush.bf16.msra.mxu0 %v2087
  %2271 = vmatpush.bf16.msra.mxu0 %v2086
  %2272 = vmatpush.bf16.msra.mxu0 %v2085
  %2273 = vmatpush.bf16.msra.mxu0 %v2084
  %2274 = vmatpush.bf16.msra.mxu0 %v2083
  %2275 = vmatpush.bf16.msra.mxu0 %v2082
  %2276 = vmatmul.bf16.gmra.mxu0 %v1767
  %v2277 = vpop.f32.mrf.mxu0
  %v2278 = vadd.f32 %v2260, %v2277
  %v2279 = vpop.f32.mrf.mxu0
  %v2280 = vadd.f32 %v2262, %v2279
  %2281 = vmatmul.bf16.gmra.mxu0 %v1775
  %v2282 = vpop.f32.mrf.mxu0
  %v2283 = vadd.f32 %v2265, %v2282
  %v2284 = vpop.f32.mrf.mxu0
  %2285 = vdwg.mxu0
  %2286 = vmatpush.bf16.msra.mxu0 %v2097
  %2287 = vmatpush.bf16.msra.mxu0 %v2096
  %2288 = vmatpush.bf16.msra.mxu0 %v2095
  %2289 = vmatpush.bf16.msra.mxu0 %v2094
  %2290 = vmatpush.bf16.msra.mxu0 %v2093
  %2291 = vmatpush.bf16.msra.mxu0 %v2092
  %2292 = vmatpush.bf16.msra.mxu0 %v2091
  %2293 = vmatpush.bf16.msra.mxu0 %v2090
  %2294 = vmatmul.bf16.gmra.mxu0 %v1768
  %v2295 = vpop.f32.mrf.mxu0
  %v2296 = vadd.f32 %v2278, %v2295
  %v2297 = vpop.f32.mrf.mxu0
  %v2298 = vadd.f32 %v2280, %v2297
  %2299 = vmatmul.bf16.gmra.mxu0 %v1776
  %v2300 = vpop.f32.mrf.mxu0
  %v2301 = vadd.f32 %v2283, %v2300
  %v2302 = vpop.f32.mrf.mxu0
  %2303 = vdwg.mxu0
  %2304 = vmatpush.bf16.msra.mxu0 0
  %2305 = vmatpush.bf16.msra.mxu0 %v2176
  %2306 = vmatpush.bf16.msra.mxu0 %v2103
  %2307 = vmatpush.bf16.msra.mxu0 %v2102
  %2308 = vmatpush.bf16.msra.mxu0 %v2101
  %2309 = vmatpush.bf16.msra.mxu0 %v2100
  %2310 = vmatpush.bf16.msra.mxu0 %v2099
  %2311 = vmatpush.bf16.msra.mxu0 %v2098
  %2312 = vmatmul.bf16.gmra.mxu0 %v2169
  %v2313 = vpop.f32.mrf.mxu0
  %v2314 = vadd.f32 %v2296, %v2313
  %v2315 = vpop.f32.mrf.mxu0
  %v2316 = vadd.f32 %v2298, %v2315
  %2317 = vmatmul.bf16.gmra.mxu0 %v2172
  %v2318 = vpop.f32.mrf.mxu0
  %v2319 = vadd.f32 %v2301, %v2318
  %v2320 = vpop.f32.mrf.mxu0
  %2321 = vdwg.mxu0
  %v2322 = vmax.f32 %v2314, 0.0
  %v2323 = vmax.f32 %v2316, 0.0
  %v2324 = vmax.f32 %v2319, 0.0
  %v2325 = vld [vmem:[%s27] sm:$0xff]
  %v2326 = vld [vmem:[%s27 + $0x8] sm:$0xff]
  %v2327 = vld [vmem:[%s27 + $0x10] sm:$0xff]
  %2329 = vset.pattern.permute.xlu0 0
  %2330 = vperm.xlu0 %2329, %v2325
  %v2331 = vpop.permute.xlu0 %2330
  %2334 = vset.pattern.permute.xlu0 0
  %2335 = vperm.xlu0 %2334, %v2326
  %v2336 = vpop.permute.xlu0 %2335
  %2339 = vset.pattern.permute.xlu0 0
  %2340 = vperm.xlu0 %2339, %v2327
  %v2341 = vpop.permute.xlu0 %2340
  %v2343 = vmul.f32 %v2322, %v2331
  %v2344 = vmul.f32 %v2323, %v2336
  %v2345 = vmul.f32 %v2324, %v2341
  %v2346 = vld [vmem:[%s17] sm:$0xff]
  %v2347 = vld [vmem:[%s17 + $0x8] sm:$0xff]
  %v2348 = vld [vmem:[%s17 + $0x10] sm:$0xff]
  %v2349 = vld [vmem:[%s29] sm:$0xff]
  %v2350 = vld [vmem:[%s29 + $0x8] sm:$0x7f]
  %v2351 = vld [vmem:[%s19] sm:$0xff]
  %v2352 = vld [vmem:[%s19 + $0x8] sm:$0xff]
  %v2353 = vld [vmem:[%s19 + $0x10] sm:$0xff]
  %v2354 = vld [vmem:[%s31] sm:$0x1f]
  %vm2355 = vcmask 39936
  %v2357 = vsel %vm2355, %v2351, 0
  %v2360 = vsel %vm2355, %v2352, 0
  %v2363 = vsel %vm2355, %v2353, 0
  %v2366 = vsel %vm236, %v2354, 0
  %2368 = vmatpush.msra.mxu0 0.0
  %2369 = vmatpush.msra.mxu0 0.0
  %2370 = vmatpush.msra.mxu0 0.0
  %2371 = vmatpush.msra.mxu0 0.0
  %2372 = vmatpush.msra.mxu0 0.0
  %2373 = vmatpush.msra.mxu0 0.0
  %2374 = vmatpush.msra.mxu0 0.0
  %2375 = vmatpush.msra.mxu0 0.0
  %2376 = vmatpush.msra.mxu0 0.0
  %2377 = vmatpush.msra.mxu0 0.0
  %2378 = vmatpush.msra.mxu0 0.0
  %2379 = vmatpush.msra.mxu0 0.0
  %2380 = vmatpush.msra.mxu0 0.0
  %2381 = vmatpush.msra.mxu0 0.0
  %2382 = vmatpush.msra.mxu0 0.0
  %2383 = vmatpush.msra.mxu0 %v2366
  %2384 = vmatmul.f32.gmra.mxu0 %v2357
  %v2385 = vpop.f32.mrf.mxu0
  %v2386 = vadd.f32 0.0, %v2385
  %2387 = vmatmul.f32.gmra.mxu0 %v2360
  %v2388 = vpop.f32.mrf.mxu0
  %v2389 = vadd.f32 0.0, %v2388
  %2390 = vmatmul.f32.gmra.mxu0 %v2363
  %v2391 = vpop.f32.mrf.mxu0
  %v2392 = vadd.f32 0.0, %v2391
  %2393 = vdwg.mxu0
  %vm2394 = vcmask 121856
  %v2396 = vsel %vm2394, %v2346, 0
  %v2399 = vsel %vm2394, %v2347, 0
  %v2402 = vsel %vm2394, %v2348, 0
  %vm2404 = vcmask 1046528
  %v2406 = vsel %vm2404, %v2350, 0
  %2408 = vmatpush.msra.mxu0 0.0
  %2409 = vmatpush.msra.mxu0 0.0
  %2410 = vmatpush.msra.mxu0 0.0
  %2411 = vmatpush.msra.mxu0 0.0
  %2412 = vmatpush.msra.mxu0 0.0
  %2413 = vmatpush.msra.mxu0 0.0
  %2414 = vmatpush.msra.mxu0 0.0
  %2415 = vmatpush.msra.mxu0 0.0
  %2416 = vmatpush.msra.mxu0 0.0
  %2417 = vmatpush.msra.mxu0 0.0
  %2418 = vmatpush.msra.mxu0 0.0
  %2419 = vmatpush.msra.mxu0 0.0
  %2420 = vmatpush.msra.mxu0 0.0
  %2421 = vmatpush.msra.mxu0 0.0
  %2422 = vmatpush.msra.mxu0 %v2406
  %2423 = vmatpush.msra.mxu0 %v2349
  %2424 = vmatmul.f32.gmra.mxu0 %v2396
  %v2425 = vpop.f32.mrf.mxu0
  %v2426 = vadd.f32 %v2386, %v2425
  %2427 = vmatmul.f32.gmra.mxu0 %v2399
  %v2428 = vpop.f32.mrf.mxu0
  %v2429 = vadd.f32 %v2389, %v2428
  %2430 = vmatmul.f32.gmra.mxu0 %v2402
  %v2431 = vpop.f32.mrf.mxu0
  %v2432 = vadd.f32 %v2392, %v2431
  %2433 = vdwg.mxu0
  %v2434 = vld [vmem:[%s33] sm:$0xff]
  %v2435 = vld [vmem:[%s33 + $0x8] sm:$0xff]
  %v2436 = vld [vmem:[%s33 + $0x10] sm:$0xff]
  %v2437 = vld [vmem:[%s33 + $0x18] sm:$0xff]
  %v2439 = vsel %vm573, %v1582, 0
  %v2442 = vsel %vm573, %v1583, 0
  %v2445 = vsel %vm573, %v1584, 0
  %2447 = vmatpush.msra.mxu0 0.0
  %2448 = vmatpush.msra.mxu0 0.0
  %2449 = vmatpush.msra.mxu0 0.0
  %2450 = vmatpush.msra.mxu0 0.0
  %2451 = vmatpush.msra.mxu0 0.0
  %2452 = vmatpush.msra.mxu0 0.0
  %2453 = vmatpush.msra.mxu0 0.0
  %2454 = vmatpush.msra.mxu0 0.0
  %2455 = vmatpush.msra.mxu0 0.0
  %2456 = vmatpush.msra.mxu0 0.0
  %2457 = vmatpush.msra.mxu0 0.0
  %2458 = vmatpush.msra.mxu0 0.0
  %2459 = vmatpush.msra.mxu0 %v2437
  %2460 = vmatpush.msra.mxu0 %v2436
  %2461 = vmatpush.msra.mxu0 %v2435
  %2462 = vmatpush.msra.mxu0 %v2434
  %2463 = vmatmul.f32.gmra.mxu0 %v2439
  %v2464 = vpop.f32.mrf.mxu0
  %v2465 = vadd.f32 0.0, %v2464
  %2466 = vmatmul.f32.gmra.mxu0 %v2442
  %v2467 = vpop.f32.mrf.mxu0
  %v2468 = vadd.f32 0.0, %v2467
  %2469 = vmatmul.f32.gmra.mxu0 %v2445
  %v2470 = vpop.f32.mrf.mxu0
  %v2471 = vadd.f32 0.0, %v2470
  %2472 = vdwg.mxu0
  %v2473 = vadd.f32 %v2426, %v2465
  %v2474 = vadd.f32 %v2429, %v2468
  %v2475 = vadd.f32 %v2432, %v2471
  %v2476 = vld [vmem:[%s35] sm:$0xff]
  %v2477 = vld [vmem:[%s35 + $0x8] sm:$0xff]
  %v2478 = vld [vmem:[%s35 + $0x10] sm:$0xff]
  %v2479 = vld [vmem:[%s35 + $0x18] sm:$0xff]
  %v2481 = vsel %vm573, %v2343, 0
  %v2484 = vsel %vm573, %v2344, 0
  %v2487 = vsel %vm573, %v2345, 0
  %2489 = vmatpush.msra.mxu0 0.0
  %2490 = vmatpush.msra.mxu0 0.0
  %2491 = vmatpush.msra.mxu0 0.0
  %2492 = vmatpush.msra.mxu0 0.0
  %2493 = vmatpush.msra.mxu0 0.0
  %2494 = vmatpush.msra.mxu0 0.0
  %2495 = vmatpush.msra.mxu0 0.0
  %2496 = vmatpush.msra.mxu0 0.0
  %2497 = vmatpush.msra.mxu0 0.0
  %2498 = vmatpush.msra.mxu0 0.0
  %2499 = vmatpush.msra.mxu0 0.0
  %2500 = vmatpush.msra.mxu0 0.0
  %2501 = vmatpush.msra.mxu0 %v2479
  %2502 = vmatpush.msra.mxu0 %v2478
  %2503 = vmatpush.msra.mxu0 %v2477
  %2504 = vmatpush.msra.mxu0 %v2476
  %2505 = vmatmul.f32.gmra.mxu0 %v2481
  %v2506 = vpop.f32.mrf.mxu0
  %v2507 = vadd.f32 0.0, %v2506
  %2508 = vmatmul.f32.gmra.mxu0 %v2484
  %v2509 = vpop.f32.mrf.mxu0
  %v2510 = vadd.f32 0.0, %v2509
  %2511 = vmatmul.f32.gmra.mxu0 %v2487
  %v2512 = vpop.f32.mrf.mxu0
  %v2513 = vadd.f32 0.0, %v2512
  %2514 = vdwg.mxu0
  %v2515 = vadd.f32 %v2473, %v2507
  %v2516 = vadd.f32 %v2474, %v2510
  %v2517 = vadd.f32 %v2475, %v2513
  %v2518 = vld [vmem:[%s37] sm:$0x1]
  %v2520 = vperm.slane %v2518, 0
  %v2522 = vadd.f32 %v2515, %v2520
  %v2523 = vadd.f32 %v2516, %v2520
  %v2524 = vadd.f32 %v2517, %v2520
  %v2525 = vld [vmem:[%s39] sm:$0xff]
  %v2526 = vld [vmem:[%s39 + $0x8] sm:$0xff]
  %v2527 = vld [vmem:[%s39 + $0x10] sm:$0xff]
  %v2528 = vld [vmem:[%s39 + $0x18] sm:$0xff]
  %v2529 = vxor.u32 %v2524, 2147483648
  %v2530 = vmul.f32 %v2529, 1.442695
  %v2531 = vpow.pop %v2530
  %v2532 = vadd.f32 %v2531, 1.0
  %v2533 = vrcp.pop %v2532
  %v2534 = vmul.f32 %v2532, %v2533
  %v2535 = vsub.f32 1.0, %v2534
  %v2536 = vmul.f32 %v2533, %v2535
  %v2537 = vadd.f32 %v2533, %v2536
  %vm2538 = vweird.f32 %v2532
  %vm2539 = vweird.f32 %v2533
  %vm2540 = vmor %vm2538, %vm2539
  %v2541 = vsel %vm2540, %v2533, %v2537
  %v2542 = vand.u32 2147483647, %v2532
  %vm2543 = vcmp.eq.f32.partialorder %v2542, 8.507059e+37
  %v2544 = vand.u32 %v2532, 2147483648
  %v2545 = vor.u32 1.1754944e-38, %v2544
  %v2546 = vsel %vm2543, %v2545, %v2541
  %v2547 = vmul.f32 1.0, %v2546
  %v2548 = vtanh.pop %v2524
  %v2549 = vmul.f32 %v2547, 0.0
  %2551 = vrot.lane.b32.xlu0 %v2548, 64
  %v2552 = vpop.permute.xlu0 %2551
  %v2554 = vmul.f32 %v2547, %v2552
  %2556 = vrot.lane.b32.xlu0 %v2554, 32
  %v2557 = vpop.permute.xlu0 %2556
  %v2559 = vadd.f32 %v2549, %v2557
  %v2560 = vtanh.pop %v2559
  %2562 = vrot.lane.b32.xlu0 %v2560, 64
  %v2563 = vpop.permute.xlu0 %2562
  %v2565 = vmul.f32 %v2547, %v2563
  %v2566 = vlaneseq
  %v2567 = vand.u32 %v2566, 127
  %v2568 = vadd.s32 %v2567, 1
  %s2569 = scalar_lea.vmem %s41, 8
  %v2570 = vld [vmem:[%s2569] sm:$0xff]
  %2571 = vset.pattern.permute.xlu0 0
  %2572 = vperm.xlu0 %2571, %v2570
  %v2573 = vpop.permute.xlu0 %2572
  %vm2574 = vcmp.eq.s32.totalorder %v2573, %v2568
  %v2575 = vsel %vm2574, 1, 0
  %v2576 = vcvt.s32.f32 %v2575
  %2577 = vset.pattern.permute.xlu0 1
  %2578 = vperm.xlu0 %2577, %v2570
  %v2579 = vpop.permute.xlu0 %2578
  %vm2580 = vcmp.eq.s32.totalorder %v2579, %v2568
  %v2581 = vsel %vm2580, 1, 0
  %v2582 = vcvt.s32.f32 %v2581
  %v2583 = vadd.f32 %v2576, %v2582
  %2585 = vrot.lane.b32.xlu0 %v2565, 32
  %v2586 = vpop.permute.xlu0 %2585
  %vm2588 = vcmask 64512
  %v2590 = vsel %vm2588, %v2583, 0
  %2592 = vmatpush.msra.mxu0 0.0
  %2593 = vmatpush.msra.mxu0 0.0
  %2594 = vmatpush.msra.mxu0 0.0
  %2595 = vmatpush.msra.mxu0 0.0
  %2596 = vmatpush.msra.mxu0 0.0
  %2597 = vmatpush.msra.mxu0 0.0
  %2598 = vmatpush.msra.mxu0 0.0
  %2599 = vmatpush.msra.mxu0 0.0
  %2600 = vmatpush.msra.mxu0 0.0
  %2601 = vmatpush.msra.mxu0 0.0
  %2602 = vmatpush.msra.mxu0 0.0
  %2603 = vmatpush.msra.mxu0 0.0
  %2604 = vmatpush.msra.mxu0 0.0
  %2605 = vmatpush.msra.mxu0 0.0
  %2606 = vmatpush.msra.mxu0 0.0
  %2607 = vmatpush.msra.mxu0 %v2586
  %2608 = vmatmul.f32.gmra.mxu0 %v2590
  %v2609 = vpop.f32.mrf.mxu0
  %v2610 = vadd.f32 0.0, %v2609
  %2611 = vdwg.mxu0
  %v2612 = vmul.f32 %v2610, 0.5
  %2614 = vrot.lane.b32.xlu0 %v2559, 96
  %v2615 = vpop.permute.xlu0 %2614
  %2617 = vmatpush.msra.mxu0 0.0
  %2618 = vmatpush.msra.mxu0 0.0
  %2619 = vmatpush.msra.mxu0 0.0
  %2620 = vmatpush.msra.mxu0 0.0
  %2621 = vmatpush.msra.mxu0 0.0
  %2622 = vmatpush.msra.mxu0 0.0
  %2623 = vmatpush.msra.mxu0 0.0
  %2624 = vmatpush.msra.mxu0 0.0
  %2625 = vmatpush.msra.mxu0 0.0
  %2626 = vmatpush.msra.mxu0 0.0
  %2627 = vmatpush.msra.mxu0 0.0
  %2628 = vmatpush.msra.mxu0 0.0
  %2629 = vmatpush.msra.mxu0 0.0
  %2630 = vmatpush.msra.mxu0 0.0
  %2631 = vmatpush.msra.mxu0 0.0
  %2632 = vmatpush.msra.mxu0 %v2615
  %2633 = vmatmul.f32.gmra.mxu0 %v2590
  %v2634 = vpop.f32.mrf.mxu0
  %v2635 = vadd.f32 0.0, %v2634
  %2636 = vdwg.mxu0
  %v2637 = vmul.f32 %v2635, 0.5
  %v2639 = vsel %vm573, %v2612, 0
  %2641 = vmatpush.msra.mxu0 0.0
  %2642 = vmatpush.msra.mxu0 0.0
  %2643 = vmatpush.msra.mxu0 0.0
  %2644 = vmatpush.msra.mxu0 0.0
  %2645 = vmatpush.msra.mxu0 0.0
  %2646 = vmatpush.msra.mxu0 0.0
  %2647 = vmatpush.msra.mxu0 0.0
  %2648 = vmatpush.msra.mxu0 0.0
  %2649 = vmatpush.msra.mxu0 0.0
  %2650 = vmatpush.msra.mxu0 0.0
  %2651 = vmatpush.msra.mxu0 0.0
  %2652 = vmatpush.msra.mxu0 0.0
  %2653 = vmatpush.msra.mxu0 %v2528
  %2654 = vmatpush.msra.mxu0 %v2527
  %2655 = vmatpush.msra.mxu0 %v2526
  %2656 = vmatpush.msra.mxu0 %v2525
  %2657 = vmatmul.f32.gmra.mxu0 %v2639
  %v2658 = vpop.f32.mrf.mxu0
  %v2659 = vadd.f32 0.0, %v2658
  %2660 = vdwg.mxu0
  %v2661 = vadd.f32 %v2523, %v2659
  %v2662 = vxor.u32 %v2661, 2147483648
  %v2663 = vmul.f32 %v2662, 1.442695
  %v2664 = vpow.pop %v2663
  %v2665 = vadd.f32 %v2664, 1.0
  %v2666 = vrcp.pop %v2665
  %v2667 = vmul.f32 %v2665, %v2666
  %v2668 = vsub.f32 1.0, %v2667
  %v2669 = vmul.f32 %v2666, %v2668
  %v2670 = vadd.f32 %v2666, %v2669
  %vm2671 = vweird.f32 %v2665
  %vm2672 = vweird.f32 %v2666
  %vm2673 = vmor %vm2671, %vm2672
  %v2674 = vsel %vm2673, %v2666, %v2670
  %v2675 = vand.u32 2147483647, %v2665
  %vm2676 = vcmp.eq.f32.partialorder %v2675, 8.507059e+37
  %v2677 = vand.u32 %v2665, 2147483648
  %v2678 = vor.u32 1.1754944e-38, %v2677
  %v2679 = vsel %vm2676, %v2678, %v2674
  %v2680 = vmul.f32 1.0, %v2679
  %v2681 = vtanh.pop %v2661
  %2683 = vrot.lane.b32.xlu0 %v2637, 32
  %v2684 = vpop.permute.xlu0 %2683
  %v2686 = vmul.f32 %v2680, %v2684
  %2688 = vrot.lane.b32.xlu0 %v2681, 64
  %v2689 = vpop.permute.xlu0 %2688
  %v2691 = vmul.f32 %v2680, %v2689
  %2693 = vrot.lane.b32.xlu0 %v2691, 32
  %v2694 = vpop.permute.xlu0 %2693
  %v2696 = vadd.f32 %v2686, %v2694
  %v2697 = vtanh.pop %v2696
  %2699 = vrot.lane.b32.xlu0 %v2697, 64
  %v2700 = vpop.permute.xlu0 %2699
  %v2702 = vmul.f32 %v2680, %v2700
  %v2703 = vld [vmem:[%s41] sm:$0xff]
  %2704 = vset.pattern.permute.xlu0 0
  %2705 = vperm.xlu0 %2704, %v2703
  %v2706 = vpop.permute.xlu0 %2705
  %vm2707 = vcmp.eq.s32.totalorder %v2706, %v2568
  %v2708 = vsel %vm2707, 1, 0
  %v2709 = vcvt.s32.f32 %v2708
  %2710 = vset.pattern.permute.xlu0 1
  %2711 = vperm.xlu0 %2710, %v2703
  %v2712 = vpop.permute.xlu0 %2711
  %vm2713 = vcmp.eq.s32.totalorder %v2712, %v2568
  %v2714 = vsel %vm2713, 1, 0
  %v2715 = vcvt.s32.f32 %v2714
  %v2716 = vadd.f32 %v2709, %v2715
  %2718 = vrot.lane.b32.xlu0 %v2702, 32
  %v2719 = vpop.permute.xlu0 %2718
  %v2722 = vsel %vm2588, %v2716, 0
  %2724 = vmatpush.msra.mxu0 0.0
  %2725 = vmatpush.msra.mxu0 0.0
  %2726 = vmatpush.msra.mxu0 0.0
  %2727 = vmatpush.msra.mxu0 0.0
  %2728 = vmatpush.msra.mxu0 0.0
  %2729 = vmatpush.msra.mxu0 0.0
  %2730 = vmatpush.msra.mxu0 0.0
  %2731 = vmatpush.msra.mxu0 0.0
  %2732 = vmatpush.msra.mxu0 0.0
  %2733 = vmatpush.msra.mxu0 0.0
  %2734 = vmatpush.msra.mxu0 0.0
  %2735 = vmatpush.msra.mxu0 0.0
  %2736 = vmatpush.msra.mxu0 0.0
  %2737 = vmatpush.msra.mxu0 0.0
  %2738 = vmatpush.msra.mxu0 0.0
  %2739 = vmatpush.msra.mxu0 %v2719
  %2740 = vmatmul.f32.gmra.mxu0 %v2722
  %v2741 = vpop.f32.mrf.mxu0
  %v2742 = vadd.f32 0.0, %v2741
  %2743 = vdwg.mxu0
  %v2744 = vmul.f32 %v2742, 0.5
  %2746 = vrot.lane.b32.xlu0 %v2696, 96
  %v2747 = vpop.permute.xlu0 %2746
  %2749 = vmatpush.msra.mxu0 0.0
  %2750 = vmatpush.msra.mxu0 0.0
  %2751 = vmatpush.msra.mxu0 0.0
  %2752 = vmatpush.msra.mxu0 0.0
  %2753 = vmatpush.msra.mxu0 0.0
  %2754 = vmatpush.msra.mxu0 0.0
  %2755 = vmatpush.msra.mxu0 0.0
  %2756 = vmatpush.msra.mxu0 0.0
  %2757 = vmatpush.msra.mxu0 0.0
  %2758 = vmatpush.msra.mxu0 0.0
  %2759 = vmatpush.msra.mxu0 0.0
  %2760 = vmatpush.msra.mxu0 0.0
  %2761 = vmatpush.msra.mxu0 0.0
  %2762 = vmatpush.msra.mxu0 0.0
  %2763 = vmatpush.msra.mxu0 0.0
  %2764 = vmatpush.msra.mxu0 %v2747
  %2765 = vmatmul.f32.gmra.mxu0 %v2722
  %v2766 = vpop.f32.mrf.mxu0
  %v2767 = vadd.f32 0.0, %v2766
  %2768 = vdwg.mxu0
  %v2769 = vmul.f32 %v2767, 0.5
  %v2771 = vsel %vm573, %v2744, 0
  %2773 = vmatpush.msra.mxu0 0.0
  %2774 = vmatpush.msra.mxu0 0.0
  %2775 = vmatpush.msra.mxu0 0.0
  %2776 = vmatpush.msra.mxu0 0.0
  %2777 = vmatpush.msra.mxu0 0.0
  %2778 = vmatpush.msra.mxu0 0.0
  %2779 = vmatpush.msra.mxu0 0.0
  %2780 = vmatpush.msra.mxu0 0.0
  %2781 = vmatpush.msra.mxu0 0.0
  %2782 = vmatpush.msra.mxu0 0.0
  %2783 = vmatpush.msra.mxu0 0.0
  %2784 = vmatpush.msra.mxu0 0.0
  %2785 = vmatpush.msra.mxu0 %v2528
  %2786 = vmatpush.msra.mxu0 %v2527
  %2787 = vmatpush.msra.mxu0 %v2526
  %2788 = vmatpush.msra.mxu0 %v2525
  %2789 = vmatmul.f32.gmra.mxu0 %v2771
  %v2790 = vpop.f32.mrf.mxu0
  %v2791 = vadd.f32 0.0, %v2790
  %2792 = vdwg.mxu0
  %v2793 = vadd.f32 %v2522, %v2791
  %v2794 = vxor.u32 %v2793, 2147483648
  %v2795 = vmul.f32 %v2794, 1.442695
  %v2796 = vpow.pop %v2795
  %v2797 = vadd.f32 %v2796, 1.0
  %v2798 = vrcp.pop %v2797
  %v2799 = vmul.f32 %v2797, %v2798
  %v2800 = vsub.f32 1.0, %v2799
  %v2801 = vmul.f32 %v2798, %v2800
  %v2802 = vadd.f32 %v2798, %v2801
  %vm2803 = vweird.f32 %v2797
  %vm2804 = vweird.f32 %v2798
  %vm2805 = vmor %vm2803, %vm2804
  %v2806 = vsel %vm2805, %v2798, %v2802
  %v2807 = vand.u32 2147483647, %v2797
  %vm2808 = vcmp.eq.f32.partialorder %v2807, 8.507059e+37
  %v2809 = vand.u32 %v2797, 2147483648
  %v2810 = vor.u32 1.1754944e-38, %v2809
  %v2811 = vsel %vm2808, %v2810, %v2806
  %v2812 = vmul.f32 1.0, %v2811
  %v2813 = vtanh.pop %v2793
  %2815 = vrot.lane.b32.xlu0 %v2769, 32
  %v2816 = vpop.permute.xlu0 %2815
  %v2818 = vmul.f32 %v2812, %v2816
  %2820 = vrot.lane.b32.xlu0 %v2813, 64
  %v2821 = vpop.permute.xlu0 %2820
  %v2823 = vmul.f32 %v2812, %v2821
  %2825 = vrot.lane.b32.xlu0 %v2823, 32
  %v2826 = vpop.permute.xlu0 %2825
  %v2828 = vadd.f32 %v2818, %v2826
  %v2829 = vtanh.pop %v2828
  %2831 = vrot.lane.b32.xlu0 %v2829, 64
  %v2832 = vpop.permute.xlu0 %2831
  %v2834 = vmul.f32 %v2812, %v2832
  %v2835 = vld [vmem:[%s43] sm:$0x1]
  %v2836 = vld [vmem:[%s45] sm:$0x1]
  %vm2837 = vcmask 1045248
  %v2838 = vsel %vm2837, %v2834, 0.0
  %v2839 = vrot.slane %v2838, 4
  %v2840 = vadd.f32 %v2838, %v2839
  %v2841 = vrot.slane %v2840, 2
  %v2842 = vadd.f32 %v2840, %v2841
  %v2843 = vrot.slane %v2842, 1
  %v2844 = vadd.f32 %v2842, %v2843
  %v2845 = vrcp.pop 5.0
  %v2846 = vmul.f32 5.0, %v2845
  %v2847 = vsub.f32 1.0, %v2846
  %v2848 = vmul.f32 %v2845, %v2847
  %v2849 = vadd.f32 %v2845, %v2848
  %vm2850 = vweird.f32 %v2845
  %v2851 = vsel %vm2850, %v2845, %v2849
  %v2852 = vmul.f32 %v2844, %v2851
  %v2853 = vsub.f32 %v2834, %v2852
  %v2854 = vmul.f32 %v2853, %v2853
  %v2855 = vsel %vm2837, %v2854, 0.0
  %v2856 = vrot.slane %v2855, 4
  %v2857 = vadd.f32 %v2855, %v2856
  %v2858 = vrot.slane %v2857, 2
  %v2859 = vadd.f32 %v2857, %v2858
  %v2860 = vrot.slane %v2859, 1
  %v2861 = vadd.f32 %v2859, %v2860
  %v2862 = vmul.f32 %v2861, %v2851
  %v2863 = vadd.f32 %v2862, 1e-05
  %v2864 = vrsqrt.pop %v2863
  %v2865 = vmul.f32 %v2864, %v2863
  %v2866 = vmul.f32 %v2865, %v2864
  %v2867 = vmul.f32 0.5, %v2866
  %v2868 = vsub.f32 1.5, %v2867
  %v2869 = vmul.f32 %v2864, %v2868
  %vm2870 = vweird.f32 %v2863
  %vm2871 = vweird.f32 %v2864
  %vm2872 = vmor %vm2870, %vm2871
  %v2873 = vsel %vm2872, %v2864, %v2869
  %v2874 = vmul.f32 %v2853, %v2873
  %v2876 = vperm.slane %v2835, 0
  %2877 = vrot.lane.b32.xlu0 %v2876, 96
  %v2878 = vpop.permute.xlu0 %2877
  %v2880 = vmul.f32 %v2874, %v2878
  %v2882 = vperm.slane %v2836, 0
  %2883 = vrot.lane.b32.xlu0 %v2882, 96
  %v2884 = vpop.permute.xlu0 %2883
  %v2886 = vadd.f32 %v2880, %v2884
  %v2887 = vld [vmem:[%s47] sm:$0xff]
  %v2888 = vld [vmem:[%s47 + $0x8] sm:$0xff]
  %v2889 = vld [vmem:[%s47 + $0x10] sm:$0xff]
  %v2890 = vld [vmem:[%s47 + $0x18] sm:$0xff]
  %v2891 = vld [vmem:[%s49] sm:$0x1]
  %v2893 = vperm.slane %v2891, 0
  %2896 = vrot.lane.b32.xlu0 %v2886, 32
  %v2897 = vpop.permute.xlu0 %2896
  %v2898 = vsel %vm573, %v2897, 0
  %2900 = vmatpush.msra.mxu0 0.0
  %2901 = vmatpush.msra.mxu0 0.0
  %2902 = vmatpush.msra.mxu0 0.0
  %2903 = vmatpush.msra.mxu0 0.0
  %2904 = vmatpush.msra.mxu0 0.0
  %2905 = vmatpush.msra.mxu0 0.0
  %2906 = vmatpush.msra.mxu0 0.0
  %2907 = vmatpush.msra.mxu0 0.0
  %2908 = vmatpush.msra.mxu0 0.0
  %2909 = vmatpush.msra.mxu0 0.0
  %2910 = vmatpush.msra.mxu0 0.0
  %2911 = vmatpush.msra.mxu0 0.0
  %2912 = vmatpush.msra.mxu0 %v2890
  %2913 = vmatpush.msra.mxu0 %v2889
  %2914 = vmatpush.msra.mxu0 %v2888
  %2915 = vmatpush.msra.mxu0 %v2887
  %2916 = vmatmul.f32.gmra.mxu0 %v2898
  %v2917 = vpop.f32.mrf.mxu0
  %v2918 = vadd.f32 %v2893, %v2917
  %2919 = vdwg.mxu0
  %v2920 = vmax.f32 %v2918, 0.0
  %v2921 = vld [vmem:[%s51] sm:$0x1]
  %v2922 = vld [vmem:[%s53] sm:$0x1]
  %vm2923 = vcmask 258048
  %v2924 = vsel %vm2923, %v2920, 0.0
  %v2925 = vrot.slane %v2924, 4
  %v2926 = vadd.f32 %v2924, %v2925
  %v2927 = vrot.slane %v2926, 2
  %v2928 = vadd.f32 %v2926, %v2927
  %v2929 = vrot.slane %v2928, 1
  %v2930 = vadd.f32 %v2928, %v2929
  %v2931 = vmul.f32 %v2930, %v2851
  %v2932 = vsub.f32 %v2920, %v2931
  %v2933 = vmul.f32 %v2932, %v2932
  %v2934 = vsel %vm2923, %v2933, 0.0
  %v2935 = vrot.slane %v2934, 4
  %v2936 = vadd.f32 %v2934, %v2935
  %v2937 = vrot.slane %v2936, 2
  %v2938 = vadd.f32 %v2936, %v2937
  %v2939 = vrot.slane %v2938, 1
  %v2940 = vadd.f32 %v2938, %v2939
  %v2941 = vmul.f32 %v2940, %v2851
  %v2942 = vadd.f32 %v2941, 1e-05
  %v2943 = vrsqrt.pop %v2942
  %v2944 = vmul.f32 %v2943, %v2942
  %v2945 = vmul.f32 %v2944, %v2943
  %v2946 = vmul.f32 0.5, %v2945
  %v2947 = vsub.f32 1.5, %v2946
  %v2948 = vmul.f32 %v2943, %v2947
  %vm2949 = vweird.f32 %v2942
  %vm2950 = vweird.f32 %v2943
  %vm2951 = vmor %vm2949, %vm2950
  %v2952 = vsel %vm2951, %v2943, %v2948
  %v2953 = vmul.f32 %v2932, %v2952
  %v2955 = vperm.slane %v2921, 0
  %v2957 = vmul.f32 %v2953, %v2955
  %v2959 = vperm.slane %v2922, 0
  %v2961 = vadd.f32 %v2957, %v2959
  %v2962 = vld [vmem:[%s55] sm:$0xff]
  %v2963 = vld [vmem:[%s55 + $0x8] sm:$0xff]
  %v2964 = vld [vmem:[%s55 + $0x10] sm:$0xff]
  %v2965 = vld [vmem:[%s55 + $0x18] sm:$0xff]
  %v2966 = vld [vmem:[%s57] sm:$0x1]
  %v2968 = vperm.slane %v2966, 0
  %v2971 = vsel %vm573, %v2961, 0
  %2973 = vmatpush.msra.mxu0 0.0
  %2974 = vmatpush.msra.mxu0 0.0
  %2975 = vmatpush.msra.mxu0 0.0
  %2976 = vmatpush.msra.mxu0 0.0
  %2977 = vmatpush.msra.mxu0 0.0
  %2978 = vmatpush.msra.mxu0 0.0
  %2979 = vmatpush.msra.mxu0 0.0
  %2980 = vmatpush.msra.mxu0 0.0
  %2981 = vmatpush.msra.mxu0 0.0
  %2982 = vmatpush.msra.mxu0 0.0
  %2983 = vmatpush.msra.mxu0 0.0
  %2984 = vmatpush.msra.mxu0 0.0
  %2985 = vmatpush.msra.mxu0 %v2965
  %2986 = vmatpush.msra.mxu0 %v2964
  %2987 = vmatpush.msra.mxu0 %v2963
  %2988 = vmatpush.msra.mxu0 %v2962
  %2989 = vmatmul.f32.gmra.mxu0 %v2971
  %v2990 = vpop.f32.mrf.mxu0
  %v2991 = vadd.f32 %v2968, %v2990
  %2992 = vdwg.mxu0
  %v2993 = vmax.f32 %v2991, 0.0
  %v2994 = vld [vmem:[%s59] sm:$0xff]
  %v2995 = vld [vmem:[%s59 + $0x8] sm:$0xff]
  %v2996 = vld [vmem:[%s59 + $0x10] sm:$0xff]
  %v2997 = vld [vmem:[%s59 + $0x18] sm:$0xff]
  %v2998 = vld [vmem:[#allocation2] sm:$0x1]
  %v3000 = vperm.slane %v2998, 0
  %v3003 = vsel %vm573, %v2993, 0
  %3005 = vmatpush.msra.mxu0 0.0
  %3006 = vmatpush.msra.mxu0 0.0
  %3007 = vmatpush.msra.mxu0 0.0
  %3008 = vmatpush.msra.mxu0 0.0
  %3009 = vmatpush.msra.mxu0 0.0
  %3010 = vmatpush.msra.mxu0 0.0
  %3011 = vmatpush.msra.mxu0 0.0
  %3012 = vmatpush.msra.mxu0 0.0
  %3013 = vmatpush.msra.mxu0 0.0
  %3014 = vmatpush.msra.mxu0 0.0
  %3015 = vmatpush.msra.mxu0 0.0
  %3016 = vmatpush.msra.mxu0 0.0
  %3017 = vmatpush.msra.mxu0 %v2997
  %3018 = vmatpush.msra.mxu0 %v2996
  %3019 = vmatpush.msra.mxu0 %v2995
  %3020 = vmatpush.msra.mxu0 %v2994
  %3021 = vmatmul.f32.gmra.mxu0 %v3003
  %v3022 = vpop.f32.mrf.mxu0
  %v3023 = vadd.f32 %v3000, %v3022
  %3024 = vdwg.mxu0
  %v3025 = vxor.u32 %v3023, 2147483648
  %v3026 = vmul.f32 %v3025, 1.442695
  %v3027 = vpow.pop %v3026
  %v3028 = vadd.f32 %v3027, 1.0
  %v3029 = vrcp.pop %v3028
  %v3030 = vmul.f32 %v3028, %v3029
  %v3031 = vsub.f32 1.0, %v3030
  %v3032 = vmul.f32 %v3029, %v3031
  %v3033 = vadd.f32 %v3029, %v3032
  %vm3034 = vweird.f32 %v3028
  %vm3035 = vweird.f32 %v3029
  %vm3036 = vmor %vm3034, %vm3035
  %v3037 = vsel %vm3036, %v3029, %v3033
  %v3038 = vand.u32 2147483647, %v3028
  %vm3039 = vcmp.eq.f32.partialorder %v3038, 8.507059e+37
  %v3040 = vand.u32 %v3028, 2147483648
  %v3041 = vor.u32 1.1754944e-38, %v3040
  %v3042 = vsel %vm3039, %v3041, %v3037
  %v3043 = vmul.f32 1.0, %v3042
  %vm3044 = vcmask 4096
  %3045 = vst.msk [vmem:[%s63] sm:$0x1f] %vm3044, %v3043
  // Predicated region
  $region126: #{representation_forward_pallas.1} parent=0 // pred_check
    _
  $region127: #{representation_forward_pallas.1} parent=0 // pred_check_branch
    %3047 = sbr.rel (0) target = $region129
  $region128: #{representation_forward_pallas.1} parent=0 // pred_region
    _
  $region129: #{representation_forward_pallas.1} parent=0 // pred_fallthru
    _
  // Predicated region
  $region130: #{representation_forward_pallas.1} parent=0 // pred_check
    _
  $region131: #{representation_forward_pallas.1} parent=0 // pred_check_branch
    %3049 = sbr.rel (0) target = $region133
  $region132: #{representation_forward_pallas.1} parent=0 // pred_region
    _
  $region133: #{representation_forward_pallas.1} parent=0 // pred_fallthru
    _

</llo_original>
